<compile_context>
chip_gen: v7x
topology: tpu7x:2x2x1
jax: 0.10.0
libtpu: 0.0.40
codegen_flags: <defaults>
</compile_context>

<pallas_src>
import math
from typing import NamedTuple

import jax
import jax.numpy as jnp
from jax.experimental import pallas as pl
from jax.experimental.pallas import tpu as pltpu

_BASE_HALO = 8                    # lookahead rows for a single conv (K <= 9)
_MAX_FUSE_LOOKAHEAD = 64          # max fused-chain lookahead rows
_MAX_TILE = 1024                  # max time-tile rows (multiple of 8)
_SLACK = 2 * _MAX_TILE + 64       # trailing slack rows on every activation buf
_VMEM_LIMIT = 48 * 1024 * 1024    # <= v7x physical VMEM, generous for v5e/v6e


def _round_up(n, m):
    return ((n + m - 1) // m) * m


def _pick_tile(out_len, halo):
    tl = min(_MAX_TILE, _round_up(max(out_len, 1), _BASE_HALO))
    if halo:
        tl = _round_up(tl, halo)
    return tl


class Act(NamedTuple):
    buf: jax.Array      # (B, R, C); rows beyond `length` are scratch/garbage
    length: int         # number of valid leading rows


def _ensure_rows(buf, rows):
    # Safety net only: with _SLACK over-allocation this never pads.
    cur = buf.shape[1]
    if cur >= rows:
        return buf
    return jnp.pad(buf, ((0, 0), (0, rows - cur), (0, 0)))


# ----------------------------------------------------------------------------
# Generic tiled pallas_call: every "sequence" input is delivered as a
# (1, TL, C) main block plus an optional (1, halo, C) lookahead block so
# kernels can build a (TL + halo, C) window with static slices only.
# ----------------------------------------------------------------------------
def _tiled_call(kernel, seq_inputs, flat_inputs, out_len, out_channels, tl,
                halo):
    batch = seq_inputs[0][0].shape[0]
    n_tiles = -(-out_len // tl)
    in_specs, args = [], []
    for buf, use_halo in seq_inputs:
        c = buf.shape[-1]
        buf = _ensure_rows(buf, n_tiles * tl + (halo if use_halo else 0))
        in_specs.append(pl.BlockSpec((1, tl, c), lambda b, t: (b, t, 0)))
        args.append(buf)
        if use_halo:
            in_specs.append(
                pl.BlockSpec((1, halo, c),
                             lambda b, t, s=tl // halo: (b, (t + 1) * s, 0)))
            args.append(buf)
    for w in flat_inputs:
        # TODO(synk): could be single-buffered (pipeline_mode=pl.Buffered(1))
        # to halve resident weight VMEM; kept default for robustness.
        in_specs.append(
            pl.BlockSpec(w.shape, lambda b, t, nd=w.ndim: (0,) * nd))
        args.append(w)
    out = pl.pallas_call(
        kernel,
        grid=(batch, n_tiles),
        in_specs=in_specs,
        out_specs=pl.BlockSpec((1, tl, out_channels), lambda b, t: (b, t, 0)),
        out_shape=jax.ShapeDtypeStruct(
            (batch, n_tiles * tl + _SLACK, out_channels), jnp.float32),
        compiler_params=pltpu.CompilerParams(
            dimension_semantics=("parallel", "parallel"),
            vmem_limit_bytes=_VMEM_LIMIT),
    )(*args)
    return Act(out, out_len)


def _window(main_ref, halo_ref):
    return jnp.concatenate([main_ref[0], halo_ref[0]], axis=0)


def _gated(acc, c_out):
    return jnp.tanh(acc[:, :c_out]) * jax.nn.sigmoid(acc[:, c_out:])


# ----------------------------------------------------------------------------
# Kernels (all dots: bf16 operands, f32 accumulation)
# ----------------------------------------------------------------------------
def _make_input_conv_kernel(k, tl):
    def kernel(xm_ref, xh_ref, w_ref, b_ref, o_ref):
        x = _window(xm_ref, xh_ref).astype(jnp.bfloat16)
        cols = jnp.concatenate([x[i:i + tl] for i in range(k)], axis=-1)
        o_ref[0] = (jnp.dot(cols, w_ref[...],
                            preferred_element_type=jnp.float32) + b_ref[...])
    return kernel


def _make_gated_chain_kernel(k, tl, c_out, depth):
    # h_{j+1} = h_j[k-1:] + tanh(conv_f(h_j)) * sigmoid(conv_g(h_j)); the whole
    # depth-long chain runs on one VMEM window (window >= tl + depth*(k-1)).
    def kernel(xm_ref, xh_ref, *rest):
        o_ref = rest[-1]
        h = _window(xm_ref, xh_ref)
        for j in range(depth):
            w_ref, b_ref = rest[2 * j], rest[2 * j + 1]
            rows = h.shape[0] - (k - 1)
            cols = jnp.concatenate([h[i:i + rows] for i in range(k)],
                                   axis=-1).astype(jnp.bfloat16)
            acc = (jnp.dot(cols, w_ref[...],
                           preferred_element_type=jnp.float32) + b_ref[...])
            h = h[k - 1:] + _gated(acc, c_out)
        o_ref[0] = h[:tl]
    return kernel


def _make_gated_cond_kernel(k, tl, c_out):
    # out = x[k-1:] + gate(conv([x || cond])); one fused (tanh||sigmoid) dot.
    def kernel(xm_ref, xh_ref, cm_ref, ch_ref, w_ref, b_ref, o_ref):
        x_win = _window(xm_ref, xh_ref)
        res = jnp.concatenate([x_win, _window(cm_ref, ch_ref)], axis=-1)
        cols = jnp.concatenate([res[i:i + tl] for i in range(k)],
                               axis=-1).astype(jnp.bfloat16)
        acc = (jnp.dot(cols, w_ref[...],
                       preferred_element_type=jnp.float32) + b_ref[...])
        o_ref[0] = x_win[k - 1:k - 1 + tl] + _gated(acc, c_out)
    return kernel


def _make_down_res_kernel(k, tl, c_out, id_parity, id_off):
    # stride-2 gated conv on a pair-packed window: lanes [:c] = even rows,
    # lanes [c:] = odd rows (half the FLOPs, no strided HBM gathers).
    def kernel(xm_ref, xh_ref, w_ref, b_ref, o_ref):
        win = _window(xm_ref, xh_ref)
        phases = (win[:, :c_out], win[:, c_out:])
        cols = jnp.concatenate(
            [phases[i % 2][i // 2:i // 2 + tl] for i in range(k)],
            axis=-1).astype(jnp.bfloat16)
        acc = (jnp.dot(cols, w_ref[...],
                       preferred_element_type=jnp.float32) + b_ref[...])
        o_ref[0] = phases[id_parity][id_off:id_off + tl] + _gated(acc, c_out)
    return kernel


def _make_up_res_kernel(k, tl, c_out, phase_params):
    # polyphase ConvTranspose1d(stride=2): even output phase -> lanes [:C],
    # odd output phase -> lanes [C:]; interleaved by a reshape outside.
    def kernel(xm_ref, xh_ref, w0_ref, w1_ref, b_ref, o_ref):
        x = _window(xm_ref, xh_ref)
        xb = x.astype(jnp.bfloat16)
        outs = []
        for (d, m, g), w_ref in zip(phase_params, (w0_ref, w1_ref)):
            cols = jnp.concatenate([xb[d + j:d + j + tl] for j in range(m)],
                                   axis=-1)
            acc = (jnp.dot(cols, w_ref[...],
                           preferred_element_type=jnp.float32) + b_ref[...])
            outs.append(x[g:g + tl] + _gated(acc, c_out))
        o_ref[0] = jnp.concatenate(outs, axis=-1)
    return kernel


def _make_relu_1x1_kernel():
    def kernel(x_ref, w_ref, b_ref, o_ref):
        x = jnp.maximum(x_ref[0], 0.0).astype(jnp.bfloat16)
        o_ref[0] = (jnp.dot(x, w_ref[...],
                            preferred_element_type=jnp.float32) + b_ref[...])
    return kernel


# ----------------------------------------------------------------------------
# Layer wrappers (take / return Act = (over-allocated buffer, valid length))
# ----------------------------------------------------------------------------
def input_conv(act, w_flat, b, k):
    x, length = act
    out_len = length - k + 1
    tl = _pick_tile(out_len, _BASE_HALO)
    return _tiled_call(_make_input_conv_kernel(k, tl), [(x, True)],
                       [w_flat, b], out_len, w_flat.shape[1], tl, _BASE_HALO)


def _gated_chain_call(act, params_list, k):
    x, length = act
    c = x.shape[-1]
    d = len(params_list)
    out_len = length - d * (k - 1)
    halo = _round_up(max(d * (k - 1), 1), _BASE_HALO)
    tl = _pick_tile(out_len, halo)
    flats = []
    for p in params_list:
        flats += [p["w"], p["b"]]
    kern = _make_gated_chain_kernel(k, tl, c, d)
    return _tiled_call(kern, [(x, True)], flats, out_len, c, tl, halo)


def gated_chain(act, params_list, k):
    # fuse up to _MAX_FUSE_LOOKAHEAD/(k-1) layers per pallas_call
    if not params_list:
        return act
    per_group = max(1, _MAX_FUSE_LOOKAHEAD // (k - 1))
    i = 0
    while i < len(params_list):
        act = _gated_chain_call(act, params_list[i:i + per_group], k)
        i += per_group
    return act


def gated_residual_cond(act, cond_act, params, k):
    x, length = act
    c = x.shape[-1]
    out_len = length - (k - 1)
    tl = _pick_tile(out_len, _BASE_HALO)
    kern = _make_gated_cond_kernel(k, tl, c)
    return _tiled_call(kern, [(x, True), (cond_act.buf, True)],
                       [params["w"], params["b"]], out_len, c, tl, _BASE_HALO)


def down_residual(act, params, k):
    x, length = act
    batch, _, c = x.shape
    out_len = (length - k) // 2 + 1
    id_start = length + 1 - 2 * out_len       # identity = x[id_start::2]
    halo = _BASE_HALO
    tl = _pick_tile(out_len, halo)
    n_tiles = -(-out_len // tl)
    pair_rows = n_tiles * tl + halo
    x = _ensure_rows(x, 2 * pair_rows)
    # single relayout pass: pair-pack rows -> even phase lanes [:c], odd [c:]
    xp = x[:, :2 * pair_rows, :].reshape(batch, pair_rows, 2 * c)
    kern = _make_down_res_kernel(k, tl, c, id_start % 2, id_start // 2)
    return _tiled_call(kern, [(xp, True)], [params["w"], params["b"]],
                       out_len, c, tl, halo)


def up_residual(act, params, k, pad_front):
    x, length = act
    batch, _, c = x.shape
    out_len = 2 * length - k + pad_front      # cropped ConvTranspose out length
    half = (out_len + 1) // 2                 # rows per interleaved output phase
    halo = _BASE_HALO
    tl = _pick_tile(half, halo)
    phase_params, ws = [], []
    for r in (0, 1):
        k0 = (pad_front + r) % 2              # tap parity feeding output phase r
        d = (r + k0 - pad_front) // 2         # input offset of first tap
        m = (k - k0 + 1) // 2                 # number of taps in this phase
        g = (k - pad_front + r) // 2          # identity (duplicate+crop) offset
        phase_params.append((d, m, g))
        ws.append(params["w_even"] if k0 == 0 else params["w_odd"])
    kern = _make_up_res_kernel(k, tl, c, tuple(phase_params))
    packed = _tiled_call(kern, [(x, True)], ws + [params["b"]],
                         half, 2 * c, tl, halo)
    # (B, R, 2c) -> (B, 2R, c) is the exact row-major phase interleave.
    # TODO(synk): one XLA relayout pass per up level; a kernel-side interleaved
    # store would need sublane-strided writes.
    pb = packed.buf
    return Act(pb.reshape(batch, 2 * pb.shape[1], c), out_len)


def relu_conv1x1(act, w, b):
    x, length = act
    tl = _pick_tile(length, 0)
    return _tiled_call(_make_relu_1x1_kernel(), [(x, False)], [w, b],
                       length, w.shape[1], tl, 0)


def crop_front(act, target_len):
    off = act.length - target_len
    assert off >= 0
    if off == 0:
        return Act(act.buf, target_len)
    # TODO(synk): non-8-aligned front crop kept as an XLA slice; fusing it into
    # the consumer kernel needs element-offset index maps / scalar prefetch.
    return Act(act.buf[:, off:, :], target_len)


# ----------------------------------------------------------------------------
# Size arithmetic (replica of the PyTorch get_input_size / check_padding)
# ----------------------------------------------------------------------------
def _rl_get_input_size(output_size, k, stride, transpose):
    if (not transpose) and stride > 1:
        curr = (output_size - 1) * stride + 1
    else:
        curr = output_size
    curr = curr + k - 1
    pad_front = None
    if transpose:
        pad_front = (curr - 1) % stride
        curr = int(math.ceil(curr / stride))
    assert curr > 0
    return curr, pad_front


def _up_block_get_input_size(output_size, k, stride, depth):
    curr = output_size
    for _ in range(depth):
        curr, _ = _rl_get_input_size(curr, k, 1, False)
    curr, pad_front = _rl_get_input_size(curr, k, stride, True)
    return curr, pad_front


def _down_block_get_input_size(output_size, k, stride, depth):
    curr, _ = _rl_get_input_size(output_size, k, stride, False)
    for _ in range(depth):
        curr, _ = _rl_get_input_size(curr, k, 1, False)
    return curr


# ----------------------------------------------------------------------------
# Sequnet (forward pass, 'normal' mode)
# ----------------------------------------------------------------------------
class SequnetPallas:
    def __init__(self, num_inputs, num_channels, num_levels, num_outputs,
                 kernel_size=3, depth=1, key=None):
        assert kernel_size % 2 == 1 and 3 <= kernel_size <= _BASE_HALO + 1
        self.num_levels = num_levels
        self.K = kernel_size
        self.depth = depth
        self.cycles = 2 ** (num_levels - 1)
        C = num_channels

        keys = iter(jax.random.split(key, 4096))

        def init_conv(cin, cout, k):
            w = jax.random.normal(next(keys), (k, cin, cout), jnp.float32)
            w = w / jnp.sqrt(float(cin * k))
            b = 0.01 * jax.random.normal(next(keys), (1, cout), jnp.float32)
            return w, b

        def init_gated(cin, cout, k):
            wf, bf = init_conv(cin, cout, k)
            wg, bg = init_conv(cin, cout, k)
            w_fg = jnp.concatenate([wf, wg], axis=-1)          # (k, cin, 2*cout)
            return {
                # fused im2col weight (bf16 in HBM, f32 accumulation in-kernel)
                "w": w_fg.reshape(k * cin, 2 * cout).astype(jnp.bfloat16),
                "w_even": w_fg[0::2].reshape(-1, 2 * cout).astype(jnp.bfloat16),
                "w_odd": w_fg[1::2].reshape(-1, 2 * cout).astype(jnp.bfloat16),
                "b": jnp.concatenate([bf, bg], axis=-1),       # (1, 2*cout) f32
            }

        in_w, in_b = init_conv(num_inputs, C, kernel_size)
        self.in_w = in_w.reshape(kernel_size * num_inputs, C).astype(jnp.bfloat16)
        self.in_b = in_b

        self.down, self.up = [], []
        for _ in range(num_levels - 1):
            self.down.append({
                "convs": [init_gated(C, C, kernel_size) for _ in range(depth)],
                "downconv": init_gated(C, C, kernel_size),
            })
            # TODO(synk): importing PyTorch ConvTranspose1d weights would need a
            # flip along K + channel transpose; here weights are stored directly
            # in the conv-equivalent (flipped) form used by the polyphase kernel.
            self.up.append({
                "upconv": init_gated(C, C, kernel_size),
                "convs": [init_gated(2 * C, C, kernel_size)
                          for _ in range(depth)],
            })
        self.bottlenecks = [init_gated(C, C, kernel_size)
                            for _ in range(depth)]
        self.out_w = (jax.random.normal(next(keys), (C, num_outputs),
                                        jnp.float32)
                      / jnp.sqrt(float(C))).astype(jnp.bfloat16)
        self.out_b = 0.01 * jax.random.normal(next(keys), (1, num_outputs),
                                              jnp.float32)

    def check_padding(self, target_output_size):
        output_size = target_output_size // self.cycles * self.cycles
        if target_output_size % self.cycles > 0:
            output_size += self.cycles
        curr = output_size
        pad_fronts = []
        for _ in range(self.num_levels - 1):            # upsampling_blocks order
            curr, pf = _up_block_get_input_size(curr, self.K, 2, self.depth)
            pad_fronts.append(pf)
        for _ in range(self.depth):                      # bottlenecks
            curr, _ = _rl_get_input_size(curr, self.K, 1, False)
        for _ in reversed(range(self.num_levels - 1)):   # down blocks reversed
            curr = _down_block_get_input_size(curr, self.K, 2, self.depth)
        curr = curr + self.K - 1                         # input_conv
        return curr, output_size, pad_fronts

    def __call__(self, x):
        # x: (B, num_inputs, T) in PyTorch NCW convention
        # TODO(synk): stateful streaming modes ('save'/'step' with per-layer
        # input buffers and clock) are not implemented; only 'normal' forward.
        B, _, T = x.shape
        input_size, output_size, pad_fronts = self.check_padding(T)
        K = self.K

        h = jnp.transpose(x, (0, 2, 1)).astype(jnp.float32)      # (B, T, Cin)
        # single pad: semantic front zero-pad + back rows for the first
        # kernel's tiling (no other layer ever pads or crops).
        out_len0 = input_size - K + 1
        tl0 = _pick_tile(out_len0, _BASE_HALO)
        rows0 = -(-out_len0 // tl0) * tl0 + _BASE_HALO
        h = jnp.pad(h, ((0, 0),
                        (input_size - T, max(rows0 - input_size, 0)),
                        (0, 0)))
        out = input_conv(Act(h, input_size), self.in_w, self.in_b, K)

        shortcuts = []
        for blk in self.down:
            short = gated_chain(out, blk["convs"], K)   # fused depth-chain
            out = down_residual(short, blk["downconv"], K)
            shortcuts.append(short)

        out = gated_chain(out, self.bottlenecks, K)      # fused depth-chain

        for idx in reversed(range(self.num_levels - 1)):
            blk, short = self.up[idx], shortcuts[idx]
            upsampled = up_residual(out, blk["upconv"], K, pad_fronts[idx])
            combined = crop_front(short, upsampled.length)
            for p in blk["convs"]:
                # TODO(synk): the conditioned up-block chain could also be fused
                # into one kernel (static cond offsets baked into halo reads).
                cond = crop_front(upsampled, combined.length)
                combined = gated_residual_cond(combined, cond, p, K)
            out = combined

        out = relu_conv1x1(out, self.out_w, self.out_b)          # ReLU + 1x1
        y = out.buf[:, out.length - T:out.length, :]             # last T rows
        return jnp.transpose(y, (0, 2, 1))                       # (B, Cout, T)


if __name__ == "__main__":
    B, num_inputs, T = 2, 4, 16
    num_channels, num_levels, num_outputs, kernel_size, depth = 8, 2, 4, 3, 1

    key = jax.random.PRNGKey(0)
    model = SequnetPallas(num_inputs, num_channels, num_levels, num_outputs,
                          kernel_size=kernel_size, depth=depth, key=key)
    x = jax.random.normal(jax.random.PRNGKey(0), (B, num_inputs, T),
                          jnp.float32)

    fwd = jax.jit(lambda inp: model(inp))
    y = jax.block_until_ready(fwd(x))
    assert y.shape == (B, num_outputs, T), y.shape
    assert bool(jnp.all(jnp.isfinite(y)))
    print("KERNEL_OK")
</pallas_src>

<mosaic_0001>
module attributes {stable_mosaic.version = 11 : i64} {
  func.func @kernel(%arg0: i32, %arg1: i32, %arg2: memref<1x32x4xf32, #tpu.memory_space<vmem>>, %arg3: memref<1x8x4xf32, #tpu.memory_space<vmem>>, %arg4: memref<12x8xbf16, #tpu.memory_space<vmem>>, %arg5: memref<1x8xf32, #tpu.memory_space<vmem>>, %arg6: memref<1x32x8xf32, #tpu.memory_space<vmem>>) attributes {dimension_semantics = [#tpu.dimension_semantics<parallel>, #tpu.dimension_semantics<parallel>], iteration_bounds = array<i64: 2, 1>, scalar_prefetch = 0 : i64, scratch_operands = 0 : i64, tpu.core_type = #tpu.core_type<tc>, window_params = [{transform_indices = @transform_0, window_bounds = array<i64: 1, 32, 4>}, {transform_indices = @transform_1, window_bounds = array<i64: 1, 8, 4>}, {pipeline_mode = #tpu.pipeline_mode<synchronous>, transform_indices = @transform_2, window_bounds = array<i64: 12, 8>}, {pipeline_mode = #tpu.pipeline_mode<synchronous>, transform_indices = @transform_3, window_bounds = array<i64: 1, 8>}, {transform_indices = @transform_4, window_bounds = array<i64: 1, 32, 8>}]} {
    %c0 = arith.constant 0 : index
    %c0_0 = arith.constant 0 : index
    %c0_1 = arith.constant 0 : index
    %0 = vector.load %arg2[%c0, %c0_0, %c0_1] : memref<1x32x4xf32, #tpu.memory_space<vmem>>, vector<1x32x4xf32>
    %1 = vector.shape_cast %0 : vector<1x32x4xf32> to vector<32x4xf32>
    %c0_2 = arith.constant 0 : index
    %c0_3 = arith.constant 0 : index
    %c0_4 = arith.constant 0 : index
    %2 = vector.load %arg3[%c0_2, %c0_3, %c0_4] : memref<1x8x4xf32, #tpu.memory_space<vmem>>, vector<1x8x4xf32>
    %3 = vector.shape_cast %2 : vector<1x8x4xf32> to vector<8x4xf32>
    %4 = tpu.concatenate %1, %3 in 0 : vector<32x4xf32>, vector<8x4xf32> -> vector<40x4xf32>
    %5 = arith.truncf %4 : vector<40x4xf32> to vector<40x4xbf16>
    %6 = vector.extract_strided_slice %5 {offsets = [0, 0], sizes = [32, 4], strides = [1, 1]} : vector<40x4xbf16> to vector<32x4xbf16>
    %7 = vector.extract_strided_slice %5 {offsets = [1, 0], sizes = [32, 4], strides = [1, 1]} : vector<40x4xbf16> to vector<32x4xbf16>
    %8 = vector.extract_strided_slice %5 {offsets = [2, 0], sizes = [32, 4], strides = [1, 1]} : vector<40x4xbf16> to vector<32x4xbf16>
    %9 = tpu.concatenate %6, %7, %8 in 1 : vector<32x4xbf16>, vector<32x4xbf16>, vector<32x4xbf16> -> vector<32x12xbf16>
    %c0_5 = arith.constant 0 : index
    %c0_6 = arith.constant 0 : index
    %10 = vector.load %arg4[%c0_5, %c0_6] : memref<12x8xbf16, #tpu.memory_space<vmem>>, vector<12x8xbf16>
    %cst = arith.constant dense<0.000000e+00> : vector<32x8xf32>
    %11 = tpu.matmul %9, %10, %cst {dimension_numbers = #tpu.dot_dimension_numbers<[1], [0], [0], [1], [0, 0, 1, 1], [], []>} : vector<32x12xbf16>, vector<12x8xbf16>, vector<32x8xf32> -> vector<32x8xf32>
    %c0_7 = arith.constant 0 : index
    %c0_8 = arith.constant 0 : index
    %12 = vector.load %arg5[%c0_7, %c0_8] : memref<1x8xf32, #tpu.memory_space<vmem>>, vector<1x8xf32>
    %13 = vector.broadcast %12 : vector<1x8xf32> to vector<32x8xf32>
    %14 = arith.addf %11, %13 : vector<32x8xf32>
    %c0_9 = arith.constant 0 : index
    %c0_10 = arith.constant 0 : index
    %c0_11 = arith.constant 0 : index
    %15 = vector.load %arg6[%c0_9, %c0_10, %c0_11] : memref<1x32x8xf32, #tpu.memory_space<vmem>>, vector<1x32x8xf32>
    %16 = vector.shape_cast %15 : vector<1x32x8xf32> to vector<32x8xf32>
    %17 = vector.shape_cast %14 : vector<32x8xf32> to vector<1x32x8xf32>
    tpu.vector_store %arg6[%c0_9, %c0_10, %c0_11], %17 {strides = array<i32>} : memref<1x32x8xf32, #tpu.memory_space<vmem>>, vector<1x32x8xf32>,
    return
  }
  func.func @transform_0(%arg0: i32, %arg1: i32) -> (i32, i32, i32) {
    %c0_i32 = arith.constant 0 : i32
    %c0_i32_0 = arith.constant 0 : i32
    return %arg0, %arg1, %c0_i32 : i32, i32, i32
  }
  func.func @transform_1(%arg0: i32, %arg1: i32) -> (i32, i32, i32) {
    %c1_i32 = arith.constant 1 : i32
    %0 = arith.addi %arg1, %c1_i32 : i32
    %c4_i32 = arith.constant 4 : i32
    %1 = arith.muli %0, %c4_i32 : i32
    %c0_i32 = arith.constant 0 : i32
    %c0_i32_0 = arith.constant 0 : i32
    return %arg0, %1, %c0_i32 : i32, i32, i32
  }
  func.func @transform_2(%arg0: i32, %arg1: i32) -> (i32, i32) {
    %c0_i32 = arith.constant 0 : i32
    %c0_i32_0 = arith.constant 0 : i32
    %c0_i32_1 = arith.constant 0 : i32
    return %c0_i32, %c0_i32_0 : i32, i32
  }
  func.func @transform_3(%arg0: i32, %arg1: i32) -> (i32, i32) {
    %c0_i32 = arith.constant 0 : i32
    %c0_i32_0 = arith.constant 0 : i32
    %c0_i32_1 = arith.constant 0 : i32
    return %c0_i32, %c0_i32_0 : i32, i32
  }
  func.func @transform_4(%arg0: i32, %arg1: i32) -> (i32, i32, i32) {
    %c0_i32 = arith.constant 0 : i32
    %c0_i32_0 = arith.constant 0 : i32
    return %arg0, %arg1, %c0_i32 : i32, i32, i32
  }
}

module attributes {stable_mosaic.version = 11 : i64} {
  func.func @kernel(%arg0: i32, %arg1: i32, %arg2: memref<1x32x8xf32, #tpu.memory_space<vmem>>, %arg3: memref<1x8x8xf32, #tpu.memory_space<vmem>>, %arg4: memref<24x16xbf16, #tpu.memory_space<vmem>>, %arg5: memref<1x16xf32, #tpu.memory_space<vmem>>, %arg6: memref<1x32x8xf32, #tpu.memory_space<vmem>>) attributes {dimension_semantics = [#tpu.dimension_semantics<parallel>, #tpu.dimension_semantics<parallel>], iteration_bounds = array<i64: 2, 1>, scalar_prefetch = 0 : i64, scratch_operands = 0 : i64, tpu.core_type = #tpu.core_type<tc>, window_params = [{transform_indices = @transform_0, window_bounds = array<i64: 1, 32, 8>}, {transform_indices = @transform_1, window_bounds = array<i64: 1, 8, 8>}, {pipeline_mode = #tpu.pipeline_mode<synchronous>, transform_indices = @transform_2, window_bounds = array<i64: 24, 16>}, {pipeline_mode = #tpu.pipeline_mode<synchronous>, transform_indices = @transform_3, window_bounds = array<i64: 1, 16>}, {transform_indices = @transform_4, window_bounds = array<i64: 1, 32, 8>}]} {
    %c0 = arith.constant 0 : index
    %c0_0 = arith.constant 0 : index
    %c0_1 = arith.constant 0 : index
    %0 = vector.load %arg2[%c0, %c0_0, %c0_1] : memref<1x32x8xf32, #tpu.memory_space<vmem>>, vector<1x32x8xf32>
    %1 = vector.shape_cast %0 : vector<1x32x8xf32> to vector<32x8xf32>
    %c0_2 = arith.constant 0 : index
    %c0_3 = arith.constant 0 : index
    %c0_4 = arith.constant 0 : index
    %2 = vector.load %arg3[%c0_2, %c0_3, %c0_4] : memref<1x8x8xf32, #tpu.memory_space<vmem>>, vector<1x8x8xf32>
    %3 = vector.shape_cast %2 : vector<1x8x8xf32> to vector<8x8xf32>
    %4 = tpu.concatenate %1, %3 in 0 : vector<32x8xf32>, vector<8x8xf32> -> vector<40x8xf32>
    %5 = vector.extract_strided_slice %4 {offsets = [0, 0], sizes = [38, 8], strides = [1, 1]} : vector<40x8xf32> to vector<38x8xf32>
    %6 = vector.extract_strided_slice %4 {offsets = [1, 0], sizes = [38, 8], strides = [1, 1]} : vector<40x8xf32> to vector<38x8xf32>
    %7 = vector.extract_strided_slice %4 {offsets = [2, 0], sizes = [38, 8], strides = [1, 1]} : vector<40x8xf32> to vector<38x8xf32>
    %8 = tpu.concatenate %5, %6, %7 in 1 : vector<38x8xf32>, vector<38x8xf32>, vector<38x8xf32> -> vector<38x24xf32>
    %9 = arith.truncf %8 : vector<38x24xf32> to vector<38x24xbf16>
    %c0_5 = arith.constant 0 : index
    %c0_6 = arith.constant 0 : index
    %10 = vector.load %arg4[%c0_5, %c0_6] : memref<24x16xbf16, #tpu.memory_space<vmem>>, vector<24x16xbf16>
    %cst = arith.constant dense<0.000000e+00> : vector<38x16xf32>
    %11 = tpu.matmul %9, %10, %cst {dimension_numbers = #tpu.dot_dimension_numbers<[1], [0], [0], [1], [0, 0, 1, 1], [], []>} : vector<38x24xbf16>, vector<24x16xbf16>, vector<38x16xf32> -> vector<38x16xf32>
    %c0_7 = arith.constant 0 : index
    %c0_8 = arith.constant 0 : index
    %12 = vector.load %arg5[%c0_7, %c0_8] : memref<1x16xf32, #tpu.memory_space<vmem>>, vector<1x16xf32>
    %13 = vector.broadcast %12 : vector<1x16xf32> to vector<38x16xf32>
    %14 = arith.addf %11, %13 : vector<38x16xf32>
    %15 = vector.extract_strided_slice %4 {offsets = [2, 0], sizes = [38, 8], strides = [1, 1]} : vector<40x8xf32> to vector<38x8xf32>
    %16 = vector.extract_strided_slice %14 {offsets = [0, 0], sizes = [38, 8], strides = [1, 1]} : vector<38x16xf32> to vector<38x8xf32>
    %17 = math.tanh %16 : vector<38x8xf32>
    %18 = vector.extract_strided_slice %14 {offsets = [0, 8], sizes = [38, 8], strides = [1, 1]} : vector<38x16xf32> to vector<38x8xf32>
    %19 = arith.negf %18 : vector<38x8xf32>
    %20 = math.exp %19 : vector<38x8xf32>
    %cst_9 = arith.constant 1.000000e+00 : f32
    %21 = vector.broadcast %cst_9 : f32 to vector<38x8xf32>
    %22 = arith.addf %21, %20 : vector<38x8xf32>
    %23 = arith.divf %21, %22 : vector<38x8xf32>
    %24 = arith.mulf %17, %23 : vector<38x8xf32>
    %25 = arith.addf %15, %24 : vector<38x8xf32>
    %26 = vector.extract_strided_slice %25 {offsets = [0, 0], sizes = [32, 8], strides = [1, 1]} : vector<38x8xf32> to vector<32x8xf32>
    %c0_10 = arith.constant 0 : index
    %c0_11 = arith.constant 0 : index
    %c0_12 = arith.constant 0 : index
    %27 = vector.load %arg6[%c0_10, %c0_11, %c0_12] : memref<1x32x8xf32, #tpu.memory_space<vmem>>, vector<1x32x8xf32>
    %28 = vector.shape_cast %27 : vector<1x32x8xf32> to vector<32x8xf32>
    %29 = vector.shape_cast %26 : vector<32x8xf32> to vector<1x32x8xf32>
    tpu.vector_store %arg6[%c0_10, %c0_11, %c0_12], %29 {strides = array<i32>} : memref<1x32x8xf32, #tpu.memory_space<vmem>>, vector<1x32x8xf32>,
    return
  }
  func.func @transform_0(%arg0: i32, %arg1: i32) -> (i32, i32, i32) {
    %c0_i32 = arith.constant 0 : i32
    %c0_i32_0 = arith.constant 0 : i32
    return %arg0, %arg1, %c0_i32 : i32, i32, i32
  }
  func.func @transform_1(%arg0: i32, %arg1: i32) -> (i32, i32, i32) {
    %c1_i32 = arith.constant 1 : i32
    %0 = arith.addi %arg1, %c1_i32 : i32
    %c4_i32 = arith.constant 4 : i32
    %1 = arith.muli %0, %c4_i32 : i32
    %c0_i32 = arith.constant 0 : i32
    %c0_i32_0 = arith.constant 0 : i32
    return %arg0, %1, %c0_i32 : i32, i32, i32
  }
  func.func @transform_2(%arg0: i32, %arg1: i32) -> (i32, i32) {
    %c0_i32 = arith.constant 0 : i32
    %c0_i32_0 = arith.constant 0 : i32
    %c0_i32_1 = arith.constant 0 : i32
    return %c0_i32, %c0_i32_0 : i32, i32
  }
  func.func @transform_3(%arg0: i32, %arg1: i32) -> (i32, i32) {
    %c0_i32 = arith.constant 0 : i32
    %c0_i32_0 = arith.constant 0 : i32
    %c0_i32_1 = arith.constant 0 : i32
    return %c0_i32, %c0_i32_0 : i32, i32
  }
  func.func @transform_4(%arg0: i32, %arg1: i32) -> (i32, i32, i32) {
    %c0_i32 = arith.constant 0 : i32
    %c0_i32_0 = arith.constant 0 : i32
    return %arg0, %arg1, %c0_i32 : i32, i32, i32
  }
}

module attributes {stable_mosaic.version = 11 : i64} {
  func.func @kernel(%arg0: i32, %arg1: i32, %arg2: memref<1x16x16xf32, #tpu.memory_space<vmem>>, %arg3: memref<1x8x16xf32, #tpu.memory_space<vmem>>, %arg4: memref<24x16xbf16, #tpu.memory_space<vmem>>, %arg5: memref<1x16xf32, #tpu.memory_space<vmem>>, %arg6: memref<1x16x8xf32, #tpu.memory_space<vmem>>) attributes {dimension_semantics = [#tpu.dimension_semantics<parallel>, #tpu.dimension_semantics<parallel>], iteration_bounds = array<i64: 2, 1>, scalar_prefetch = 0 : i64, scratch_operands = 0 : i64, tpu.core_type = #tpu.core_type<tc>, window_params = [{transform_indices = @transform_0, window_bounds = array<i64: 1, 16, 16>}, {transform_indices = @transform_1, window_bounds = array<i64: 1, 8, 16>}, {pipeline_mode = #tpu.pipeline_mode<synchronous>, transform_indices = @transform_2, window_bounds = array<i64: 24, 16>}, {pipeline_mode = #tpu.pipeline_mode<synchronous>, transform_indices = @transform_3, window_bounds = array<i64: 1, 16>}, {transform_indices = @transform_4, window_bounds = array<i64: 1, 16, 8>}]} {
    %c0 = arith.constant 0 : index
    %c0_0 = arith.constant 0 : index
    %c0_1 = arith.constant 0 : index
    %0 = vector.load %arg2[%c0, %c0_0, %c0_1] : memref<1x16x16xf32, #tpu.memory_space<vmem>>, vector<1x16x16xf32>
    %1 = vector.shape_cast %0 : vector<1x16x16xf32> to vector<16x16xf32>
    %c0_2 = arith.constant 0 : index
    %c0_3 = arith.constant 0 : index
    %c0_4 = arith.constant 0 : index
    %2 = vector.load %arg3[%c0_2, %c0_3, %c0_4] : memref<1x8x16xf32, #tpu.memory_space<vmem>>, vector<1x8x16xf32>
    %3 = vector.shape_cast %2 : vector<1x8x16xf32> to vector<8x16xf32>
    %4 = tpu.concatenate %1, %3 in 0 : vector<16x16xf32>, vector<8x16xf32> -> vector<24x16xf32>
    %5 = vector.extract_strided_slice %4 {offsets = [0, 0], sizes = [24, 8], strides = [1, 1]} : vector<24x16xf32> to vector<24x8xf32>
    %6 = vector.extract_strided_slice %4 {offsets = [0, 8], sizes = [24, 8], strides = [1, 1]} : vector<24x16xf32> to vector<24x8xf32>
    %7 = vector.extract_strided_slice %5 {offsets = [0, 0], sizes = [16, 8], strides = [1, 1]} : vector<24x8xf32> to vector<16x8xf32>
    %8 = vector.extract_strided_slice %6 {offsets = [0, 0], sizes = [16, 8], strides = [1, 1]} : vector<24x8xf32> to vector<16x8xf32>
    %9 = vector.extract_strided_slice %5 {offsets = [1, 0], sizes = [16, 8], strides = [1, 1]} : vector<24x8xf32> to vector<16x8xf32>
    %10 = tpu.concatenate %7, %8, %9 in 1 : vector<16x8xf32>, vector<16x8xf32>, vector<16x8xf32> -> vector<16x24xf32>
    %11 = arith.truncf %10 : vector<16x24xf32> to vector<16x24xbf16>
    %c0_5 = arith.constant 0 : index
    %c0_6 = arith.constant 0 : index
    %12 = vector.load %arg4[%c0_5, %c0_6] : memref<24x16xbf16, #tpu.memory_space<vmem>>, vector<24x16xbf16>
    %cst = arith.constant dense<0.000000e+00> : vector<16x16xf32>
    %13 = tpu.matmul %11, %12, %cst {dimension_numbers = #tpu.dot_dimension_numbers<[1], [0], [0], [1], [0, 0, 1, 1], [], []>} : vector<16x24xbf16>, vector<24x16xbf16>, vector<16x16xf32> -> vector<16x16xf32>
    %c0_7 = arith.constant 0 : index
    %c0_8 = arith.constant 0 : index
    %14 = vector.load %arg5[%c0_7, %c0_8] : memref<1x16xf32, #tpu.memory_space<vmem>>, vector<1x16xf32>
    %15 = vector.broadcast %14 : vector<1x16xf32> to vector<16x16xf32>
    %16 = arith.addf %13, %15 : vector<16x16xf32>
    %17 = vector.extract_strided_slice %5 {offsets = [1, 0], sizes = [16, 8], strides = [1, 1]} : vector<24x8xf32> to vector<16x8xf32>
    %18 = vector.extract_strided_slice %16 {offsets = [0, 0], sizes = [16, 8], strides = [1, 1]} : vector<16x16xf32> to vector<16x8xf32>
    %19 = math.tanh %18 : vector<16x8xf32>
    %20 = vector.extract_strided_slice %16 {offsets = [0, 8], sizes = [16, 8], strides = [1, 1]} : vector<16x16xf32> to vector<16x8xf32>
    %21 = arith.negf %20 : vector<16x8xf32>
    %22 = math.exp %21 : vector<16x8xf32>
    %cst_9 = arith.constant 1.000000e+00 : f32
    %23 = vector.broadcast %cst_9 : f32 to vector<16x8xf32>
    %24 = arith.addf %23, %22 : vector<16x8xf32>
    %25 = arith.divf %23, %24 : vector<16x8xf32>
    %26 = arith.mulf %19, %25 : vector<16x8xf32>
    %27 = arith.addf %17, %26 : vector<16x8xf32>
    %c0_10 = arith.constant 0 : index
    %c0_11 = arith.constant 0 : index
    %c0_12 = arith.constant 0 : index
    %28 = vector.load %arg6[%c0_10, %c0_11, %c0_12] : memref<1x16x8xf32, #tpu.memory_space<vmem>>, vector<1x16x8xf32>
    %29 = vector.shape_cast %28 : vector<1x16x8xf32> to vector<16x8xf32>
    %30 = vector.shape_cast %27 : vector<16x8xf32> to vector<1x16x8xf32>
    tpu.vector_store %arg6[%c0_10, %c0_11, %c0_12], %30 {strides = array<i32>} : memref<1x16x8xf32, #tpu.memory_space<vmem>>, vector<1x16x8xf32>,
    return
  }
  func.func @transform_0(%arg0: i32, %arg1: i32) -> (i32, i32, i32) {
    %c0_i32 = arith.constant 0 : i32
    %c0_i32_0 = arith.constant 0 : i32
    return %arg0, %arg1, %c0_i32 : i32, i32, i32
  }
  func.func @transform_1(%arg0: i32, %arg1: i32) -> (i32, i32, i32) {
    %c1_i32 = arith.constant 1 : i32
    %0 = arith.addi %arg1, %c1_i32 : i32
    %c2_i32 = arith.constant 2 : i32
    %1 = arith.muli %0, %c2_i32 : i32
    %c0_i32 = arith.constant 0 : i32
    %c0_i32_0 = arith.constant 0 : i32
    return %arg0, %1, %c0_i32 : i32, i32, i32
  }
  func.func @transform_2(%arg0: i32, %arg1: i32) -> (i32, i32) {
    %c0_i32 = arith.constant 0 : i32
    %c0_i32_0 = arith.constant 0 : i32
    %c0_i32_1 = arith.constant 0 : i32
    return %c0_i32, %c0_i32_0 : i32, i32
  }
  func.func @transform_3(%arg0: i32, %arg1: i32) -> (i32, i32) {
    %c0_i32 = arith.constant 0 : i32
    %c0_i32_0 = arith.constant 0 : i32
    %c0_i32_1 = arith.constant 0 : i32
    return %c0_i32, %c0_i32_0 : i32, i32
  }
  func.func @transform_4(%arg0: i32, %arg1: i32) -> (i32, i32, i32) {
    %c0_i32 = arith.constant 0 : i32
    %c0_i32_0 = arith.constant 0 : i32
    return %arg0, %arg1, %c0_i32 : i32, i32, i32
  }
}

module attributes {stable_mosaic.version = 11 : i64} {
  func.func @kernel(%arg0: i32, %arg1: i32, %arg2: memref<1x16x8xf32, #tpu.memory_space<vmem>>, %arg3: memref<1x8x8xf32, #tpu.memory_space<vmem>>, %arg4: memref<24x16xbf16, #tpu.memory_space<vmem>>, %arg5: memref<1x16xf32, #tpu.memory_space<vmem>>, %arg6: memref<1x16x8xf32, #tpu.memory_space<vmem>>) attributes {dimension_semantics = [#tpu.dimension_semantics<parallel>, #tpu.dimension_semantics<parallel>], iteration_bounds = array<i64: 2, 1>, scalar_prefetch = 0 : i64, scratch_operands = 0 : i64, tpu.core_type = #tpu.core_type<tc>, window_params = [{transform_indices = @transform_0, window_bounds = array<i64: 1, 16, 8>}, {transform_indices = @transform_1, window_bounds = array<i64: 1, 8, 8>}, {pipeline_mode = #tpu.pipeline_mode<synchronous>, transform_indices = @transform_2, window_bounds = array<i64: 24, 16>}, {pipeline_mode = #tpu.pipeline_mode<synchronous>, transform_indices = @transform_3, window_bounds = array<i64: 1, 16>}, {transform_indices = @transform_4, window_bounds = array<i64: 1, 16, 8>}]} {
    %c0 = arith.constant 0 : index
    %c0_0 = arith.constant 0 : index
    %c0_1 = arith.constant 0 : index
    %0 = vector.load %arg2[%c0, %c0_0, %c0_1] : memref<1x16x8xf32, #tpu.memory_space<vmem>>, vector<1x16x8xf32>
    %1 = vector.shape_cast %0 : vector<1x16x8xf32> to vector<16x8xf32>
    %c0_2 = arith.constant 0 : index
    %c0_3 = arith.constant 0 : index
    %c0_4 = arith.constant 0 : index
    %2 = vector.load %arg3[%c0_2, %c0_3, %c0_4] : memref<1x8x8xf32, #tpu.memory_space<vmem>>, vector<1x8x8xf32>
    %3 = vector.shape_cast %2 : vector<1x8x8xf32> to vector<8x8xf32>
    %4 = tpu.concatenate %1, %3 in 0 : vector<16x8xf32>, vector<8x8xf32> -> vector<24x8xf32>
    %5 = vector.extract_strided_slice %4 {offsets = [0, 0], sizes = [22, 8], strides = [1, 1]} : vector<24x8xf32> to vector<22x8xf32>
    %6 = vector.extract_strided_slice %4 {offsets = [1, 0], sizes = [22, 8], strides = [1, 1]} : vector<24x8xf32> to vector<22x8xf32>
    %7 = vector.extract_strided_slice %4 {offsets = [2, 0], sizes = [22, 8], strides = [1, 1]} : vector<24x8xf32> to vector<22x8xf32>
    %8 = tpu.concatenate %5, %6, %7 in 1 : vector<22x8xf32>, vector<22x8xf32>, vector<22x8xf32> -> vector<22x24xf32>
    %9 = arith.truncf %8 : vector<22x24xf32> to vector<22x24xbf16>
    %c0_5 = arith.constant 0 : index
    %c0_6 = arith.constant 0 : index
    %10 = vector.load %arg4[%c0_5, %c0_6] : memref<24x16xbf16, #tpu.memory_space<vmem>>, vector<24x16xbf16>
    %cst = arith.constant dense<0.000000e+00> : vector<22x16xf32>
    %11 = tpu.matmul %9, %10, %cst {dimension_numbers = #tpu.dot_dimension_numbers<[1], [0], [0], [1], [0, 0, 1, 1], [], []>} : vector<22x24xbf16>, vector<24x16xbf16>, vector<22x16xf32> -> vector<22x16xf32>
    %c0_7 = arith.constant 0 : index
    %c0_8 = arith.constant 0 : index
    %12 = vector.load %arg5[%c0_7, %c0_8] : memref<1x16xf32, #tpu.memory_space<vmem>>, vector<1x16xf32>
    %13 = vector.broadcast %12 : vector<1x16xf32> to vector<22x16xf32>
    %14 = arith.addf %11, %13 : vector<22x16xf32>
    %15 = vector.extract_strided_slice %4 {offsets = [2, 0], sizes = [22, 8], strides = [1, 1]} : vector<24x8xf32> to vector<22x8xf32>
    %16 = vector.extract_strided_slice %14 {offsets = [0, 0], sizes = [22, 8], strides = [1, 1]} : vector<22x16xf32> to vector<22x8xf32>
    %17 = math.tanh %16 : vector<22x8xf32>
    %18 = vector.extract_strided_slice %14 {offsets = [0, 8], sizes = [22, 8], strides = [1, 1]} : vector<22x16xf32> to vector<22x8xf32>
    %19 = arith.negf %18 : vector<22x8xf32>
    %20 = math.exp %19 : vector<22x8xf32>
    %cst_9 = arith.constant 1.000000e+00 : f32
    %21 = vector.broadcast %cst_9 : f32 to vector<22x8xf32>
    %22 = arith.addf %21, %20 : vector<22x8xf32>
    %23 = arith.divf %21, %22 : vector<22x8xf32>
    %24 = arith.mulf %17, %23 : vector<22x8xf32>
    %25 = arith.addf %15, %24 : vector<22x8xf32>
    %26 = vector.extract_strided_slice %25 {offsets = [0, 0], sizes = [16, 8], strides = [1, 1]} : vector<22x8xf32> to vector<16x8xf32>
    %c0_10 = arith.constant 0 : index
    %c0_11 = arith.constant 0 : index
    %c0_12 = arith.constant 0 : index
    %27 = vector.load %arg6[%c0_10, %c0_11, %c0_12] : memref<1x16x8xf32, #tpu.memory_space<vmem>>, vector<1x16x8xf32>
    %28 = vector.shape_cast %27 : vector<1x16x8xf32> to vector<16x8xf32>
    %29 = vector.shape_cast %26 : vector<16x8xf32> to vector<1x16x8xf32>
    tpu.vector_store %arg6[%c0_10, %c0_11, %c0_12], %29 {strides = array<i32>} : memref<1x16x8xf32, #tpu.memory_space<vmem>>, vector<1x16x8xf32>,
    return
  }
  func.func @transform_0(%arg0: i32, %arg1: i32) -> (i32, i32, i32) {
    %c0_i32 = arith.constant 0 : i32
    %c0_i32_0 = arith.constant 0 : i32
    return %arg0, %arg1, %c0_i32 : i32, i32, i32
  }
  func.func @transform_1(%arg0: i32, %arg1: i32) -> (i32, i32, i32) {
    %c1_i32 = arith.constant 1 : i32
    %0 = arith.addi %arg1, %c1_i32 : i32
    %c2_i32 = arith.constant 2 : i32
    %1 = arith.muli %0, %c2_i32 : i32
    %c0_i32 = arith.constant 0 : i32
    %c0_i32_0 = arith.constant 0 : i32
    return %arg0, %1, %c0_i32 : i32, i32, i32
  }
  func.func @transform_2(%arg0: i32, %arg1: i32) -> (i32, i32) {
    %c0_i32 = arith.constant 0 : i32
    %c0_i32_0 = arith.constant 0 : i32
    %c0_i32_1 = arith.constant 0 : i32
    return %c0_i32, %c0_i32_0 : i32, i32
  }
  func.func @transform_3(%arg0: i32, %arg1: i32) -> (i32, i32) {
    %c0_i32 = arith.constant 0 : i32
    %c0_i32_0 = arith.constant 0 : i32
    %c0_i32_1 = arith.constant 0 : i32
    return %c0_i32, %c0_i32_0 : i32, i32
  }
  func.func @transform_4(%arg0: i32, %arg1: i32) -> (i32, i32, i32) {
    %c0_i32 = arith.constant 0 : i32
    %c0_i32_0 = arith.constant 0 : i32
    return %arg0, %arg1, %c0_i32 : i32, i32, i32
  }
}

module attributes {stable_mosaic.version = 11 : i64} {
  func.func @kernel(%arg0: i32, %arg1: i32, %arg2: memref<1x16x8xf32, #tpu.memory_space<vmem>>, %arg3: memref<1x8x8xf32, #tpu.memory_space<vmem>>, %arg4: memref<8x16xbf16, #tpu.memory_space<vmem>>, %arg5: memref<16x16xbf16, #tpu.memory_space<vmem>>, %arg6: memref<1x16xf32, #tpu.memory_space<vmem>>, %arg7: memref<1x16x16xf32, #tpu.memory_space<vmem>>) attributes {dimension_semantics = [#tpu.dimension_semantics<parallel>, #tpu.dimension_semantics<parallel>], iteration_bounds = array<i64: 2, 1>, scalar_prefetch = 0 : i64, scratch_operands = 0 : i64, tpu.core_type = #tpu.core_type<tc>, window_params = [{transform_indices = @transform_0, window_bounds = array<i64: 1, 16, 8>}, {transform_indices = @transform_1, window_bounds = array<i64: 1, 8, 8>}, {pipeline_mode = #tpu.pipeline_mode<synchronous>, transform_indices = @transform_2, window_bounds = array<i64: 8, 16>}, {pipeline_mode = #tpu.pipeline_mode<synchronous>, transform_indices = @transform_3, window_bounds = array<i64: 16, 16>}, {pipeline_mode = #tpu.pipeline_mode<synchronous>, transform_indices = @transform_4, window_bounds = array<i64: 1, 16>}, {transform_indices = @transform_5, window_bounds = array<i64: 1, 16, 16>}]} {
    %c0 = arith.constant 0 : index
    %c0_0 = arith.constant 0 : index
    %c0_1 = arith.constant 0 : index
    %0 = vector.load %arg2[%c0, %c0_0, %c0_1] : memref<1x16x8xf32, #tpu.memory_space<vmem>>, vector<1x16x8xf32>
    %1 = vector.shape_cast %0 : vector<1x16x8xf32> to vector<16x8xf32>
    %c0_2 = arith.constant 0 : index
    %c0_3 = arith.constant 0 : index
    %c0_4 = arith.constant 0 : index
    %2 = vector.load %arg3[%c0_2, %c0_3, %c0_4] : memref<1x8x8xf32, #tpu.memory_space<vmem>>, vector<1x8x8xf32>
    %3 = vector.shape_cast %2 : vector<1x8x8xf32> to vector<8x8xf32>
    %4 = tpu.concatenate %1, %3 in 0 : vector<16x8xf32>, vector<8x8xf32> -> vector<24x8xf32>
    %5 = arith.truncf %4 : vector<24x8xf32> to vector<24x8xbf16>
    %6 = vector.extract_strided_slice %5 {offsets = [0, 0], sizes = [16, 8], strides = [1, 1]} : vector<24x8xbf16> to vector<16x8xbf16>
    %c0_5 = arith.constant 0 : index
    %c0_6 = arith.constant 0 : index
    %7 = vector.load %arg4[%c0_5, %c0_6] : memref<8x16xbf16, #tpu.memory_space<vmem>>, vector<8x16xbf16>
    %cst = arith.constant dense<0.000000e+00> : vector<16x16xf32>
    %8 = tpu.matmul %6, %7, %cst {dimension_numbers = #tpu.dot_dimension_numbers<[1], [0], [0], [1], [0, 0, 1, 1], [], []>} : vector<16x8xbf16>, vector<8x16xbf16>, vector<16x16xf32> -> vector<16x16xf32>
    %c0_7 = arith.constant 0 : index
    %c0_8 = arith.constant 0 : index
    %9 = vector.load %arg6[%c0_7, %c0_8] : memref<1x16xf32, #tpu.memory_space<vmem>>, vector<1x16xf32>
    %10 = vector.broadcast %9 : vector<1x16xf32> to vector<16x16xf32>
    %11 = arith.addf %8, %10 : vector<16x16xf32>
    %12 = vector.extract_strided_slice %4 {offsets = [1, 0], sizes = [16, 8], strides = [1, 1]} : vector<24x8xf32> to vector<16x8xf32>
    %13 = vector.extract_strided_slice %11 {offsets = [0, 0], sizes = [16, 8], strides = [1, 1]} : vector<16x16xf32> to vector<16x8xf32>
    %14 = math.tanh %13 : vector<16x8xf32>
    %15 = vector.extract_strided_slice %11 {offsets = [0, 8], sizes = [16, 8], strides = [1, 1]} : vector<16x16xf32> to vector<16x8xf32>
    %16 = arith.negf %15 : vector<16x8xf32>
    %17 = math.exp %16 : vector<16x8xf32>
    %cst_9 = arith.constant 1.000000e+00 : f32
    %18 = vector.broadcast %cst_9 : f32 to vector<16x8xf32>
    %19 = arith.addf %18, %17 : vector<16x8xf32>
    %20 = arith.divf %18, %19 : vector<16x8xf32>
    %21 = arith.mulf %14, %20 : vector<16x8xf32>
    %22 = arith.addf %12, %21 : vector<16x8xf32>
    %23 = vector.extract_strided_slice %5 {offsets = [0, 0], sizes = [16, 8], strides = [1, 1]} : vector<24x8xbf16> to vector<16x8xbf16>
    %24 = vector.extract_strided_slice %5 {offsets = [1, 0], sizes = [16, 8], strides = [1, 1]} : vector<24x8xbf16> to vector<16x8xbf16>
    %25 = tpu.concatenate %23, %24 in 1 : vector<16x8xbf16>, vector<16x8xbf16> -> vector<16x16xbf16>
    %c0_10 = arith.constant 0 : index
    %c0_11 = arith.constant 0 : index
    %26 = vector.load %arg5[%c0_10, %c0_11] : memref<16x16xbf16, #tpu.memory_space<vmem>>, vector<16x16xbf16>
    %cst_12 = arith.constant dense<0.000000e+00> : vector<16x16xf32>
    %27 = tpu.matmul %25, %26, %cst_12 {dimension_numbers = #tpu.dot_dimension_numbers<[1], [0], [0], [1], [0, 0, 1, 1], [], []>} : vector<16x16xbf16>, vector<16x16xbf16>, vector<16x16xf32> -> vector<16x16xf32>
    %c0_13 = arith.constant 0 : index
    %c0_14 = arith.constant 0 : index
    %28 = vector.load %arg6[%c0_13, %c0_14] : memref<1x16xf32, #tpu.memory_space<vmem>>, vector<1x16xf32>
    %29 = vector.broadcast %28 : vector<1x16xf32> to vector<16x16xf32>
    %30 = arith.addf %27, %29 : vector<16x16xf32>
    %31 = vector.extract_strided_slice %4 {offsets = [1, 0], sizes = [16, 8], strides = [1, 1]} : vector<24x8xf32> to vector<16x8xf32>
    %32 = vector.extract_strided_slice %30 {offsets = [0, 0], sizes = [16, 8], strides = [1, 1]} : vector<16x16xf32> to vector<16x8xf32>
    %33 = math.tanh %32 : vector<16x8xf32>
    %34 = vector.extract_strided_slice %30 {offsets = [0, 8], sizes = [16, 8], strides = [1, 1]} : vector<16x16xf32> to vector<16x8xf32>
    %35 = arith.negf %34 : vector<16x8xf32>
    %36 = math.exp %35 : vector<16x8xf32>
    %cst_15 = arith.constant 1.000000e+00 : f32
    %37 = vector.broadcast %cst_15 : f32 to vector<16x8xf32>
    %38 = arith.addf %37, %36 : vector<16x8xf32>
    %39 = arith.divf %37, %38 : vector<16x8xf32>
    %40 = arith.mulf %33, %39 : vector<16x8xf32>
    %41 = arith.addf %31, %40 : vector<16x8xf32>
    %42 = tpu.concatenate %22, %41 in 1 : vector<16x8xf32>, vector<16x8xf32> -> vector<16x16xf32>
    %c0_16 = arith.constant 0 : index
    %c0_17 = arith.constant 0 : index
    %c0_18 = arith.constant 0 : index
    %43 = vector.load %arg7[%c0_16, %c0_17, %c0_18] : memref<1x16x16xf32, #tpu.memory_space<vmem>>, vector<1x16x16xf32>
    %44 = vector.shape_cast %43 : vector<1x16x16xf32> to vector<16x16xf32>
    %45 = vector.shape_cast %42 : vector<16x16xf32> to vector<1x16x16xf32>
    tpu.vector_store %arg7[%c0_16, %c0_17, %c0_18], %45 {strides = array<i32>} : memref<1x16x16xf32, #tpu.memory_space<vmem>>, vector<1x16x16xf32>,
    return
  }
  func.func @transform_0(%arg0: i32, %arg1: i32) -> (i32, i32, i32) {
    %c0_i32 = arith.constant 0 : i32
    %c0_i32_0 = arith.constant 0 : i32
    return %arg0, %arg1, %c0_i32 : i32, i32, i32
  }
  func.func @transform_1(%arg0: i32, %arg1: i32) -> (i32, i32, i32) {
    %c1_i32 = arith.constant 1 : i32
    %0 = arith.addi %arg1, %c1_i32 : i32
    %c2_i32 = arith.constant 2 : i32
    %1 = arith.muli %0, %c2_i32 : i32
    %c0_i32 = arith.constant 0 : i32
    %c0_i32_0 = arith.constant 0 : i32
    return %arg0, %1, %c0_i32 : i32, i32, i32
  }
  func.func @transform_2(%arg0: i32, %arg1: i32) -> (i32, i32) {
    %c0_i32 = arith.constant 0 : i32
    %c0_i32_0 = arith.constant 0 : i32
    %c0_i32_1 = arith.constant 0 : i32
    return %c0_i32, %c0_i32_0 : i32, i32
  }
  func.func @transform_3(%arg0: i32, %arg1: i32) -> (i32, i32) {
    %c0_i32 = arith.constant 0 : i32
    %c0_i32_0 = arith.constant 0 : i32
    %c0_i32_1 = arith.constant 0 : i32
    return %c0_i32, %c0_i32_0 : i32, i32
  }
  func.func @transform_4(%arg0: i32, %arg1: i32) -> (i32, i32) {
    %c0_i32 = arith.constant 0 : i32
    %c0_i32_0 = arith.constant 0 : i32
    %c0_i32_1 = arith.constant 0 : i32
    return %c0_i32, %c0_i32_0 : i32, i32
  }
  func.func @transform_5(%arg0: i32, %arg1: i32) -> (i32, i32, i32) {
    %c0_i32 = arith.constant 0 : i32
    %c0_i32_0 = arith.constant 0 : i32
    return %arg0, %arg1, %c0_i32 : i32, i32, i32
  }
}

module attributes {stable_mosaic.version = 11 : i64} {
  func.func @kernel(%arg0: i32, %arg1: i32, %arg2: memref<1x16x8xf32, #tpu.memory_space<vmem>>, %arg3: memref<1x8x8xf32, #tpu.memory_space<vmem>>, %arg4: memref<1x16x8xf32, #tpu.memory_space<vmem>>, %arg5: memref<1x8x8xf32, #tpu.memory_space<vmem>>, %arg6: memref<48x16xbf16, #tpu.memory_space<vmem>>, %arg7: memref<1x16xf32, #tpu.memory_space<vmem>>, %arg8: memref<1x16x8xf32, #tpu.memory_space<vmem>>) attributes {dimension_semantics = [#tpu.dimension_semantics<parallel>, #tpu.dimension_semantics<parallel>], iteration_bounds = array<i64: 2, 1>, scalar_prefetch = 0 : i64, scratch_operands = 0 : i64, tpu.core_type = #tpu.core_type<tc>, window_params = [{transform_indices = @transform_0, window_bounds = array<i64: 1, 16, 8>}, {transform_indices = @transform_1, window_bounds = array<i64: 1, 8, 8>}, {transform_indices = @transform_2, window_bounds = array<i64: 1, 16, 8>}, {transform_indices = @transform_3, window_bounds = array<i64: 1, 8, 8>}, {pipeline_mode = #tpu.pipeline_mode<synchronous>, transform_indices = @transform_4, window_bounds = array<i64: 48, 16>}, {pipeline_mode = #tpu.pipeline_mode<synchronous>, transform_indices = @transform_5, window_bounds = array<i64: 1, 16>}, {transform_indices = @transform_6, window_bounds = array<i64: 1, 16, 8>}]} {
    %c0 = arith.constant 0 : index
    %c0_0 = arith.constant 0 : index
    %c0_1 = arith.constant 0 : index
    %0 = vector.load %arg2[%c0, %c0_0, %c0_1] : memref<1x16x8xf32, #tpu.memory_space<vmem>>, vector<1x16x8xf32>
    %1 = vector.shape_cast %0 : vector<1x16x8xf32> to vector<16x8xf32>
    %c0_2 = arith.constant 0 : index
    %c0_3 = arith.constant 0 : index
    %c0_4 = arith.constant 0 : index
    %2 = vector.load %arg3[%c0_2, %c0_3, %c0_4] : memref<1x8x8xf32, #tpu.memory_space<vmem>>, vector<1x8x8xf32>
    %3 = vector.shape_cast %2 : vector<1x8x8xf32> to vector<8x8xf32>
    %4 = tpu.concatenate %1, %3 in 0 : vector<16x8xf32>, vector<8x8xf32> -> vector<24x8xf32>
    %c0_5 = arith.constant 0 : index
    %c0_6 = arith.constant 0 : index
    %c0_7 = arith.constant 0 : index
    %5 = vector.load %arg4[%c0_5, %c0_6, %c0_7] : memref<1x16x8xf32, #tpu.memory_space<vmem>>, vector<1x16x8xf32>
    %6 = vector.shape_cast %5 : vector<1x16x8xf32> to vector<16x8xf32>
    %c0_8 = arith.constant 0 : index
    %c0_9 = arith.constant 0 : index
    %c0_10 = arith.constant 0 : index
    %7 = vector.load %arg5[%c0_8, %c0_9, %c0_10] : memref<1x8x8xf32, #tpu.memory_space<vmem>>, vector<1x8x8xf32>
    %8 = vector.shape_cast %7 : vector<1x8x8xf32> to vector<8x8xf32>
    %9 = tpu.concatenate %6, %8 in 0 : vector<16x8xf32>, vector<8x8xf32> -> vector<24x8xf32>
    %10 = tpu.concatenate %4, %9 in 1 : vector<24x8xf32>, vector<24x8xf32> -> vector<24x16xf32>
    %11 = vector.extract_strided_slice %10 {offsets = [0, 0], sizes = [16, 16], strides = [1, 1]} : vector<24x16xf32> to vector<16x16xf32>
    %12 = vector.extract_strided_slice %10 {offsets = [1, 0], sizes = [16, 16], strides = [1, 1]} : vector<24x16xf32> to vector<16x16xf32>
    %13 = vector.extract_strided_slice %10 {offsets = [2, 0], sizes = [16, 16], strides = [1, 1]} : vector<24x16xf32> to vector<16x16xf32>
    %14 = tpu.concatenate %11, %12, %13 in 1 : vector<16x16xf32>, vector<16x16xf32>, vector<16x16xf32> -> vector<16x48xf32>
    %15 = arith.truncf %14 : vector<16x48xf32> to vector<16x48xbf16>
    %c0_11 = arith.constant 0 : index
    %c0_12 = arith.constant 0 : index
    %16 = vector.load %arg6[%c0_11, %c0_12] : memref<48x16xbf16, #tpu.memory_space<vmem>>, vector<48x16xbf16>
    %cst = arith.constant dense<0.000000e+00> : vector<16x16xf32>
    %17 = tpu.matmul %15, %16, %cst {dimension_numbers = #tpu.dot_dimension_numbers<[1], [0], [0], [1], [0, 0, 1, 1], [], []>} : vector<16x48xbf16>, vector<48x16xbf16>, vector<16x16xf32> -> vector<16x16xf32>
    %c0_13 = arith.constant 0 : index
    %c0_14 = arith.constant 0 : index
    %18 = vector.load %arg7[%c0_13, %c0_14] : memref<1x16xf32, #tpu.memory_space<vmem>>, vector<1x16xf32>
    %19 = vector.broadcast %18 : vector<1x16xf32> to vector<16x16xf32>
    %20 = arith.addf %17, %19 : vector<16x16xf32>
    %21 = vector.extract_strided_slice %4 {offsets = [2, 0], sizes = [16, 8], strides = [1, 1]} : vector<24x8xf32> to vector<16x8xf32>
    %22 = vector.extract_strided_slice %20 {offsets = [0, 0], sizes = [16, 8], strides = [1, 1]} : vector<16x16xf32> to vector<16x8xf32>
    %23 = math.tanh %22 : vector<16x8xf32>
    %24 = vector.extract_strided_slice %20 {offsets = [0, 8], sizes = [16, 8], strides = [1, 1]} : vector<16x16xf32> to vector<16x8xf32>
    %25 = arith.negf %24 : vector<16x8xf32>
    %26 = math.exp %25 : vector<16x8xf32>
    %cst_15 = arith.constant 1.000000e+00 : f32
    %27 = vector.broadcast %cst_15 : f32 to vector<16x8xf32>
    %28 = arith.addf %27, %26 : vector<16x8xf32>
    %29 = arith.divf %27, %28 : vector<16x8xf32>
    %30 = arith.mulf %23, %29 : vector<16x8xf32>
    %31 = arith.addf %21, %30 : vector<16x8xf32>
    %c0_16 = arith.constant 0 : index
    %c0_17 = arith.constant 0 : index
    %c0_18 = arith.constant 0 : index
    %32 = vector.load %arg8[%c0_16, %c0_17, %c0_18] : memref<1x16x8xf32, #tpu.memory_space<vmem>>, vector<1x16x8xf32>
    %33 = vector.shape_cast %32 : vector<1x16x8xf32> to vector<16x8xf32>
    %34 = vector.shape_cast %31 : vector<16x8xf32> to vector<1x16x8xf32>
    tpu.vector_store %arg8[%c0_16, %c0_17, %c0_18], %34 {strides = array<i32>} : memref<1x16x8xf32, #tpu.memory_space<vmem>>, vector<1x16x8xf32>,
    return
  }
  func.func @transform_0(%arg0: i32, %arg1: i32) -> (i32, i32, i32) {
    %c0_i32 = arith.constant 0 : i32
    %c0_i32_0 = arith.constant 0 : i32
    return %arg0, %arg1, %c0_i32 : i32, i32, i32
  }
  func.func @transform_1(%arg0: i32, %arg1: i32) -> (i32, i32, i32) {
    %c1_i32 = arith.constant 1 : i32
    %0 = arith.addi %arg1, %c1_i32 : i32
    %c2_i32 = arith.constant 2 : i32
    %1 = arith.muli %0, %c2_i32 : i32
    %c0_i32 = arith.constant 0 : i32
    %c0_i32_0 = arith.constant 0 : i32
    return %arg0, %1, %c0_i32 : i32, i32, i32
  }
  func.func @transform_2(%arg0: i32, %arg1: i32) -> (i32, i32, i32) {
    %c0_i32 = arith.constant 0 : i32
    %c0_i32_0 = arith.constant 0 : i32
    return %arg0, %arg1, %c0_i32 : i32, i32, i32
  }
  func.func @transform_3(%arg0: i32, %arg1: i32) -> (i32, i32, i32) {
    %c1_i32 = arith.constant 1 : i32
    %0 = arith.addi %arg1, %c1_i32 : i32
    %c2_i32 = arith.constant 2 : i32
    %1 = arith.muli %0, %c2_i32 : i32
    %c0_i32 = arith.constant 0 : i32
    %c0_i32_0 = arith.constant 0 : i32
    return %arg0, %1, %c0_i32 : i32, i32, i32
  }
  func.func @transform_4(%arg0: i32, %arg1: i32) -> (i32, i32) {
    %c0_i32 = arith.constant 0 : i32
    %c0_i32_0 = arith.constant 0 : i32
    %c0_i32_1 = arith.constant 0 : i32
    return %c0_i32, %c0_i32_0 : i32, i32
  }
  func.func @transform_5(%arg0: i32, %arg1: i32) -> (i32, i32) {
    %c0_i32 = arith.constant 0 : i32
    %c0_i32_0 = arith.constant 0 : i32
    %c0_i32_1 = arith.constant 0 : i32
    return %c0_i32, %c0_i32_0 : i32, i32
  }
  func.func @transform_6(%arg0: i32, %arg1: i32) -> (i32, i32, i32) {
    %c0_i32 = arith.constant 0 : i32
    %c0_i32_0 = arith.constant 0 : i32
    return %arg0, %arg1, %c0_i32 : i32, i32, i32
  }
}

module attributes {stable_mosaic.version = 11 : i64} {
  func.func @kernel(%arg0: i32, %arg1: i32, %arg2: memref<1x16x8xf32, #tpu.memory_space<vmem>>, %arg3: memref<8x4xbf16, #tpu.memory_space<vmem>>, %arg4: memref<1x4xf32, #tpu.memory_space<vmem>>, %arg5: memref<1x16x4xf32, #tpu.memory_space<vmem>>) attributes {dimension_semantics = [#tpu.dimension_semantics<parallel>, #tpu.dimension_semantics<parallel>], iteration_bounds = array<i64: 2, 1>, scalar_prefetch = 0 : i64, scratch_operands = 0 : i64, tpu.core_type = #tpu.core_type<tc>, window_params = [{transform_indices = @transform_0, window_bounds = array<i64: 1, 16, 8>}, {pipeline_mode = #tpu.pipeline_mode<synchronous>, transform_indices = @transform_1, window_bounds = array<i64: 8, 4>}, {pipeline_mode = #tpu.pipeline_mode<synchronous>, transform_indices = @transform_2, window_bounds = array<i64: 1, 4>}, {transform_indices = @transform_3, window_bounds = array<i64: 1, 16, 4>}]} {
    %c0 = arith.constant 0 : index
    %c0_0 = arith.constant 0 : index
    %c0_1 = arith.constant 0 : index
    %0 = vector.load %arg2[%c0, %c0_0, %c0_1] : memref<1x16x8xf32, #tpu.memory_space<vmem>>, vector<1x16x8xf32>
    %1 = vector.shape_cast %0 : vector<1x16x8xf32> to vector<16x8xf32>
    %cst = arith.constant 0.000000e+00 : f32
    %2 = vector.broadcast %cst : f32 to vector<16x8xf32>
    %3 = arith.maximumf %1, %2 : vector<16x8xf32>
    %4 = arith.truncf %3 : vector<16x8xf32> to vector<16x8xbf16>
    %c0_2 = arith.constant 0 : index
    %c0_3 = arith.constant 0 : index
    %5 = vector.load %arg3[%c0_2, %c0_3] : memref<8x4xbf16, #tpu.memory_space<vmem>>, vector<8x4xbf16>
    %cst_4 = arith.constant dense<0.000000e+00> : vector<16x4xf32>
    %6 = tpu.matmul %4, %5, %cst_4 {dimension_numbers = #tpu.dot_dimension_numbers<[1], [0], [0], [1], [0, 0, 1, 1], [], []>} : vector<16x8xbf16>, vector<8x4xbf16>, vector<16x4xf32> -> vector<16x4xf32>
    %c0_5 = arith.constant 0 : index
    %c0_6 = arith.constant 0 : index
    %7 = vector.load %arg4[%c0_5, %c0_6] : memref<1x4xf32, #tpu.memory_space<vmem>>, vector<1x4xf32>
    %8 = vector.broadcast %7 : vector<1x4xf32> to vector<16x4xf32>
    %9 = arith.addf %6, %8 : vector<16x4xf32>
    %c0_7 = arith.constant 0 : index
    %c0_8 = arith.constant 0 : index
    %c0_9 = arith.constant 0 : index
    %10 = vector.load %arg5[%c0_7, %c0_8, %c0_9] : memref<1x16x4xf32, #tpu.memory_space<vmem>>, vector<1x16x4xf32>
    %11 = vector.shape_cast %10 : vector<1x16x4xf32> to vector<16x4xf32>
    %12 = vector.shape_cast %9 : vector<16x4xf32> to vector<1x16x4xf32>
    tpu.vector_store %arg5[%c0_7, %c0_8, %c0_9], %12 {strides = array<i32>} : memref<1x16x4xf32, #tpu.memory_space<vmem>>, vector<1x16x4xf32>,
    return
  }
  func.func @transform_0(%arg0: i32, %arg1: i32) -> (i32, i32, i32) {
    %c0_i32 = arith.constant 0 : i32
    %c0_i32_0 = arith.constant 0 : i32
    return %arg0, %arg1, %c0_i32 : i32, i32, i32
  }
  func.func @transform_1(%arg0: i32, %arg1: i32) -> (i32, i32) {
    %c0_i32 = arith.constant 0 : i32
    %c0_i32_0 = arith.constant 0 : i32
    %c0_i32_1 = arith.constant 0 : i32
    return %c0_i32, %c0_i32_0 : i32, i32
  }
  func.func @transform_2(%arg0: i32, %arg1: i32) -> (i32, i32) {
    %c0_i32 = arith.constant 0 : i32
    %c0_i32_0 = arith.constant 0 : i32
    %c0_i32_1 = arith.constant 0 : i32
    return %c0_i32, %c0_i32_0 : i32, i32
  }
  func.func @transform_3(%arg0: i32, %arg1: i32) -> (i32, i32, i32) {
    %c0_i32 = arith.constant 0 : i32
    %c0_i32_0 = arith.constant 0 : i32
    return %arg0, %arg1, %c0_i32 : i32, i32, i32
  }
}

</mosaic_0001>

<llo_original>
// kernel: _lambda_.7
$region0: #{_lambda_.7}
  #allocation0 [shape = 'u32[]', space=smem, size = 0x4, offset = 0x4, fixed_abs, tag = 'smem constant byte address 0x4 - core index']
  #allocation1 [shape = 'u32[144,128]{1,0:T(1,128)}', space=vmem, size = 0x12000, scoped, tag = 'internal scratch']
  %s0 = inlined_call_operand.vmem [shape: f32[2,40,4], index: 0, kind: input, shape index: {}, may-alias: {0,1}]
  %s1 = inlined_call_operand.vmem [shape: f32[2,40,4], index: 1, kind: input, shape index: {}, may-alias: {0,1}]
  %s2 = inlined_call_operand.hbm [shape: bf16[12,8], index: 2, kind: input, shape index: {}]
  %s3 = inlined_call_operand.hbm [shape: f32[1,8], index: 3, kind: input, shape index: {}]
  %s4 = inlined_call_operand.vmem [shape: f32[2,2144,8], index: 4, kind: output, shape index: {}]
  %s5 = sld [smem:[#allocation0]]
  $region57: #{_lambda_.7} parent=0
    _
  %s7 = ssub.s32 1, %s5
  %s8 = scalar_select 0, %s7, %s5
  $region1: #{_lambda_.7} parent=0
    #allocation2 [shape = 'u8[4096]{0}', space=vmem, size = 0x1000, scoped, tag = 'input window, operand 2, single buffered']
    #allocation3 [shape = 's32[2]{0}', space=sflag, size = 0x8, scoped, tag = 'scoped memory for _lambda_.7']
    #allocation4 [shape = 'u8[512]{0}', space=vmem, size = 0x400, scoped, tag = 'input window, operand 3, single buffered']
    #allocation5 [shape = 's32[1]{0}', space=sflag, size = 0x4, scoped, tag = 'scoped memory for _lambda_.7']
    %9 = vsyncpa [#allocation3], 0
    %10 = vsyncpa [#allocation5], 0
    loop: start=0, step=1, limit=4
    $region2: #{_lambda_.7} parent=1 // loop_pre_header
      _
    $region3: #{_lambda_.7} parent=1 // loop_header
      %s12 = sphi 0, %s16
      %p13 = scmp.ge.s32.totalorder %s12, 4
      %s19 = sphi 0, %s31
      %s20 = sphi 0, %s27
      %s21 = sphi 0, %s19
      %s22 = sphi 0, %s20
      %s23 = sphi 0, %s21
      %s24 = sphi 0, %s22
      %s36 = sphi 0, %s38
      %s39 = sphi 0, %s36
      %s40 = sphi 0, %s39
      %s56 = sphi 0, %s40
      %s68 = sphi 0, %s70
      %s71 = sphi 0, %s68
      %s72 = sphi 0, %s71
      %s88 = sphi 0, %s72
      %s92 = sphi 0, %s92
      %s94 = sphi 0, %s92
      %s95 = sphi 0, %s94
      %s109 = sphi 0, %s95
      %s113 = sphi 0, %s113
      %s115 = sphi 0, %s113
      %s116 = sphi 0, %s115
      %s130 = sphi 0, %s116
      %s138 = sphi 0, %s140
      %s141 = sphi 0, %s138
      %s142 = sphi 0, %s141
      %s158 = sphi 0, %s142
    $region4: #{_lambda_.7} parent=1 // loop_header_branch
      %15 = sbr.rel (%p13) target = $region8
    $region5: #{_lambda_.7} parent=1 // loop_body
      %s17 = ssub.s32 %s12, 1
      %s18 = ssub.s32 %s12, 2
      %s25 = sadd.s32 1, %s20
      %p26 = scmp.ge.s32.totalorder %s25, 1
      %s27 = scalar_select %p26, 0, %s25
      %s28 = sadd.s32 1, %s19
      %s29 = scalar_select %p26, %s28, %s19
      %p30 = scmp.ge.s32.totalorder %s29, 2
      %s31 = scalar_select %p30, 0, %s29
      %s32 = ssub.s32 %s19, %s31
      %s33 = ssub.s32 %s20, %s27
      %s34 = sor.u32 %s32, %s33
      %p35 = scmp.eq.s32.totalorder %s34, 0
      %s37 = sadd.s32 %s36, 1
      %s38 = scalar_select %p35, %s36, %s37
      %p41 = pneg %p35
      %p42 = scmp.eq.s32.totalorder %s12, 1
      %p43 = por %p41, %p42
      %p44 = scmp.ne.s32.totalorder %s36, %s39
      %p45 = scmp.eq.s32.totalorder %s12, 0
      %p46 = por %p44, %p45
      %p47 = scmp.ne.s32.totalorder %s36, %s39
      %p48 = scmp.eq.s32.totalorder %s17, 1
      %p49 = por %p47, %p48
      %p50 = scmp.ne.s32.totalorder %s39, %s40
      %p51 = scmp.eq.s32.totalorder %s17, 0
      %p52 = por %p50, %p51
      %p53 = scmp.ne.s32.totalorder %s39, %s40
      %p54 = scmp.eq.s32.totalorder %s18, 1
      %p55 = por %p53, %p54
      %p57 = scmp.ne.s32.totalorder %s40, %s56
      %p58 = scmp.eq.s32.totalorder %s18, 0
      %p59 = por %p57, %p58
      %s60 = sadd.s32 %s20, 1
      %s61 = smul.u32 %s60, 4
      %s62 = sadd.s32 %s27, 1
      %s63 = smul.u32 %s62, 4
      %s64 = ssub.s32 %s19, %s31
      %s65 = ssub.s32 %s61, %s63
      %s66 = sor.u32 %s64, %s65
      %p67 = scmp.eq.s32.totalorder %s66, 0
      %s69 = sadd.s32 %s68, 1
      %s70 = scalar_select %p67, %s68, %s69
      %p73 = pneg %p67
      %p74 = scmp.eq.s32.totalorder %s12, 1
      %p75 = por %p73, %p74
      %p76 = scmp.ne.s32.totalorder %s68, %s71
      %p77 = scmp.eq.s32.totalorder %s12, 0
      %p78 = por %p76, %p77
      %p79 = scmp.ne.s32.totalorder %s68, %s71
      %p80 = scmp.eq.s32.totalorder %s17, 1
      %p81 = por %p79, %p80
      %p82 = scmp.ne.s32.totalorder %s71, %s72
      %p83 = scmp.eq.s32.totalorder %s17, 0
      %p84 = por %p82, %p83
      %p85 = scmp.ne.s32.totalorder %s71, %s72
      %p86 = scmp.eq.s32.totalorder %s18, 1
      %p87 = por %p85, %p86
      %p89 = scmp.ne.s32.totalorder %s72, %s88
      %p90 = scmp.eq.s32.totalorder %s18, 0
      %p91 = por %p89, %p90
      %s93 = sadd.s32 %s92, 1
      %p96 = scmp.eq.s32.totalorder %s12, 1
      %p97 = scmp.ne.s32.totalorder %s92, %s94
      %p98 = scmp.eq.s32.totalorder %s12, 0
      %p99 = por %p97, %p98
      %p100 = scmp.ne.s32.totalorder %s92, %s94
      %p101 = scmp.eq.s32.totalorder %s17, 1
      %p102 = por %p100, %p101
      %p103 = scmp.ne.s32.totalorder %s94, %s95
      %p104 = scmp.eq.s32.totalorder %s17, 0
      %p105 = por %p103, %p104
      %p106 = scmp.ne.s32.totalorder %s94, %s95
      %p107 = scmp.eq.s32.totalorder %s18, 1
      %p108 = por %p106, %p107
      %p110 = scmp.ne.s32.totalorder %s95, %s109
      %p111 = scmp.eq.s32.totalorder %s18, 0
      %p112 = por %p110, %p111
      %s114 = sadd.s32 %s113, 1
      %p117 = scmp.eq.s32.totalorder %s12, 1
      %p118 = scmp.ne.s32.totalorder %s113, %s115
      %p119 = scmp.eq.s32.totalorder %s12, 0
      %p120 = por %p118, %p119
      %p121 = scmp.ne.s32.totalorder %s113, %s115
      %p122 = scmp.eq.s32.totalorder %s17, 1
      %p123 = por %p121, %p122
      %p124 = scmp.ne.s32.totalorder %s115, %s116
      %p125 = scmp.eq.s32.totalorder %s17, 0
      %p126 = por %p124, %p125
      %p127 = scmp.ne.s32.totalorder %s115, %s116
      %p128 = scmp.eq.s32.totalorder %s18, 1
      %p129 = por %p127, %p128
      %p131 = scmp.ne.s32.totalorder %s116, %s130
      %p132 = scmp.eq.s32.totalorder %s18, 0
      %p133 = por %p131, %p132
      %s134 = ssub.s32 %s19, %s31
      %s135 = ssub.s32 %s20, %s27
      %s136 = sor.u32 %s134, %s135
      %p137 = scmp.eq.s32.totalorder %s136, 0
      %s139 = sadd.s32 %s138, 1
      %s140 = scalar_select %p137, %s138, %s139
      %p143 = pneg %p137
      %p144 = scmp.eq.s32.totalorder %s12, 1
      %p145 = por %p143, %p144
      %p146 = scmp.ne.s32.totalorder %s138, %s141
      %p147 = scmp.eq.s32.totalorder %s12, 0
      %p148 = por %p146, %p147
      %p149 = scmp.ne.s32.totalorder %s138, %s141
      %p150 = scmp.eq.s32.totalorder %s17, 1
      %p151 = por %p149, %p150
      %p152 = scmp.ne.s32.totalorder %s141, %s142
      %p153 = scmp.eq.s32.totalorder %s17, 0
      %p154 = por %p152, %p153
      %p155 = scmp.ne.s32.totalorder %s141, %s142
      %p156 = scmp.eq.s32.totalorder %s18, 1
      %p157 = por %p155, %p156
      %p159 = scmp.ne.s32.totalorder %s142, %s158
      %p160 = scmp.eq.s32.totalorder %s18, 0
      %p161 = por %p159, %p160
      %p162 = scmp.le.s32.totalorder 1, %s12
      %p163 = scmp.lt.s32.totalorder %s12, 3
      %p164 = pnand %p162, %p163
      %p165 = pneg %p164
      // Predicated region
      $region9: #{_lambda_.7} parent=5 // pred_check
        _
      $region10: #{_lambda_.7} parent=5 // pred_check_branch
        %167 = sbr.rel (%p164) target = $region12
      $region11: #{_lambda_.7} parent=5 // pred_region
        %s168 = ssub.s32 %s12, 1
        // Predicated region
        $region13: #{_lambda_.7} parent=11 // pred_check
          %p169 = pneg %p105
        $region14: #{_lambda_.7} parent=11 // pred_check_branch
          %171 = sbr.rel (%p169) target = $region16
        $region15: #{_lambda_.7} parent=11 // pred_region
          %s173 = ssub.s32 128, 128
          %174 = vsyncadd [#allocation3], %s173
          %s175 = sshll.u32 [#allocation2], 4
          %s176 = int_to_ptr.vmem [resolvable:$true] %s175
          %181 = dma.hbm_to_vmem [thread:$0]  %s2, 128, %s176, [#allocation3], 64, 64, 4
        $region16: #{_lambda_.7} parent=11 // pred_fallthru
          _
        // Predicated region
        $region17: #{_lambda_.7} parent=11 // pred_check
          %p182 = pneg %p126
        $region18: #{_lambda_.7} parent=11 // pred_check_branch
          %184 = sbr.rel (%p182) target = $region20
        $region19: #{_lambda_.7} parent=11 // pred_region
          %s186 = ssub.s32 16, 16
          %187 = vsyncadd [#allocation5], %s186
          %s189 = sshll.u32 [#allocation4], 4
          %s190 = int_to_ptr.vmem [resolvable:$true] %s189
          %192 = dma.hbm_to_vmem [thread:$0]  %s3, 16, %s190, [#allocation5]
        $region20: #{_lambda_.7} parent=11 // pred_fallthru
          _
      $region12: #{_lambda_.7} parent=5 // pred_fallthru
        _
      %p193 = scmp.lt.s32.totalorder %s12, 2
      // Predicated region
      $region21: #{_lambda_.7} parent=5 // pred_check
        %p194 = pneg %p193
      $region22: #{_lambda_.7} parent=5 // pred_check_branch
        %196 = sbr.rel (%p194) target = $region24
      $region23: #{_lambda_.7} parent=5 // pred_region
        // Predicated region
        $region25: #{_lambda_.7} parent=23 // pred_check
          %p197 = pneg %p46
        $region26: #{_lambda_.7} parent=23 // pred_check_branch
          %199 = sbr.rel (%p197) target = $region28
        $region27: #{_lambda_.7} parent=23 // pred_region
          %s200 = smul.u32 4, %s20
          %s201 = ssub.s32 5, %s200
          %p202 = scmp.lt.s32.totalorder %s201, 4
          %s203 = scalar_select %p202, %s201, 4
          %s204 = smul.u32 128, %s203
          %p205 = scmp.lt.s32.totalorder %s19, 1
          %s206 = scalar_select %p205, %s19, 1
          %p207 = scmp.lt.s32.totalorder %s200, 4
          %s208 = scalar_select %p207, %s200, 4
          %s209 = smul.addr %s206, 5
          %s210 = sadd.s32 %s208, %s209
          %s211 = smul.addr %s210, 8
          %s212 = scalar_lea.vmem %s0, %s211
          %s213 = smul.u32 4, %s20
          %s214 = ssub.s32 5, %s213
          %p215 = scmp.lt.s32.totalorder %s214, 4
          %s216 = scalar_select %p215, %s214, 4
          %s217 = smul.u32 128, %s216
        $region28: #{_lambda_.7} parent=23 // pred_fallthru
          _
        // Predicated region
        $region29: #{_lambda_.7} parent=23 // pred_check
          %p218 = pneg %p78
        $region30: #{_lambda_.7} parent=23 // pred_check_branch
          %220 = sbr.rel (%p218) target = $region32
        $region31: #{_lambda_.7} parent=23 // pred_region
          %s221 = sadd.s32 %s20, 1
          %s222 = smul.u32 %s221, 4
          %p223 = scmp.lt.s32.totalorder %s19, 1
          %s224 = scalar_select %p223, %s19, 1
          %p225 = scmp.lt.s32.totalorder %s222, 4
          %s226 = scalar_select %p225, %s222, 4
          %s227 = smul.addr %s224, 5
          %s228 = sadd.s32 %s226, %s227
          %s229 = smul.addr %s228, 8
          %s230 = scalar_lea.vmem %s1, %s229
          %s231 = sadd.s32 %s20, 1
          %s232 = smul.u32 %s231, 4
        $region32: #{_lambda_.7} parent=23 // pred_fallthru
          _
      $region24: #{_lambda_.7} parent=5 // pred_fallthru
        _
      %p233 = scmp.le.s32.totalorder 1, %s12
      %p234 = scmp.lt.s32.totalorder %s12, 3
      %p235 = pnand %p233, %p234
      %p236 = pneg %p235
      // Predicated region
      $region33: #{_lambda_.7} parent=5 // pred_check
        _
      $region34: #{_lambda_.7} parent=5 // pred_check_branch
        %238 = sbr.rel (%p235) target = $region36
      $region35: #{_lambda_.7} parent=5 // pred_region
        %s239 = ssub.s32 %s12, 1
        // Predicated region
        $region37: #{_lambda_.7} parent=35 // pred_check
          %p240 = pneg %p105
        $region38: #{_lambda_.7} parent=35 // pred_check_branch
          %242 = sbr.rel (%p240) target = $region40
        $region39: #{_lambda_.7} parent=35 // pred_region
          %243 = dma.done [#allocation3], 128
        $region40: #{_lambda_.7} parent=35 // pred_fallthru
          _
        // Predicated region
        $region41: #{_lambda_.7} parent=35 // pred_check
          %p244 = pneg %p126
        $region42: #{_lambda_.7} parent=35 // pred_check_branch
          %246 = sbr.rel (%p244) target = $region44
        $region43: #{_lambda_.7} parent=35 // pred_region
          %247 = dma.done [#allocation5], 16
        $region44: #{_lambda_.7} parent=35 // pred_fallthru
          _
        %s248 = smul.u32 4, %s22
        %s249 = ssub.s32 5, %s248
        %p250 = scmp.lt.s32.totalorder %s249, 4
        %s251 = scalar_select %p250, %s249, 4
        %s252 = smul.u32 128, %s251
        %p253 = scmp.lt.s32.totalorder %s21, 1
        %s254 = scalar_select %p253, %s21, 1
        %p255 = scmp.lt.s32.totalorder %s248, 4
        %s256 = scalar_select %p255, %s248, 4
        %s257 = smul.addr %s254, 5
        %s258 = sadd.s32 %s256, %s257
        %s259 = smul.addr %s258, 8
        %s260 = scalar_lea.vmem %s0, %s259
        %p261 = pneg %p52
        %p262 = pneg %p49
        %s263 = sadd.s32 %s22, 1
        %s264 = smul.u32 %s263, 4
        %p265 = scmp.lt.s32.totalorder %s21, 1
        %s266 = scalar_select %p265, %s21, 1
        %p267 = scmp.lt.s32.totalorder %s264, 4
        %s268 = scalar_select %p267, %s264, 4
        %s269 = smul.addr %s266, 5
        %s270 = sadd.s32 %s268, %s269
        %s271 = smul.addr %s270, 8
        %s272 = scalar_lea.vmem %s1, %s271
        %p273 = pneg %p84
        %p274 = pneg %p81
        %p275 = pneg %p105
        %p276 = pneg %p102
        %p277 = pneg %p126
        %p278 = pneg %p123
        %p279 = pneg %p154
        %p280 = pneg %p151
        %s281 = smul.u32 4, %s22
        %p282 = scmp.lt.s32.totalorder %s21, 1
        %s283 = scalar_select %p282, %s21, 1
        %p284 = scmp.lt.s32.totalorder %s281, 267
        %s285 = scalar_select %p284, %s281, 267
        %s286 = smul.addr %s283, 268
        %s287 = sadd.s32 %s285, %s286
        %s288 = smul.addr %s287, 8
        %s289 = scalar_lea.vmem %s4, %s288
        %s290 = smul.u32 4, %s22
        %s291 = ssub.s32 5, %s290
        %p292 = scmp.lt.s32.totalorder %s291, 4
        %s293 = scalar_select %p292, %s291, 4
        %s294 = smul.u32 128, %s293
        %p295 = scmp.lt.s32.totalorder %s21, 1
        %s296 = scalar_select %p295, %s21, 1
        %p297 = scmp.lt.s32.totalorder %s290, 4
        %s298 = scalar_select %p297, %s290, 4
        %s299 = smul.addr %s296, 5
        %s300 = sadd.s32 %s298, %s299
        %s301 = smul.addr %s300, 8
        %s302 = scalar_lea.vmem %s0, %s301
        %s303 = smul.u32 4, %s22
        %s304 = ssub.s32 5, %s303
        %p305 = scmp.lt.s32.totalorder %s304, 4
        %s306 = scalar_select %p305, %s304, 4
        %s307 = smul.u32 128, %s306
        %s308 = sadd.s32 %s22, 1
        %s309 = smul.u32 %s308, 4
        %p310 = scmp.lt.s32.totalorder %s21, 1
        %s311 = scalar_select %p310, %s21, 1
        %p312 = scmp.lt.s32.totalorder %s309, 4
        %s313 = scalar_select %p312, %s309, 4
        %s314 = smul.addr %s311, 5
        %s315 = sadd.s32 %s313, %s314
        %s316 = smul.addr %s315, 8
        %s317 = scalar_lea.vmem %s1, %s316
        %s318 = sadd.s32 %s22, 1
        %s319 = smul.u32 %s318, 4
        %s320 = smul.u32 4, %s22
        %p321 = scmp.lt.s32.totalorder %s21, 1
        %s322 = scalar_select %p321, %s21, 1
        %p323 = scmp.lt.s32.totalorder %s320, 267
        %s324 = scalar_select %p323, %s320, 267
        %s325 = smul.addr %s322, 268
        %s326 = sadd.s32 %s324, %s325
        %s327 = smul.addr %s326, 8
        %s328 = scalar_lea.vmem %s4, %s327
        %s329 = smul.u32 4, %s22
        %v331 = vld [vmem:[%s302] sm:$0xff]
        %v332 = vld [vmem:[%s302 + $0x8] sm:$0xff]
        %v333 = vld [vmem:[%s302 + $0x10] sm:$0xff]
        %v334 = vld [vmem:[%s302 + $0x18] sm:$0xff]
        %v335 = vld [vmem:[%s317] sm:$0xff]
        %v336 = vpack.c.bf16 %v332, %v331
        %v337 = vpack.c.bf16 %v334, %v333
        %v338 = vpack.c.bf16 %v335, %v335
        %vm339 = vsmask.f32 7424
        %v341 = vshrl.u32 %v336, 16
        %v343 = vshll.u32 %v336, 16
        %v345 = vrot.slane %v343, 1
        %v346 = vor.u32 %v341, %v345
        %v348 = vshll.u32 %v337, 16
        %v350 = vrot.slane %v348, 1
        %v351 = vsel %vm339, %v346, %v350
        %v352 = vshrl.u32 %v337, 16
        %v354 = vor.u32 %v352, %v350
        %v356 = vshll.u32 %v338, 16
        %v358 = vrot.slane %v356, 1
        %v359 = vsel %vm339, %v354, %v358
        %360 = vrot.lane.b32.xlu0 %v351, 4
        %v361 = vpop.permute.xlu0 %360
        %362 = vrot.lane.b32.xlu0 %v359, 4
        %v363 = vpop.permute.xlu0 %362
        %vm367 = vcmask 1046528
        %v368 = vrot.slane %v336, 1
        %v369 = vrot.slane %v337, 1
        %v370 = vsel %vm367, %v368, %v369
        %v371 = vrot.slane %v338, 1
        %v372 = vsel %vm367, %v369, %v371
        %373 = vrot.lane.b32.xlu0 %v370, 8
        %v374 = vpop.permute.xlu0 %373
        %375 = vrot.lane.b32.xlu0 %v372, 8
        %v376 = vpop.permute.xlu0 %375
        %vm377 = vcmask 31744
        %v379 = vsel %vm377, %v336, %v361
        %v381 = vsel %vm377, %v337, %v363
        %vm382 = vcmask 64512
        %v384 = vsel %vm382, %v379, %v374
        %v386 = vsel %vm382, %v381, %v376
        %v387 = vld [vmem:[#allocation2] sm:$0xf]
        %v388 = vld [vmem:[#allocation2 + $0x4] sm:$0x3]
        %v389 = vld [vmem:[#allocation4] sm:$0x1]
        %v391 = vlaneseq
        %v392 = vshrl.u32 %v391, 7
        %v393 = vsub.s32 0, %v392
        %v394 = vrot.slane %v389, %v393
        %v398 = vunpack.c.l.b16 %v387
        %v399 = vunpack.c.l.b16 %v388
        %v400 = vpack.c.b16 %v399, %v398
        %vm401 = vcmask 97280
        %v402 = vsel %vm401, %v384, 0
        %v404 = vsel %vm401, %v386, 0
        %vm406 = vcmask 1045504
        %v408 = vsel %vm406, %v400, 0
        %410 = vmatprep.subr.bf16.mxu0 0
        %411 = vmatpush1.bf16.msra.mxu0 %v408
        %412 = vmatprep.subr.bf16.mxu0 0
        %413 = vmatpush1.bf16.msra.mxu0 0
        %414 = vmatprep.subr.bf16.mxu0 0
        %415 = vmatpush1.bf16.msra.mxu0 0
        %416 = vmatprep.subr.bf16.mxu0 0
        %417 = vmatpush1.bf16.msra.mxu0 0
        %418 = vmatprep.subr.bf16.mxu0 0
        %419 = vmatpush1.bf16.msra.mxu0 0
        %420 = vmatprep.subr.bf16.mxu0 0
        %421 = vmatpush1.bf16.msra.mxu0 0
        %422 = vmatprep.subr.bf16.mxu0 0
        %423 = vmatpush1.bf16.msra.mxu0 0
        %424 = vmatprep.subr.bf16.mxu0 0
        %425 = vmatpush1.bf16.msra.mxu0 0
        %426 = vmatprep.subr.bf16.mxu0 0
        %427 = vmatpush1.bf16.msra.mxu0 0
        %428 = vmatprep.subr.bf16.mxu0 0
        %429 = vmatpush1.bf16.msra.mxu0 0
        %430 = vmatprep.subr.bf16.mxu0 0
        %431 = vmatpush1.bf16.msra.mxu0 0
        %432 = vmatprep.subr.bf16.mxu0 0
        %433 = vmatpush1.bf16.msra.mxu0 0
        %434 = vmatprep.subr.bf16.mxu0 0
        %435 = vmatpush1.bf16.msra.mxu0 0
        %436 = vmatprep.subr.bf16.mxu0 0
        %437 = vmatpush1.bf16.msra.mxu0 0
        %438 = vmatprep.subr.bf16.mxu0 0
        %439 = vmatpush1.bf16.msra.mxu0 0
        %440 = vmatprep.subr.bf16.mxu0 0
        %441 = vmatpush1.bf16.msra.mxu0 0
        %442 = vmatprep.mubr.bf16.mxu0 0
        %443 = vmatmul.mubr.bf16.gmra.mrb[0].mxu0 %v402
        %v444 = vpop.f32.mrb[0].mxu0
        %v445 = vadd.f32 %v394, %v444
        %v446 = vpop.f32.mrb[0].mxu0
        %v447 = vpop.f32.mrb[0].mxu0
        %v448 = vadd.f32 %v394, %v447
        %v449 = vpop.f32.mrb[0].mxu0
        %450 = vmatprep.mubr.bf16.mxu0 0
        %451 = vmatmul.mubr.bf16.gmra.mrb[0].mxu0 %v404
        %v452 = vpop.f32.mrb[0].mxu0
        %v453 = vadd.f32 %v394, %v452
        %v454 = vpop.f32.mrb[0].mxu0
        %v455 = vpop.f32.mrb[0].mxu0
        %v456 = vadd.f32 %v394, %v455
        %v457 = vpop.f32.mrb[0].mxu0
        %458 = vdwg.mxu0
        %459 = vst.msk [vmem:[%s328] sm:$0xff] %vm382, %v445
        %460 = vst.msk [vmem:[%s328 + $0x8] sm:$0xff] %vm382, %v448
        %461 = vst.msk [vmem:[%s328 + $0x10] sm:$0xff] %vm382, %v453
        %462 = vst.msk [vmem:[%s328 + $0x18] sm:$0xff] %vm382, %v456
        %s463 = smul.u32 4, %s22
        %p464 = scmp.lt.s32.totalorder %s21, 1
        %s465 = scalar_select %p464, %s21, 1
        %p466 = scmp.lt.s32.totalorder %s463, 267
        %s467 = scalar_select %p466, %s463, 267
        %s468 = smul.addr %s465, 268
        %s469 = sadd.s32 %s467, %s468
        %s470 = smul.addr %s469, 8
        %s471 = scalar_lea.vmem %s4, %s470
        // Predicated region
        $region45: #{_lambda_.7} parent=35 // pred_check
          %p472 = pneg %p151
        $region46: #{_lambda_.7} parent=35 // pred_check_branch
          %474 = sbr.rel (%p472) target = $region48
        $region47: #{_lambda_.7} parent=35 // pred_region
          %s475 = smul.u32 4, %s22
        $region48: #{_lambda_.7} parent=35 // pred_fallthru
          _
      $region36: #{_lambda_.7} parent=5 // pred_fallthru
        _
      %p476 = scmp.le.s32.totalorder 2, %s12
      // Predicated region
      $region49: #{_lambda_.7} parent=5 // pred_check
        %p477 = pneg %p476
      $region50: #{_lambda_.7} parent=5 // pred_check_branch
        %479 = sbr.rel (%p477) target = $region52
      $region51: #{_lambda_.7} parent=5 // pred_region
        %s480 = ssub.s32 %s12, 2
        // Predicated region
        $region53: #{_lambda_.7} parent=51 // pred_check
          %p481 = pneg %p157
        $region54: #{_lambda_.7} parent=51 // pred_check_branch
          %483 = sbr.rel (%p481) target = $region56
        $region55: #{_lambda_.7} parent=51 // pred_region
          %s484 = smul.u32 4, %s24
          %p485 = scmp.lt.s32.totalorder %s23, 1
          %s486 = scalar_select %p485, %s23, 1
          %p487 = scmp.lt.s32.totalorder %s484, 267
          %s488 = scalar_select %p487, %s484, 267
          %s489 = smul.addr %s486, 268
          %s490 = sadd.s32 %s488, %s489
          %s491 = smul.addr %s490, 8
          %s492 = scalar_lea.vmem %s4, %s491
        $region56: #{_lambda_.7} parent=51 // pred_fallthru
          _
      $region52: #{_lambda_.7} parent=5 // pred_fallthru
        _
    $region6: #{_lambda_.7} parent=1 // loop_footer
      %s16 = sadd.s32 1, %s12
    $region7: #{_lambda_.7} parent=1 // loop_footer_branch
      %11 = sbr.rel target = $region3
    $region8: #{_lambda_.7} parent=1 // loop_exit
      _
    %493 = vsyncpa [#allocation3], 1
    %s494 = scalar_lea.sflag [#allocation3], 1
    %495 = vsyncpa %s494, 1
    %496 = vsyncpa [#allocation5], 1

// kernel: _lambda_.8
$region0: #{_lambda_.8}
  #allocation0 [shape = 'u32[]', space=smem, size = 0x4, offset = 0x4, fixed_abs, tag = 'smem constant byte address 0x4 - core index']
  #allocation1 [shape = 'u32[144,128]{1,0:T(1,128)}', space=vmem, size = 0x12000, scoped, tag = 'internal scratch']
  %s0 = inlined_call_operand.vmem [shape: f32[2,2144,8], index: 0, kind: input, shape index: {}, may-alias: {0,1}]
  %s1 = inlined_call_operand.vmem [shape: f32[2,2144,8], index: 1, kind: input, shape index: {}, may-alias: {0,1}]
  %s2 = inlined_call_operand.vmem [shape: bf16[24,16], index: 2, kind: input, shape index: {}]
  %s3 = inlined_call_operand.vmem [shape: f32[1,16], index: 3, kind: input, shape index: {}]
  %s4 = inlined_call_operand.vmem [shape: f32[2,2144,8], index: 4, kind: output, shape index: {}]
  %s5 = sld [smem:[#allocation0]]
  $region49: #{_lambda_.8} parent=0
    _
  %s7 = ssub.s32 1, %s5
  %s8 = scalar_select 0, %s7, %s5
  loop: start=0, step=1, limit=4
  $region2: #{_lambda_.8} parent=0 // loop_pre_header
    _
  $region3: #{_lambda_.8} parent=0 // loop_header
    %s10 = sphi 0, %s14
    %p11 = scmp.ge.s32.totalorder %s10, 4
    %s17 = sphi 0, %s29
    %s18 = sphi 0, %s25
    %s19 = sphi 0, %s17
    %s20 = sphi 0, %s18
    %s21 = sphi 0, %s19
    %s22 = sphi 0, %s20
    %s34 = sphi 0, %s36
    %s37 = sphi 0, %s34
    %s38 = sphi 0, %s37
    %s54 = sphi 0, %s38
    %s66 = sphi 0, %s68
    %s69 = sphi 0, %s66
    %s70 = sphi 0, %s69
    %s86 = sphi 0, %s70
    %s90 = sphi 0, %s90
    %s92 = sphi 0, %s90
    %s93 = sphi 0, %s92
    %s107 = sphi 0, %s93
    %s111 = sphi 0, %s111
    %s113 = sphi 0, %s111
    %s114 = sphi 0, %s113
    %s128 = sphi 0, %s114
    %s136 = sphi 0, %s138
    %s139 = sphi 0, %s136
    %s140 = sphi 0, %s139
    %s156 = sphi 0, %s140
  $region4: #{_lambda_.8} parent=0 // loop_header_branch
    %13 = sbr.rel (%p11) target = $region8
  $region5: #{_lambda_.8} parent=0 // loop_body
    %s15 = ssub.s32 %s10, 1
    %s16 = ssub.s32 %s10, 2
    %s23 = sadd.s32 1, %s18
    %p24 = scmp.ge.s32.totalorder %s23, 1
    %s25 = scalar_select %p24, 0, %s23
    %s26 = sadd.s32 1, %s17
    %s27 = scalar_select %p24, %s26, %s17
    %p28 = scmp.ge.s32.totalorder %s27, 2
    %s29 = scalar_select %p28, 0, %s27
    %s30 = ssub.s32 %s17, %s29
    %s31 = ssub.s32 %s18, %s25
    %s32 = sor.u32 %s30, %s31
    %p33 = scmp.eq.s32.totalorder %s32, 0
    %s35 = sadd.s32 %s34, 1
    %s36 = scalar_select %p33, %s34, %s35
    %p39 = pneg %p33
    %p40 = scmp.eq.s32.totalorder %s10, 1
    %p41 = por %p39, %p40
    %p42 = scmp.ne.s32.totalorder %s34, %s37
    %p43 = scmp.eq.s32.totalorder %s10, 0
    %p44 = por %p42, %p43
    %p45 = scmp.ne.s32.totalorder %s34, %s37
    %p46 = scmp.eq.s32.totalorder %s15, 1
    %p47 = por %p45, %p46
    %p48 = scmp.ne.s32.totalorder %s37, %s38
    %p49 = scmp.eq.s32.totalorder %s15, 0
    %p50 = por %p48, %p49
    %p51 = scmp.ne.s32.totalorder %s37, %s38
    %p52 = scmp.eq.s32.totalorder %s16, 1
    %p53 = por %p51, %p52
    %p55 = scmp.ne.s32.totalorder %s38, %s54
    %p56 = scmp.eq.s32.totalorder %s16, 0
    %p57 = por %p55, %p56
    %s58 = sadd.s32 %s18, 1
    %s59 = smul.u32 %s58, 4
    %s60 = sadd.s32 %s25, 1
    %s61 = smul.u32 %s60, 4
    %s62 = ssub.s32 %s17, %s29
    %s63 = ssub.s32 %s59, %s61
    %s64 = sor.u32 %s62, %s63
    %p65 = scmp.eq.s32.totalorder %s64, 0
    %s67 = sadd.s32 %s66, 1
    %s68 = scalar_select %p65, %s66, %s67
    %p71 = pneg %p65
    %p72 = scmp.eq.s32.totalorder %s10, 1
    %p73 = por %p71, %p72
    %p74 = scmp.ne.s32.totalorder %s66, %s69
    %p75 = scmp.eq.s32.totalorder %s10, 0
    %p76 = por %p74, %p75
    %p77 = scmp.ne.s32.totalorder %s66, %s69
    %p78 = scmp.eq.s32.totalorder %s15, 1
    %p79 = por %p77, %p78
    %p80 = scmp.ne.s32.totalorder %s69, %s70
    %p81 = scmp.eq.s32.totalorder %s15, 0
    %p82 = por %p80, %p81
    %p83 = scmp.ne.s32.totalorder %s69, %s70
    %p84 = scmp.eq.s32.totalorder %s16, 1
    %p85 = por %p83, %p84
    %p87 = scmp.ne.s32.totalorder %s70, %s86
    %p88 = scmp.eq.s32.totalorder %s16, 0
    %p89 = por %p87, %p88
    %s91 = sadd.s32 %s90, 1
    %p94 = scmp.eq.s32.totalorder %s10, 1
    %p95 = scmp.ne.s32.totalorder %s90, %s92
    %p96 = scmp.eq.s32.totalorder %s10, 0
    %p97 = por %p95, %p96
    %p98 = scmp.ne.s32.totalorder %s90, %s92
    %p99 = scmp.eq.s32.totalorder %s15, 1
    %p100 = por %p98, %p99
    %p101 = scmp.ne.s32.totalorder %s92, %s93
    %p102 = scmp.eq.s32.totalorder %s15, 0
    %p103 = por %p101, %p102
    %p104 = scmp.ne.s32.totalorder %s92, %s93
    %p105 = scmp.eq.s32.totalorder %s16, 1
    %p106 = por %p104, %p105
    %p108 = scmp.ne.s32.totalorder %s93, %s107
    %p109 = scmp.eq.s32.totalorder %s16, 0
    %p110 = por %p108, %p109
    %s112 = sadd.s32 %s111, 1
    %p115 = scmp.eq.s32.totalorder %s10, 1
    %p116 = scmp.ne.s32.totalorder %s111, %s113
    %p117 = scmp.eq.s32.totalorder %s10, 0
    %p118 = por %p116, %p117
    %p119 = scmp.ne.s32.totalorder %s111, %s113
    %p120 = scmp.eq.s32.totalorder %s15, 1
    %p121 = por %p119, %p120
    %p122 = scmp.ne.s32.totalorder %s113, %s114
    %p123 = scmp.eq.s32.totalorder %s15, 0
    %p124 = por %p122, %p123
    %p125 = scmp.ne.s32.totalorder %s113, %s114
    %p126 = scmp.eq.s32.totalorder %s16, 1
    %p127 = por %p125, %p126
    %p129 = scmp.ne.s32.totalorder %s114, %s128
    %p130 = scmp.eq.s32.totalorder %s16, 0
    %p131 = por %p129, %p130
    %s132 = ssub.s32 %s17, %s29
    %s133 = ssub.s32 %s18, %s25
    %s134 = sor.u32 %s132, %s133
    %p135 = scmp.eq.s32.totalorder %s134, 0
    %s137 = sadd.s32 %s136, 1
    %s138 = scalar_select %p135, %s136, %s137
    %p141 = pneg %p135
    %p142 = scmp.eq.s32.totalorder %s10, 1
    %p143 = por %p141, %p142
    %p144 = scmp.ne.s32.totalorder %s136, %s139
    %p145 = scmp.eq.s32.totalorder %s10, 0
    %p146 = por %p144, %p145
    %p147 = scmp.ne.s32.totalorder %s136, %s139
    %p148 = scmp.eq.s32.totalorder %s15, 1
    %p149 = por %p147, %p148
    %p150 = scmp.ne.s32.totalorder %s139, %s140
    %p151 = scmp.eq.s32.totalorder %s15, 0
    %p152 = por %p150, %p151
    %p153 = scmp.ne.s32.totalorder %s139, %s140
    %p154 = scmp.eq.s32.totalorder %s16, 1
    %p155 = por %p153, %p154
    %p157 = scmp.ne.s32.totalorder %s140, %s156
    %p158 = scmp.eq.s32.totalorder %s16, 0
    %p159 = por %p157, %p158
    %p160 = scmp.le.s32.totalorder 1, %s10
    %p161 = scmp.lt.s32.totalorder %s10, 3
    %p162 = pnand %p160, %p161
    %p163 = pneg %p162
    // Predicated region
    $region9: #{_lambda_.8} parent=5 // pred_check
      _
    $region10: #{_lambda_.8} parent=5 // pred_check_branch
      %165 = sbr.rel (%p162) target = $region12
    $region11: #{_lambda_.8} parent=5 // pred_region
      %s166 = ssub.s32 %s10, 1
      // Predicated region
      $region13: #{_lambda_.8} parent=11 // pred_check
        %p167 = pneg %p103
      $region14: #{_lambda_.8} parent=11 // pred_check_branch
        %169 = sbr.rel (%p167) target = $region16
      $region15: #{_lambda_.8} parent=11 // pred_region
        _
      $region16: #{_lambda_.8} parent=11 // pred_fallthru
        _
      // Predicated region
      $region17: #{_lambda_.8} parent=11 // pred_check
        %p170 = pneg %p124
      $region18: #{_lambda_.8} parent=11 // pred_check_branch
        %172 = sbr.rel (%p170) target = $region20
      $region19: #{_lambda_.8} parent=11 // pred_region
        _
      $region20: #{_lambda_.8} parent=11 // pred_fallthru
        _
    $region12: #{_lambda_.8} parent=5 // pred_fallthru
      _
    %p173 = scmp.lt.s32.totalorder %s10, 2
    // Predicated region
    $region21: #{_lambda_.8} parent=5 // pred_check
      %p174 = pneg %p173
    $region22: #{_lambda_.8} parent=5 // pred_check_branch
      %176 = sbr.rel (%p174) target = $region24
    $region23: #{_lambda_.8} parent=5 // pred_region
      // Predicated region
      $region25: #{_lambda_.8} parent=23 // pred_check
        %p177 = pneg %p44
      $region26: #{_lambda_.8} parent=23 // pred_check_branch
        %179 = sbr.rel (%p177) target = $region28
      $region27: #{_lambda_.8} parent=23 // pred_region
        %s180 = smul.u32 4, %s18
        %p181 = scmp.lt.s32.totalorder %s17, 1
        %s182 = scalar_select %p181, %s17, 1
        %p183 = scmp.lt.s32.totalorder %s180, 267
        %s184 = scalar_select %p183, %s180, 267
        %s185 = smul.addr %s182, 268
        %s186 = sadd.s32 %s184, %s185
        %s187 = smul.addr %s186, 8
        %s188 = scalar_lea.vmem %s0, %s187
        %s189 = smul.u32 4, %s18
      $region28: #{_lambda_.8} parent=23 // pred_fallthru
        _
      // Predicated region
      $region29: #{_lambda_.8} parent=23 // pred_check
        %p190 = pneg %p76
      $region30: #{_lambda_.8} parent=23 // pred_check_branch
        %192 = sbr.rel (%p190) target = $region32
      $region31: #{_lambda_.8} parent=23 // pred_region
        %s193 = sadd.s32 %s18, 1
        %s194 = smul.u32 %s193, 4
        %p195 = scmp.lt.s32.totalorder %s17, 1
        %s196 = scalar_select %p195, %s17, 1
        %p197 = scmp.lt.s32.totalorder %s194, 267
        %s198 = scalar_select %p197, %s194, 267
        %s199 = smul.addr %s196, 268
        %s200 = sadd.s32 %s198, %s199
        %s201 = smul.addr %s200, 8
        %s202 = scalar_lea.vmem %s1, %s201
        %s203 = sadd.s32 %s18, 1
        %s204 = smul.u32 %s203, 4
      $region32: #{_lambda_.8} parent=23 // pred_fallthru
        _
    $region24: #{_lambda_.8} parent=5 // pred_fallthru
      _
    %p205 = scmp.le.s32.totalorder 1, %s10
    %p206 = scmp.lt.s32.totalorder %s10, 3
    %p207 = pnand %p205, %p206
    %p208 = pneg %p207
    // Predicated region
    $region33: #{_lambda_.8} parent=5 // pred_check
      _
    $region34: #{_lambda_.8} parent=5 // pred_check_branch
      %210 = sbr.rel (%p207) target = $region36
    $region35: #{_lambda_.8} parent=5 // pred_region
      %s211 = ssub.s32 %s10, 1
      %s212 = smul.u32 4, %s20
      %p213 = scmp.lt.s32.totalorder %s19, 1
      %s214 = scalar_select %p213, %s19, 1
      %p215 = scmp.lt.s32.totalorder %s212, 267
      %s216 = scalar_select %p215, %s212, 267
      %s217 = smul.addr %s214, 268
      %s218 = sadd.s32 %s216, %s217
      %s219 = smul.addr %s218, 8
      %s220 = scalar_lea.vmem %s0, %s219
      %p221 = pneg %p50
      %p222 = pneg %p47
      %s223 = sadd.s32 %s20, 1
      %s224 = smul.u32 %s223, 4
      %p225 = scmp.lt.s32.totalorder %s19, 1
      %s226 = scalar_select %p225, %s19, 1
      %p227 = scmp.lt.s32.totalorder %s224, 267
      %s228 = scalar_select %p227, %s224, 267
      %s229 = smul.addr %s226, 268
      %s230 = sadd.s32 %s228, %s229
      %s231 = smul.addr %s230, 8
      %s232 = scalar_lea.vmem %s1, %s231
      %p233 = pneg %p82
      %p234 = pneg %p79
      %p235 = pneg %p103
      %p236 = pneg %p100
      %p237 = pneg %p124
      %p238 = pneg %p121
      %p239 = pneg %p152
      %p240 = pneg %p149
      %s241 = smul.u32 4, %s20
      %p242 = scmp.lt.s32.totalorder %s19, 1
      %s243 = scalar_select %p242, %s19, 1
      %p244 = scmp.lt.s32.totalorder %s241, 267
      %s245 = scalar_select %p244, %s241, 267
      %s246 = smul.addr %s243, 268
      %s247 = sadd.s32 %s245, %s246
      %s248 = smul.addr %s247, 8
      %s249 = scalar_lea.vmem %s4, %s248
      %s250 = smul.u32 4, %s20
      %p251 = scmp.lt.s32.totalorder %s19, 1
      %s252 = scalar_select %p251, %s19, 1
      %p253 = scmp.lt.s32.totalorder %s250, 267
      %s254 = scalar_select %p253, %s250, 267
      %s255 = smul.addr %s252, 268
      %s256 = sadd.s32 %s254, %s255
      %s257 = smul.addr %s256, 8
      %s258 = scalar_lea.vmem %s0, %s257
      %s259 = smul.u32 4, %s20
      %s260 = sadd.s32 %s20, 1
      %s261 = smul.u32 %s260, 4
      %p262 = scmp.lt.s32.totalorder %s19, 1
      %s263 = scalar_select %p262, %s19, 1
      %p264 = scmp.lt.s32.totalorder %s261, 267
      %s265 = scalar_select %p264, %s261, 267
      %s266 = smul.addr %s263, 268
      %s267 = sadd.s32 %s265, %s266
      %s268 = smul.addr %s267, 8
      %s269 = scalar_lea.vmem %s1, %s268
      %s270 = sadd.s32 %s20, 1
      %s271 = smul.u32 %s270, 4
      %s272 = smul.u32 4, %s20
      %p273 = scmp.lt.s32.totalorder %s19, 1
      %s274 = scalar_select %p273, %s19, 1
      %p275 = scmp.lt.s32.totalorder %s272, 267
      %s276 = scalar_select %p275, %s272, 267
      %s277 = smul.addr %s274, 268
      %s278 = sadd.s32 %s276, %s277
      %s279 = smul.addr %s278, 8
      %s280 = scalar_lea.vmem %s4, %s279
      %s281 = smul.u32 4, %s20
      %v283 = vld [vmem:[%s258] sm:$0xff]
      %v284 = vld [vmem:[%s258 + $0x8] sm:$0xff]
      %v285 = vld [vmem:[%s258 + $0x10] sm:$0xff]
      %v286 = vld [vmem:[%s258 + $0x18] sm:$0xff]
      %v287 = vld [vmem:[%s269] sm:$0xff]
      %vm293 = vcmask 1046528
      %v294 = vrot.slane %v283, 1
      %v295 = vrot.slane %v284, 1
      %v296 = vsel %vm293, %v294, %v295
      %v297 = vrot.slane %v285, 1
      %v298 = vsel %vm293, %v295, %v297
      %v299 = vrot.slane %v286, 1
      %v300 = vsel %vm293, %v297, %v299
      %v301 = vrot.slane %v287, 1
      %v302 = vsel %vm293, %v299, %v301
      %303 = vrot.lane.b32.xlu0 %v296, 8
      %v304 = vpop.permute.xlu0 %303
      %305 = vrot.lane.b32.xlu0 %v298, 8
      %v306 = vpop.permute.xlu0 %305
      %307 = vrot.lane.b32.xlu0 %v300, 8
      %v308 = vpop.permute.xlu0 %307
      %309 = vrot.lane.b32.xlu0 %v302, 8
      %v310 = vpop.permute.xlu0 %309
      %311 = vrot.lane.b32.xlu0 %v301, 8
      %v312 = vpop.permute.xlu0 %311
      %vm318 = vcmask 1045504
      %v319 = vrot.slane %v283, 2
      %v320 = vrot.slane %v284, 2
      %v321 = vsel %vm318, %v319, %v320
      %v322 = vrot.slane %v285, 2
      %v323 = vsel %vm318, %v320, %v322
      %v324 = vrot.slane %v286, 2
      %v325 = vsel %vm318, %v322, %v324
      %v326 = vrot.slane %v287, 2
      %v327 = vsel %vm318, %v324, %v326
      %328 = vrot.lane.b32.xlu0 %v321, 16
      %v329 = vpop.permute.xlu0 %328
      %330 = vrot.lane.b32.xlu0 %v323, 16
      %v331 = vpop.permute.xlu0 %330
      %332 = vrot.lane.b32.xlu0 %v325, 16
      %v333 = vpop.permute.xlu0 %332
      %334 = vrot.lane.b32.xlu0 %v327, 16
      %v335 = vpop.permute.xlu0 %334
      %336 = vrot.lane.b32.xlu0 %v326, 16
      %v337 = vpop.permute.xlu0 %336
      %vm343 = vcmask 64512
      %v344 = vsel %vm343, %v283, %v304
      %v345 = vsel %vm343, %v284, %v306
      %v346 = vsel %vm343, %v285, %v308
      %v347 = vsel %vm343, %v286, %v310
      %v348 = vsel %vm343, %v287, %v312
      %vm349 = vcmask 130048
      %v350 = vsel %vm349, %v344, %v329
      %v351 = vsel %vm349, %v345, %v331
      %v352 = vsel %vm349, %v346, %v333
      %v353 = vsel %vm349, %v347, %v335
      %v354 = vsel %vm349, %v348, %v337
      %v355 = vpack.c.bf16 %v351, %v350
      %v356 = vpack.c.bf16 %v353, %v352
      %v357 = vpack.c.bf16 %v354, %v354
      %v358 = vld [vmem:[%s2] sm:$0xf]
      %v359 = vld [vmem:[%s2 + $0x4] sm:$0xf]
      %v360 = vld [vmem:[%s2 + $0x8] sm:$0xf]
      %v361 = vld [vmem:[%s3] sm:$0x1]
      %v363 = vlaneseq
      %v364 = vshrl.u32 %v363, 7
      %v365 = vsub.s32 0, %v364
      %v366 = vrot.slane %v361, %v365
      %v371 = vunpack.c.l.b16 %v358
      %v372 = vunpack.c.l.b16 %v359
      %v373 = vunpack.c.l.b16 %v360
      %v374 = vpack.c.b16 %v372, %v371
      %v375 = vpack.c.b16 %v373, %v373
      %vm377 = vcmask 195584
      %v379 = vsel %vm377, %v355, 0
      %v382 = vsel %vm377, %v356, 0
      %v385 = vsel %vm377, %v357, 0
      %vm387 = vcmask 1043456
      %v389 = vsel %vm387, %v375, 0
      %391 = vmatprep.subr.bf16.mxu0 0
      %392 = vmatpush1.bf16.msra.mxu0 %v374
      %393 = vmatprep.subr.bf16.mxu0 0
      %394 = vmatpush1.bf16.msra.mxu0 %v389
      %395 = vmatprep.subr.bf16.mxu0 0
      %396 = vmatpush1.bf16.msra.mxu0 0
      %397 = vmatprep.subr.bf16.mxu0 0
      %398 = vmatpush1.bf16.msra.mxu0 0
      %399 = vmatprep.subr.bf16.mxu0 0
      %400 = vmatpush1.bf16.msra.mxu0 0
      %401 = vmatprep.subr.bf16.mxu0 0
      %402 = vmatpush1.bf16.msra.mxu0 0
      %403 = vmatprep.subr.bf16.mxu0 0
      %404 = vmatpush1.bf16.msra.mxu0 0
      %405 = vmatprep.subr.bf16.mxu0 0
      %406 = vmatpush1.bf16.msra.mxu0 0
      %407 = vmatprep.subr.bf16.mxu0 0
      %408 = vmatpush1.bf16.msra.mxu0 0
      %409 = vmatprep.subr.bf16.mxu0 0
      %410 = vmatpush1.bf16.msra.mxu0 0
      %411 = vmatprep.subr.bf16.mxu0 0
      %412 = vmatpush1.bf16.msra.mxu0 0
      %413 = vmatprep.subr.bf16.mxu0 0
      %414 = vmatpush1.bf16.msra.mxu0 0
      %415 = vmatprep.subr.bf16.mxu0 0
      %416 = vmatpush1.bf16.msra.mxu0 0
      %417 = vmatprep.subr.bf16.mxu0 0
      %418 = vmatpush1.bf16.msra.mxu0 0
      %419 = vmatprep.subr.bf16.mxu0 0
      %420 = vmatpush1.bf16.msra.mxu0 0
      %421 = vmatprep.subr.bf16.mxu0 0
      %422 = vmatpush1.bf16.msra.mxu0 0
      %423 = vmatprep.mubr.bf16.mxu0 0
      %424 = vmatmul.mubr.bf16.gmra.mrb[0].mxu0 %v379
      %v425 = vpop.f32.mrb[0].mxu0
      %v426 = vadd.f32 %v366, %v425
      %v427 = vpop.f32.mrb[0].mxu0
      %v428 = vpop.f32.mrb[0].mxu0
      %v429 = vadd.f32 %v366, %v428
      %v430 = vpop.f32.mrb[0].mxu0
      %431 = vmatprep.mubr.bf16.mxu0 0
      %432 = vmatmul.mubr.bf16.gmra.mrb[0].mxu0 %v382
      %v433 = vpop.f32.mrb[0].mxu0
      %v434 = vadd.f32 %v366, %v433
      %v435 = vpop.f32.mrb[0].mxu0
      %v436 = vpop.f32.mrb[0].mxu0
      %v437 = vadd.f32 %v366, %v436
      %v438 = vpop.f32.mrb[0].mxu0
      %439 = vmatprep.mubr.bf16.mxu0 0
      %440 = vmatmul.mubr.bf16.gmra.mrb[0].mxu0 %v385
      %v441 = vpop.f32.mrb[0].mxu0
      %v442 = vadd.f32 %v366, %v441
      %v443 = vpop.f32.mrb[0].mxu0
      %v444 = vpop.f32.mrb[0].mxu0
      %v445 = vpop.f32.mrb[0].mxu0
      %446 = vdwg.mxu0
      %v447 = vtanh.pop %v426
      %v448 = vtanh.pop %v429
      %v449 = vtanh.pop %v434
      %v450 = vtanh.pop %v437
      %v451 = vtanh.pop %v442
      %v452 = vxor.u32 %v426, 2147483648
      %v453 = vxor.u32 %v429, 2147483648
      %v454 = vxor.u32 %v434, 2147483648
      %v455 = vxor.u32 %v437, 2147483648
      %v456 = vxor.u32 %v442, 2147483648
      %v457 = vmul.f32 %v452, 1.442695
      %v458 = vpow.pop %v457
      %v459 = vmul.f32 %v453, 1.442695
      %v460 = vpow.pop %v459
      %v461 = vmul.f32 %v454, 1.442695
      %v462 = vpow.pop %v461
      %v463 = vmul.f32 %v455, 1.442695
      %v464 = vpow.pop %v463
      %v465 = vmul.f32 %v456, 1.442695
      %v466 = vpow.pop %v465
      %v467 = vadd.f32 %v458, 1.0
      %v468 = vadd.f32 %v460, 1.0
      %v469 = vadd.f32 %v462, 1.0
      %v470 = vadd.f32 %v464, 1.0
      %v471 = vadd.f32 %v466, 1.0
      %v472 = vrcp.pop %v467
      %v473 = vmul.f32 1.0, %v472
      %v474 = vrcp.pop %v468
      %v475 = vmul.f32 1.0, %v474
      %v476 = vrcp.pop %v469
      %v477 = vmul.f32 1.0, %v476
      %v478 = vrcp.pop %v470
      %v479 = vmul.f32 1.0, %v478
      %v480 = vrcp.pop %v471
      %v481 = vmul.f32 1.0, %v480
      %487 = vrot.lane.b32.xlu0 %v473, 120
      %v488 = vpop.permute.xlu0 %487
      %489 = vrot.lane.b32.xlu0 %v475, 120
      %v490 = vpop.permute.xlu0 %489
      %491 = vrot.lane.b32.xlu0 %v477, 120
      %v492 = vpop.permute.xlu0 %491
      %493 = vrot.lane.b32.xlu0 %v479, 120
      %v494 = vpop.permute.xlu0 %493
      %495 = vrot.lane.b32.xlu0 %v481, 120
      %v496 = vpop.permute.xlu0 %495
      %v502 = vmul.f32 %v447, %v488
      %v503 = vmul.f32 %v448, %v490
      %v504 = vmul.f32 %v449, %v492
      %v505 = vmul.f32 %v450, %v494
      %v506 = vmul.f32 %v451, %v496
      %vm512 = vcmask 1041408
      %v513 = vrot.slane %v502, 6
      %v514 = vrot.slane %v503, 6
      %v515 = vsel %vm512, %v513, %v514
      %v516 = vrot.slane %v504, 6
      %v517 = vsel %vm512, %v514, %v516
      %v518 = vrot.slane %v505, 6
      %v519 = vsel %vm512, %v516, %v518
      %v520 = vrot.slane %v506, 6
      %v521 = vsel %vm512, %v518, %v520
      %v527 = vadd.f32 %v283, %v513
      %v528 = vadd.f32 %v284, %v515
      %v529 = vadd.f32 %v285, %v517
      %v530 = vadd.f32 %v286, %v519
      %v531 = vadd.f32 %v287, %v521
      %vm532 = vcmask 64514
      %533 = vst.msk [vmem:[%s280 - $0x2] sm:$0xfc] %vm532, %v527
      %534 = vst.msk [vmem:[%s280 + $0x6] sm:$0xff] %vm343, %v528
      %535 = vst.msk [vmem:[%s280 + $0xe] sm:$0xff] %vm343, %v529
      %536 = vst.msk [vmem:[%s280 + $0x16] sm:$0xff] %vm343, %v530
      %vm537 = vcmask 58368
      %538 = vst.msk [vmem:[%s280 + $0x1e] sm:$0x3] %vm537, %v531
      %s539 = smul.u32 4, %s20
      %p540 = scmp.lt.s32.totalorder %s19, 1
      %s541 = scalar_select %p540, %s19, 1
      %p542 = scmp.lt.s32.totalorder %s539, 267
      %s543 = scalar_select %p542, %s539, 267
      %s544 = smul.addr %s541, 268
      %s545 = sadd.s32 %s543, %s544
      %s546 = smul.addr %s545, 8
      %s547 = scalar_lea.vmem %s4, %s546
      // Predicated region
      $region37: #{_lambda_.8} parent=35 // pred_check
        %p548 = pneg %p149
      $region38: #{_lambda_.8} parent=35 // pred_check_branch
        %550 = sbr.rel (%p548) target = $region40
      $region39: #{_lambda_.8} parent=35 // pred_region
        %s551 = smul.u32 4, %s20
      $region40: #{_lambda_.8} parent=35 // pred_fallthru
        _
    $region36: #{_lambda_.8} parent=5 // pred_fallthru
      _
    %p552 = scmp.le.s32.totalorder 2, %s10
    // Predicated region
    $region41: #{_lambda_.8} parent=5 // pred_check
      %p553 = pneg %p552
    $region42: #{_lambda_.8} parent=5 // pred_check_branch
      %555 = sbr.rel (%p553) target = $region44
    $region43: #{_lambda_.8} parent=5 // pred_region
      %s556 = ssub.s32 %s10, 2
      // Predicated region
      $region45: #{_lambda_.8} parent=43 // pred_check
        %p557 = pneg %p155
      $region46: #{_lambda_.8} parent=43 // pred_check_branch
        %559 = sbr.rel (%p557) target = $region48
      $region47: #{_lambda_.8} parent=43 // pred_region
        %s560 = smul.u32 4, %s22
        %p561 = scmp.lt.s32.totalorder %s21, 1
        %s562 = scalar_select %p561, %s21, 1
        %p563 = scmp.lt.s32.totalorder %s560, 267
        %s564 = scalar_select %p563, %s560, 267
        %s565 = smul.addr %s562, 268
        %s566 = sadd.s32 %s564, %s565
        %s567 = smul.addr %s566, 8
        %s568 = scalar_lea.vmem %s4, %s567
      $region48: #{_lambda_.8} parent=43 // pred_fallthru
        _
    $region44: #{_lambda_.8} parent=5 // pred_fallthru
      _
  $region6: #{_lambda_.8} parent=0 // loop_footer
    %s14 = sadd.s32 1, %s10
  $region7: #{_lambda_.8} parent=0 // loop_footer_branch
    %9 = sbr.rel target = $region3
  $region8: #{_lambda_.8} parent=0 // loop_exit
    _

// kernel: _lambda_.9
$region0: #{_lambda_.9}
  #allocation0 [shape = 'u32[]', space=smem, size = 0x4, offset = 0x4, fixed_abs, tag = 'smem constant byte address 0x4 - core index']
  #allocation1 [shape = 'u32[144,128]{1,0:T(1,128)}', space=vmem, size = 0x12000, scoped, tag = 'internal scratch']
  %s0 = inlined_call_operand.vmem [shape: f32[2,24,16], index: 0, kind: input, shape index: {}, may-alias: {0,1}]
  %s1 = inlined_call_operand.vmem [shape: f32[2,24,16], index: 1, kind: input, shape index: {}, may-alias: {0,1}]
  %s2 = inlined_call_operand.vmem [shape: bf16[24,16], index: 2, kind: input, shape index: {}]
  %s3 = inlined_call_operand.vmem [shape: f32[1,16], index: 3, kind: input, shape index: {}]
  %s4 = inlined_call_operand.vmem [shape: f32[2,2128,8], index: 4, kind: output, shape index: {}]
  %s5 = sld [smem:[#allocation0]]
  $region49: #{_lambda_.9} parent=0
    _
  %s7 = ssub.s32 1, %s5
  %s8 = scalar_select 0, %s7, %s5
  loop: start=0, step=1, limit=4
  $region2: #{_lambda_.9} parent=0 // loop_pre_header
    _
  $region3: #{_lambda_.9} parent=0 // loop_header
    %s10 = sphi 0, %s14
    %p11 = scmp.ge.s32.totalorder %s10, 4
    %s17 = sphi 0, %s29
    %s18 = sphi 0, %s25
    %s19 = sphi 0, %s17
    %s20 = sphi 0, %s18
    %s21 = sphi 0, %s19
    %s22 = sphi 0, %s20
    %s34 = sphi 0, %s36
    %s37 = sphi 0, %s34
    %s38 = sphi 0, %s37
    %s54 = sphi 0, %s38
    %s66 = sphi 0, %s68
    %s69 = sphi 0, %s66
    %s70 = sphi 0, %s69
    %s86 = sphi 0, %s70
    %s90 = sphi 0, %s90
    %s92 = sphi 0, %s90
    %s93 = sphi 0, %s92
    %s107 = sphi 0, %s93
    %s111 = sphi 0, %s111
    %s113 = sphi 0, %s111
    %s114 = sphi 0, %s113
    %s128 = sphi 0, %s114
    %s136 = sphi 0, %s138
    %s139 = sphi 0, %s136
    %s140 = sphi 0, %s139
    %s156 = sphi 0, %s140
  $region4: #{_lambda_.9} parent=0 // loop_header_branch
    %13 = sbr.rel (%p11) target = $region8
  $region5: #{_lambda_.9} parent=0 // loop_body
    %s15 = ssub.s32 %s10, 1
    %s16 = ssub.s32 %s10, 2
    %s23 = sadd.s32 1, %s18
    %p24 = scmp.ge.s32.totalorder %s23, 1
    %s25 = scalar_select %p24, 0, %s23
    %s26 = sadd.s32 1, %s17
    %s27 = scalar_select %p24, %s26, %s17
    %p28 = scmp.ge.s32.totalorder %s27, 2
    %s29 = scalar_select %p28, 0, %s27
    %s30 = ssub.s32 %s17, %s29
    %s31 = ssub.s32 %s18, %s25
    %s32 = sor.u32 %s30, %s31
    %p33 = scmp.eq.s32.totalorder %s32, 0
    %s35 = sadd.s32 %s34, 1
    %s36 = scalar_select %p33, %s34, %s35
    %p39 = pneg %p33
    %p40 = scmp.eq.s32.totalorder %s10, 1
    %p41 = por %p39, %p40
    %p42 = scmp.ne.s32.totalorder %s34, %s37
    %p43 = scmp.eq.s32.totalorder %s10, 0
    %p44 = por %p42, %p43
    %p45 = scmp.ne.s32.totalorder %s34, %s37
    %p46 = scmp.eq.s32.totalorder %s15, 1
    %p47 = por %p45, %p46
    %p48 = scmp.ne.s32.totalorder %s37, %s38
    %p49 = scmp.eq.s32.totalorder %s15, 0
    %p50 = por %p48, %p49
    %p51 = scmp.ne.s32.totalorder %s37, %s38
    %p52 = scmp.eq.s32.totalorder %s16, 1
    %p53 = por %p51, %p52
    %p55 = scmp.ne.s32.totalorder %s38, %s54
    %p56 = scmp.eq.s32.totalorder %s16, 0
    %p57 = por %p55, %p56
    %s58 = sadd.s32 %s18, 1
    %s59 = smul.u32 %s58, 2
    %s60 = sadd.s32 %s25, 1
    %s61 = smul.u32 %s60, 2
    %s62 = ssub.s32 %s17, %s29
    %s63 = ssub.s32 %s59, %s61
    %s64 = sor.u32 %s62, %s63
    %p65 = scmp.eq.s32.totalorder %s64, 0
    %s67 = sadd.s32 %s66, 1
    %s68 = scalar_select %p65, %s66, %s67
    %p71 = pneg %p65
    %p72 = scmp.eq.s32.totalorder %s10, 1
    %p73 = por %p71, %p72
    %p74 = scmp.ne.s32.totalorder %s66, %s69
    %p75 = scmp.eq.s32.totalorder %s10, 0
    %p76 = por %p74, %p75
    %p77 = scmp.ne.s32.totalorder %s66, %s69
    %p78 = scmp.eq.s32.totalorder %s15, 1
    %p79 = por %p77, %p78
    %p80 = scmp.ne.s32.totalorder %s69, %s70
    %p81 = scmp.eq.s32.totalorder %s15, 0
    %p82 = por %p80, %p81
    %p83 = scmp.ne.s32.totalorder %s69, %s70
    %p84 = scmp.eq.s32.totalorder %s16, 1
    %p85 = por %p83, %p84
    %p87 = scmp.ne.s32.totalorder %s70, %s86
    %p88 = scmp.eq.s32.totalorder %s16, 0
    %p89 = por %p87, %p88
    %s91 = sadd.s32 %s90, 1
    %p94 = scmp.eq.s32.totalorder %s10, 1
    %p95 = scmp.ne.s32.totalorder %s90, %s92
    %p96 = scmp.eq.s32.totalorder %s10, 0
    %p97 = por %p95, %p96
    %p98 = scmp.ne.s32.totalorder %s90, %s92
    %p99 = scmp.eq.s32.totalorder %s15, 1
    %p100 = por %p98, %p99
    %p101 = scmp.ne.s32.totalorder %s92, %s93
    %p102 = scmp.eq.s32.totalorder %s15, 0
    %p103 = por %p101, %p102
    %p104 = scmp.ne.s32.totalorder %s92, %s93
    %p105 = scmp.eq.s32.totalorder %s16, 1
    %p106 = por %p104, %p105
    %p108 = scmp.ne.s32.totalorder %s93, %s107
    %p109 = scmp.eq.s32.totalorder %s16, 0
    %p110 = por %p108, %p109
    %s112 = sadd.s32 %s111, 1
    %p115 = scmp.eq.s32.totalorder %s10, 1
    %p116 = scmp.ne.s32.totalorder %s111, %s113
    %p117 = scmp.eq.s32.totalorder %s10, 0
    %p118 = por %p116, %p117
    %p119 = scmp.ne.s32.totalorder %s111, %s113
    %p120 = scmp.eq.s32.totalorder %s15, 1
    %p121 = por %p119, %p120
    %p122 = scmp.ne.s32.totalorder %s113, %s114
    %p123 = scmp.eq.s32.totalorder %s15, 0
    %p124 = por %p122, %p123
    %p125 = scmp.ne.s32.totalorder %s113, %s114
    %p126 = scmp.eq.s32.totalorder %s16, 1
    %p127 = por %p125, %p126
    %p129 = scmp.ne.s32.totalorder %s114, %s128
    %p130 = scmp.eq.s32.totalorder %s16, 0
    %p131 = por %p129, %p130
    %s132 = ssub.s32 %s17, %s29
    %s133 = ssub.s32 %s18, %s25
    %s134 = sor.u32 %s132, %s133
    %p135 = scmp.eq.s32.totalorder %s134, 0
    %s137 = sadd.s32 %s136, 1
    %s138 = scalar_select %p135, %s136, %s137
    %p141 = pneg %p135
    %p142 = scmp.eq.s32.totalorder %s10, 1
    %p143 = por %p141, %p142
    %p144 = scmp.ne.s32.totalorder %s136, %s139
    %p145 = scmp.eq.s32.totalorder %s10, 0
    %p146 = por %p144, %p145
    %p147 = scmp.ne.s32.totalorder %s136, %s139
    %p148 = scmp.eq.s32.totalorder %s15, 1
    %p149 = por %p147, %p148
    %p150 = scmp.ne.s32.totalorder %s139, %s140
    %p151 = scmp.eq.s32.totalorder %s15, 0
    %p152 = por %p150, %p151
    %p153 = scmp.ne.s32.totalorder %s139, %s140
    %p154 = scmp.eq.s32.totalorder %s16, 1
    %p155 = por %p153, %p154
    %p157 = scmp.ne.s32.totalorder %s140, %s156
    %p158 = scmp.eq.s32.totalorder %s16, 0
    %p159 = por %p157, %p158
    %p160 = scmp.le.s32.totalorder 1, %s10
    %p161 = scmp.lt.s32.totalorder %s10, 3
    %p162 = pnand %p160, %p161
    %p163 = pneg %p162
    // Predicated region
    $region9: #{_lambda_.9} parent=5 // pred_check
      _
    $region10: #{_lambda_.9} parent=5 // pred_check_branch
      %165 = sbr.rel (%p162) target = $region12
    $region11: #{_lambda_.9} parent=5 // pred_region
      %s166 = ssub.s32 %s10, 1
      // Predicated region
      $region13: #{_lambda_.9} parent=11 // pred_check
        %p167 = pneg %p103
      $region14: #{_lambda_.9} parent=11 // pred_check_branch
        %169 = sbr.rel (%p167) target = $region16
      $region15: #{_lambda_.9} parent=11 // pred_region
        _
      $region16: #{_lambda_.9} parent=11 // pred_fallthru
        _
      // Predicated region
      $region17: #{_lambda_.9} parent=11 // pred_check
        %p170 = pneg %p124
      $region18: #{_lambda_.9} parent=11 // pred_check_branch
        %172 = sbr.rel (%p170) target = $region20
      $region19: #{_lambda_.9} parent=11 // pred_region
        _
      $region20: #{_lambda_.9} parent=11 // pred_fallthru
        _
    $region12: #{_lambda_.9} parent=5 // pred_fallthru
      _
    %p173 = scmp.lt.s32.totalorder %s10, 2
    // Predicated region
    $region21: #{_lambda_.9} parent=5 // pred_check
      %p174 = pneg %p173
    $region22: #{_lambda_.9} parent=5 // pred_check_branch
      %176 = sbr.rel (%p174) target = $region24
    $region23: #{_lambda_.9} parent=5 // pred_region
      // Predicated region
      $region25: #{_lambda_.9} parent=23 // pred_check
        %p177 = pneg %p44
      $region26: #{_lambda_.9} parent=23 // pred_check_branch
        %179 = sbr.rel (%p177) target = $region28
      $region27: #{_lambda_.9} parent=23 // pred_region
        %s180 = smul.u32 2, %s18
        %s181 = ssub.s32 3, %s180
        %p182 = scmp.lt.s32.totalorder %s181, 2
        %s183 = scalar_select %p182, %s181, 2
        %s184 = smul.u32 128, %s183
        %p185 = scmp.lt.s32.totalorder %s17, 1
        %s186 = scalar_select %p185, %s17, 1
        %p187 = scmp.lt.s32.totalorder %s180, 2
        %s188 = scalar_select %p187, %s180, 2
        %s189 = smul.addr %s186, 3
        %s190 = sadd.s32 %s188, %s189
        %s191 = smul.addr %s190, 8
        %s192 = scalar_lea.vmem %s0, %s191
        %s193 = smul.u32 2, %s18
        %s194 = ssub.s32 3, %s193
        %p195 = scmp.lt.s32.totalorder %s194, 2
        %s196 = scalar_select %p195, %s194, 2
        %s197 = smul.u32 128, %s196
      $region28: #{_lambda_.9} parent=23 // pred_fallthru
        _
      // Predicated region
      $region29: #{_lambda_.9} parent=23 // pred_check
        %p198 = pneg %p76
      $region30: #{_lambda_.9} parent=23 // pred_check_branch
        %200 = sbr.rel (%p198) target = $region32
      $region31: #{_lambda_.9} parent=23 // pred_region
        %s201 = sadd.s32 %s18, 1
        %s202 = smul.u32 %s201, 2
        %p203 = scmp.lt.s32.totalorder %s17, 1
        %s204 = scalar_select %p203, %s17, 1
        %p205 = scmp.lt.s32.totalorder %s202, 2
        %s206 = scalar_select %p205, %s202, 2
        %s207 = smul.addr %s204, 3
        %s208 = sadd.s32 %s206, %s207
        %s209 = smul.addr %s208, 8
        %s210 = scalar_lea.vmem %s1, %s209
        %s211 = sadd.s32 %s18, 1
        %s212 = smul.u32 %s211, 2
      $region32: #{_lambda_.9} parent=23 // pred_fallthru
        _
    $region24: #{_lambda_.9} parent=5 // pred_fallthru
      _
    %p213 = scmp.le.s32.totalorder 1, %s10
    %p214 = scmp.lt.s32.totalorder %s10, 3
    %p215 = pnand %p213, %p214
    %p216 = pneg %p215
    // Predicated region
    $region33: #{_lambda_.9} parent=5 // pred_check
      _
    $region34: #{_lambda_.9} parent=5 // pred_check_branch
      %218 = sbr.rel (%p215) target = $region36
    $region35: #{_lambda_.9} parent=5 // pred_region
      %s219 = ssub.s32 %s10, 1
      %s220 = smul.u32 2, %s20
      %s221 = ssub.s32 3, %s220
      %p222 = scmp.lt.s32.totalorder %s221, 2
      %s223 = scalar_select %p222, %s221, 2
      %s224 = smul.u32 128, %s223
      %p225 = scmp.lt.s32.totalorder %s19, 1
      %s226 = scalar_select %p225, %s19, 1
      %p227 = scmp.lt.s32.totalorder %s220, 2
      %s228 = scalar_select %p227, %s220, 2
      %s229 = smul.addr %s226, 3
      %s230 = sadd.s32 %s228, %s229
      %s231 = smul.addr %s230, 8
      %s232 = scalar_lea.vmem %s0, %s231
      %p233 = pneg %p50
      %p234 = pneg %p47
      %s235 = sadd.s32 %s20, 1
      %s236 = smul.u32 %s235, 2
      %p237 = scmp.lt.s32.totalorder %s19, 1
      %s238 = scalar_select %p237, %s19, 1
      %p239 = scmp.lt.s32.totalorder %s236, 2
      %s240 = scalar_select %p239, %s236, 2
      %s241 = smul.addr %s238, 3
      %s242 = sadd.s32 %s240, %s241
      %s243 = smul.addr %s242, 8
      %s244 = scalar_lea.vmem %s1, %s243
      %p245 = pneg %p82
      %p246 = pneg %p79
      %p247 = pneg %p103
      %p248 = pneg %p100
      %p249 = pneg %p124
      %p250 = pneg %p121
      %p251 = pneg %p152
      %p252 = pneg %p149
      %s253 = smul.u32 2, %s20
      %p254 = scmp.lt.s32.totalorder %s19, 1
      %s255 = scalar_select %p254, %s19, 1
      %p256 = scmp.lt.s32.totalorder %s253, 265
      %s257 = scalar_select %p256, %s253, 265
      %s258 = smul.addr %s255, 266
      %s259 = sadd.s32 %s257, %s258
      %s260 = smul.addr %s259, 8
      %s261 = scalar_lea.vmem %s4, %s260
      %s262 = smul.u32 2, %s20
      %s263 = ssub.s32 3, %s262
      %p264 = scmp.lt.s32.totalorder %s263, 2
      %s265 = scalar_select %p264, %s263, 2
      %s266 = smul.u32 128, %s265
      %p267 = scmp.lt.s32.totalorder %s19, 1
      %s268 = scalar_select %p267, %s19, 1
      %p269 = scmp.lt.s32.totalorder %s262, 2
      %s270 = scalar_select %p269, %s262, 2
      %s271 = smul.addr %s268, 3
      %s272 = sadd.s32 %s270, %s271
      %s273 = smul.addr %s272, 8
      %s274 = scalar_lea.vmem %s0, %s273
      %s275 = smul.u32 2, %s20
      %s276 = ssub.s32 3, %s275
      %p277 = scmp.lt.s32.totalorder %s276, 2
      %s278 = scalar_select %p277, %s276, 2
      %s279 = smul.u32 128, %s278
      %s280 = sadd.s32 %s20, 1
      %s281 = smul.u32 %s280, 2
      %p282 = scmp.lt.s32.totalorder %s19, 1
      %s283 = scalar_select %p282, %s19, 1
      %p284 = scmp.lt.s32.totalorder %s281, 2
      %s285 = scalar_select %p284, %s281, 2
      %s286 = smul.addr %s283, 3
      %s287 = sadd.s32 %s285, %s286
      %s288 = smul.addr %s287, 8
      %s289 = scalar_lea.vmem %s1, %s288
      %s290 = sadd.s32 %s20, 1
      %s291 = smul.u32 %s290, 2
      %s292 = smul.u32 2, %s20
      %p293 = scmp.lt.s32.totalorder %s19, 1
      %s294 = scalar_select %p293, %s19, 1
      %p295 = scmp.lt.s32.totalorder %s292, 265
      %s296 = scalar_select %p295, %s292, 265
      %s297 = smul.addr %s294, 266
      %s298 = sadd.s32 %s296, %s297
      %s299 = smul.addr %s298, 8
      %s300 = scalar_lea.vmem %s4, %s299
      %s301 = smul.u32 2, %s20
      %v303 = vld [vmem:[%s274] sm:$0xff]
      %v304 = vld [vmem:[%s274 + $0x8] sm:$0xff]
      %v305 = vld [vmem:[%s289] sm:$0xff]
      %vm309 = vcmask 1046528
      %v310 = vrot.slane %v303, 1
      %v311 = vrot.slane %v304, 1
      %v312 = vsel %vm309, %v310, %v311
      %v313 = vrot.slane %v305, 1
      %v314 = vsel %vm309, %v311, %v313
      %315 = vrot.lane.b32.xlu0 %v312, 16
      %v316 = vpop.permute.xlu0 %315
      %317 = vrot.lane.b32.xlu0 %v314, 16
      %v318 = vpop.permute.xlu0 %317
      %vm321 = vcmask 130048
      %v322 = vsel %vm321, %v303, %v316
      %v323 = vsel %vm321, %v304, %v318
      %v324 = vpack.c.bf16 %v323, %v322
      %v325 = vld [vmem:[%s2] sm:$0xf]
      %v326 = vld [vmem:[%s2 + $0x4] sm:$0xf]
      %v327 = vld [vmem:[%s2 + $0x8] sm:$0xf]
      %v328 = vld [vmem:[%s3] sm:$0x1]
      %v330 = vlaneseq
      %v331 = vshrl.u32 %v330, 7
      %v332 = vsub.s32 0, %v331
      %v333 = vrot.slane %v328, %v332
      %v338 = vunpack.c.l.b16 %v325
      %v339 = vunpack.c.l.b16 %v326
      %v340 = vunpack.c.l.b16 %v327
      %v341 = vpack.c.b16 %v339, %v338
      %v342 = vpack.c.b16 %v340, %v340
      %vm344 = vcmask 195584
      %v346 = vsel %vm344, %v324, 0
      %vm348 = vcmask 1043456
      %v350 = vsel %vm348, %v342, 0
      %352 = vmatprep.subr.bf16.mxu0 0
      %353 = vmatpush1.bf16.msra.mxu0 %v341
      %354 = vmatprep.subr.bf16.mxu0 0
      %355 = vmatpush1.bf16.msra.mxu0 %v350
      %356 = vmatprep.subr.bf16.mxu0 0
      %357 = vmatpush1.bf16.msra.mxu0 0
      %358 = vmatprep.subr.bf16.mxu0 0
      %359 = vmatpush1.bf16.msra.mxu0 0
      %360 = vmatprep.subr.bf16.mxu0 0
      %361 = vmatpush1.bf16.msra.mxu0 0
      %362 = vmatprep.subr.bf16.mxu0 0
      %363 = vmatpush1.bf16.msra.mxu0 0
      %364 = vmatprep.subr.bf16.mxu0 0
      %365 = vmatpush1.bf16.msra.mxu0 0
      %366 = vmatprep.subr.bf16.mxu0 0
      %367 = vmatpush1.bf16.msra.mxu0 0
      %368 = vmatprep.subr.bf16.mxu0 0
      %369 = vmatpush1.bf16.msra.mxu0 0
      %370 = vmatprep.subr.bf16.mxu0 0
      %371 = vmatpush1.bf16.msra.mxu0 0
      %372 = vmatprep.subr.bf16.mxu0 0
      %373 = vmatpush1.bf16.msra.mxu0 0
      %374 = vmatprep.subr.bf16.mxu0 0
      %375 = vmatpush1.bf16.msra.mxu0 0
      %376 = vmatprep.subr.bf16.mxu0 0
      %377 = vmatpush1.bf16.msra.mxu0 0
      %378 = vmatprep.subr.bf16.mxu0 0
      %379 = vmatpush1.bf16.msra.mxu0 0
      %380 = vmatprep.subr.bf16.mxu0 0
      %381 = vmatpush1.bf16.msra.mxu0 0
      %382 = vmatprep.subr.bf16.mxu0 0
      %383 = vmatpush1.bf16.msra.mxu0 0
      %384 = vmatprep.mubr.bf16.mxu0 0
      %385 = vmatmul.mubr.bf16.gmra.mrb[0].mxu0 %v346
      %v386 = vpop.f32.mrb[0].mxu0
      %v387 = vadd.f32 %v333, %v386
      %v388 = vpop.f32.mrb[0].mxu0
      %v389 = vpop.f32.mrb[0].mxu0
      %v390 = vadd.f32 %v333, %v389
      %v391 = vpop.f32.mrb[0].mxu0
      %392 = vdwg.mxu0
      %v393 = vtanh.pop %v387
      %v394 = vtanh.pop %v390
      %v395 = vxor.u32 %v387, 2147483648
      %v396 = vxor.u32 %v390, 2147483648
      %v397 = vmul.f32 %v395, 1.442695
      %v398 = vpow.pop %v397
      %v399 = vmul.f32 %v396, 1.442695
      %v400 = vpow.pop %v399
      %v401 = vadd.f32 %v398, 1.0
      %v402 = vadd.f32 %v400, 1.0
      %v403 = vrcp.pop %v401
      %v404 = vmul.f32 1.0, %v403
      %v405 = vrcp.pop %v402
      %v406 = vmul.f32 1.0, %v405
      %409 = vrot.lane.b32.xlu0 %v404, 120
      %v410 = vpop.permute.xlu0 %409
      %411 = vrot.lane.b32.xlu0 %v406, 120
      %v412 = vpop.permute.xlu0 %411
      %v415 = vmul.f32 %v393, %v410
      %v416 = vmul.f32 %v394, %v412
      %vm419 = vcmask 1040384
      %v420 = vrot.slane %v415, 7
      %v421 = vrot.slane %v416, 7
      %v422 = vsel %vm419, %v420, %v421
      %v426 = vadd.f32 %v303, %v420
      %v427 = vadd.f32 %v304, %v422
      %v428 = vadd.f32 %v305, %v421
      %vm429 = vcmask 64513
      %430 = vst.msk [vmem:[%s300 - $0x1] sm:$0xfe] %vm429, %v426
      %vm431 = vcmask 64512
      %432 = vst.msk [vmem:[%s300 + $0x7] sm:$0xff] %vm431, %v427
      %vm433 = vcmask 57344
      %434 = vst.msk [vmem:[%s300 + $0xf] sm:$0x1] %vm433, %v428
      %s435 = smul.u32 2, %s20
      %p436 = scmp.lt.s32.totalorder %s19, 1
      %s437 = scalar_select %p436, %s19, 1
      %p438 = scmp.lt.s32.totalorder %s435, 265
      %s439 = scalar_select %p438, %s435, 265
      %s440 = smul.addr %s437, 266
      %s441 = sadd.s32 %s439, %s440
      %s442 = smul.addr %s441, 8
      %s443 = scalar_lea.vmem %s4, %s442
      // Predicated region
      $region37: #{_lambda_.9} parent=35 // pred_check
        %p444 = pneg %p149
      $region38: #{_lambda_.9} parent=35 // pred_check_branch
        %446 = sbr.rel (%p444) target = $region40
      $region39: #{_lambda_.9} parent=35 // pred_region
        %s447 = smul.u32 2, %s20
      $region40: #{_lambda_.9} parent=35 // pred_fallthru
        _
    $region36: #{_lambda_.9} parent=5 // pred_fallthru
      _
    %p448 = scmp.le.s32.totalorder 2, %s10
    // Predicated region
    $region41: #{_lambda_.9} parent=5 // pred_check
      %p449 = pneg %p448
    $region42: #{_lambda_.9} parent=5 // pred_check_branch
      %451 = sbr.rel (%p449) target = $region44
    $region43: #{_lambda_.9} parent=5 // pred_region
      %s452 = ssub.s32 %s10, 2
      // Predicated region
      $region45: #{_lambda_.9} parent=43 // pred_check
        %p453 = pneg %p155
      $region46: #{_lambda_.9} parent=43 // pred_check_branch
        %455 = sbr.rel (%p453) target = $region48
      $region47: #{_lambda_.9} parent=43 // pred_region
        %s456 = smul.u32 2, %s22
        %p457 = scmp.lt.s32.totalorder %s21, 1
        %s458 = scalar_select %p457, %s21, 1
        %p459 = scmp.lt.s32.totalorder %s456, 265
        %s460 = scalar_select %p459, %s456, 265
        %s461 = smul.addr %s458, 266
        %s462 = sadd.s32 %s460, %s461
        %s463 = smul.addr %s462, 8
        %s464 = scalar_lea.vmem %s4, %s463
      $region48: #{_lambda_.9} parent=43 // pred_fallthru
        _
    $region44: #{_lambda_.9} parent=5 // pred_fallthru
      _
  $region6: #{_lambda_.9} parent=0 // loop_footer
    %s14 = sadd.s32 1, %s10
  $region7: #{_lambda_.9} parent=0 // loop_footer_branch
    %9 = sbr.rel target = $region3
  $region8: #{_lambda_.9} parent=0 // loop_exit
    _

// kernel: _lambda_.10
$region0: #{_lambda_.10}
  #allocation0 [shape = 'u32[]', space=smem, size = 0x4, offset = 0x4, fixed_abs, tag = 'smem constant byte address 0x4 - core index']
  #allocation1 [shape = 'u32[144,128]{1,0:T(1,128)}', space=vmem, size = 0x12000, scoped, tag = 'internal scratch']
  %s0 = inlined_call_operand.vmem [shape: f32[2,2128,8], index: 0, kind: input, shape index: {}, may-alias: {0,1}]
  %s1 = inlined_call_operand.vmem [shape: f32[2,2128,8], index: 1, kind: input, shape index: {}, may-alias: {0,1}]
  %s2 = inlined_call_operand.vmem [shape: bf16[24,16], index: 2, kind: input, shape index: {}]
  %s3 = inlined_call_operand.vmem [shape: f32[1,16], index: 3, kind: input, shape index: {}]
  %s4 = inlined_call_operand.vmem [shape: f32[2,2128,8], index: 4, kind: output, shape index: {}]
  %s5 = sld [smem:[#allocation0]]
  $region49: #{_lambda_.10} parent=0
    _
  %s7 = ssub.s32 1, %s5
  %s8 = scalar_select 0, %s7, %s5
  loop: start=0, step=1, limit=4
  $region2: #{_lambda_.10} parent=0 // loop_pre_header
    _
  $region3: #{_lambda_.10} parent=0 // loop_header
    %s10 = sphi 0, %s14
    %p11 = scmp.ge.s32.totalorder %s10, 4
    %s17 = sphi 0, %s29
    %s18 = sphi 0, %s25
    %s19 = sphi 0, %s17
    %s20 = sphi 0, %s18
    %s21 = sphi 0, %s19
    %s22 = sphi 0, %s20
    %s34 = sphi 0, %s36
    %s37 = sphi 0, %s34
    %s38 = sphi 0, %s37
    %s54 = sphi 0, %s38
    %s66 = sphi 0, %s68
    %s69 = sphi 0, %s66
    %s70 = sphi 0, %s69
    %s86 = sphi 0, %s70
    %s90 = sphi 0, %s90
    %s92 = sphi 0, %s90
    %s93 = sphi 0, %s92
    %s107 = sphi 0, %s93
    %s111 = sphi 0, %s111
    %s113 = sphi 0, %s111
    %s114 = sphi 0, %s113
    %s128 = sphi 0, %s114
    %s136 = sphi 0, %s138
    %s139 = sphi 0, %s136
    %s140 = sphi 0, %s139
    %s156 = sphi 0, %s140
  $region4: #{_lambda_.10} parent=0 // loop_header_branch
    %13 = sbr.rel (%p11) target = $region8
  $region5: #{_lambda_.10} parent=0 // loop_body
    %s15 = ssub.s32 %s10, 1
    %s16 = ssub.s32 %s10, 2
    %s23 = sadd.s32 1, %s18
    %p24 = scmp.ge.s32.totalorder %s23, 1
    %s25 = scalar_select %p24, 0, %s23
    %s26 = sadd.s32 1, %s17
    %s27 = scalar_select %p24, %s26, %s17
    %p28 = scmp.ge.s32.totalorder %s27, 2
    %s29 = scalar_select %p28, 0, %s27
    %s30 = ssub.s32 %s17, %s29
    %s31 = ssub.s32 %s18, %s25
    %s32 = sor.u32 %s30, %s31
    %p33 = scmp.eq.s32.totalorder %s32, 0
    %s35 = sadd.s32 %s34, 1
    %s36 = scalar_select %p33, %s34, %s35
    %p39 = pneg %p33
    %p40 = scmp.eq.s32.totalorder %s10, 1
    %p41 = por %p39, %p40
    %p42 = scmp.ne.s32.totalorder %s34, %s37
    %p43 = scmp.eq.s32.totalorder %s10, 0
    %p44 = por %p42, %p43
    %p45 = scmp.ne.s32.totalorder %s34, %s37
    %p46 = scmp.eq.s32.totalorder %s15, 1
    %p47 = por %p45, %p46
    %p48 = scmp.ne.s32.totalorder %s37, %s38
    %p49 = scmp.eq.s32.totalorder %s15, 0
    %p50 = por %p48, %p49
    %p51 = scmp.ne.s32.totalorder %s37, %s38
    %p52 = scmp.eq.s32.totalorder %s16, 1
    %p53 = por %p51, %p52
    %p55 = scmp.ne.s32.totalorder %s38, %s54
    %p56 = scmp.eq.s32.totalorder %s16, 0
    %p57 = por %p55, %p56
    %s58 = sadd.s32 %s18, 1
    %s59 = smul.u32 %s58, 2
    %s60 = sadd.s32 %s25, 1
    %s61 = smul.u32 %s60, 2
    %s62 = ssub.s32 %s17, %s29
    %s63 = ssub.s32 %s59, %s61
    %s64 = sor.u32 %s62, %s63
    %p65 = scmp.eq.s32.totalorder %s64, 0
    %s67 = sadd.s32 %s66, 1
    %s68 = scalar_select %p65, %s66, %s67
    %p71 = pneg %p65
    %p72 = scmp.eq.s32.totalorder %s10, 1
    %p73 = por %p71, %p72
    %p74 = scmp.ne.s32.totalorder %s66, %s69
    %p75 = scmp.eq.s32.totalorder %s10, 0
    %p76 = por %p74, %p75
    %p77 = scmp.ne.s32.totalorder %s66, %s69
    %p78 = scmp.eq.s32.totalorder %s15, 1
    %p79 = por %p77, %p78
    %p80 = scmp.ne.s32.totalorder %s69, %s70
    %p81 = scmp.eq.s32.totalorder %s15, 0
    %p82 = por %p80, %p81
    %p83 = scmp.ne.s32.totalorder %s69, %s70
    %p84 = scmp.eq.s32.totalorder %s16, 1
    %p85 = por %p83, %p84
    %p87 = scmp.ne.s32.totalorder %s70, %s86
    %p88 = scmp.eq.s32.totalorder %s16, 0
    %p89 = por %p87, %p88
    %s91 = sadd.s32 %s90, 1
    %p94 = scmp.eq.s32.totalorder %s10, 1
    %p95 = scmp.ne.s32.totalorder %s90, %s92
    %p96 = scmp.eq.s32.totalorder %s10, 0
    %p97 = por %p95, %p96
    %p98 = scmp.ne.s32.totalorder %s90, %s92
    %p99 = scmp.eq.s32.totalorder %s15, 1
    %p100 = por %p98, %p99
    %p101 = scmp.ne.s32.totalorder %s92, %s93
    %p102 = scmp.eq.s32.totalorder %s15, 0
    %p103 = por %p101, %p102
    %p104 = scmp.ne.s32.totalorder %s92, %s93
    %p105 = scmp.eq.s32.totalorder %s16, 1
    %p106 = por %p104, %p105
    %p108 = scmp.ne.s32.totalorder %s93, %s107
    %p109 = scmp.eq.s32.totalorder %s16, 0
    %p110 = por %p108, %p109
    %s112 = sadd.s32 %s111, 1
    %p115 = scmp.eq.s32.totalorder %s10, 1
    %p116 = scmp.ne.s32.totalorder %s111, %s113
    %p117 = scmp.eq.s32.totalorder %s10, 0
    %p118 = por %p116, %p117
    %p119 = scmp.ne.s32.totalorder %s111, %s113
    %p120 = scmp.eq.s32.totalorder %s15, 1
    %p121 = por %p119, %p120
    %p122 = scmp.ne.s32.totalorder %s113, %s114
    %p123 = scmp.eq.s32.totalorder %s15, 0
    %p124 = por %p122, %p123
    %p125 = scmp.ne.s32.totalorder %s113, %s114
    %p126 = scmp.eq.s32.totalorder %s16, 1
    %p127 = por %p125, %p126
    %p129 = scmp.ne.s32.totalorder %s114, %s128
    %p130 = scmp.eq.s32.totalorder %s16, 0
    %p131 = por %p129, %p130
    %s132 = ssub.s32 %s17, %s29
    %s133 = ssub.s32 %s18, %s25
    %s134 = sor.u32 %s132, %s133
    %p135 = scmp.eq.s32.totalorder %s134, 0
    %s137 = sadd.s32 %s136, 1
    %s138 = scalar_select %p135, %s136, %s137
    %p141 = pneg %p135
    %p142 = scmp.eq.s32.totalorder %s10, 1
    %p143 = por %p141, %p142
    %p144 = scmp.ne.s32.totalorder %s136, %s139
    %p145 = scmp.eq.s32.totalorder %s10, 0
    %p146 = por %p144, %p145
    %p147 = scmp.ne.s32.totalorder %s136, %s139
    %p148 = scmp.eq.s32.totalorder %s15, 1
    %p149 = por %p147, %p148
    %p150 = scmp.ne.s32.totalorder %s139, %s140
    %p151 = scmp.eq.s32.totalorder %s15, 0
    %p152 = por %p150, %p151
    %p153 = scmp.ne.s32.totalorder %s139, %s140
    %p154 = scmp.eq.s32.totalorder %s16, 1
    %p155 = por %p153, %p154
    %p157 = scmp.ne.s32.totalorder %s140, %s156
    %p158 = scmp.eq.s32.totalorder %s16, 0
    %p159 = por %p157, %p158
    %p160 = scmp.le.s32.totalorder 1, %s10
    %p161 = scmp.lt.s32.totalorder %s10, 3
    %p162 = pnand %p160, %p161
    %p163 = pneg %p162
    // Predicated region
    $region9: #{_lambda_.10} parent=5 // pred_check
      _
    $region10: #{_lambda_.10} parent=5 // pred_check_branch
      %165 = sbr.rel (%p162) target = $region12
    $region11: #{_lambda_.10} parent=5 // pred_region
      %s166 = ssub.s32 %s10, 1
      // Predicated region
      $region13: #{_lambda_.10} parent=11 // pred_check
        %p167 = pneg %p103
      $region14: #{_lambda_.10} parent=11 // pred_check_branch
        %169 = sbr.rel (%p167) target = $region16
      $region15: #{_lambda_.10} parent=11 // pred_region
        _
      $region16: #{_lambda_.10} parent=11 // pred_fallthru
        _
      // Predicated region
      $region17: #{_lambda_.10} parent=11 // pred_check
        %p170 = pneg %p124
      $region18: #{_lambda_.10} parent=11 // pred_check_branch
        %172 = sbr.rel (%p170) target = $region20
      $region19: #{_lambda_.10} parent=11 // pred_region
        _
      $region20: #{_lambda_.10} parent=11 // pred_fallthru
        _
    $region12: #{_lambda_.10} parent=5 // pred_fallthru
      _
    %p173 = scmp.lt.s32.totalorder %s10, 2
    // Predicated region
    $region21: #{_lambda_.10} parent=5 // pred_check
      %p174 = pneg %p173
    $region22: #{_lambda_.10} parent=5 // pred_check_branch
      %176 = sbr.rel (%p174) target = $region24
    $region23: #{_lambda_.10} parent=5 // pred_region
      // Predicated region
      $region25: #{_lambda_.10} parent=23 // pred_check
        %p177 = pneg %p44
      $region26: #{_lambda_.10} parent=23 // pred_check_branch
        %179 = sbr.rel (%p177) target = $region28
      $region27: #{_lambda_.10} parent=23 // pred_region
        %s180 = smul.u32 2, %s18
        %p181 = scmp.lt.s32.totalorder %s17, 1
        %s182 = scalar_select %p181, %s17, 1
        %p183 = scmp.lt.s32.totalorder %s180, 265
        %s184 = scalar_select %p183, %s180, 265
        %s185 = smul.addr %s182, 266
        %s186 = sadd.s32 %s184, %s185
        %s187 = smul.addr %s186, 8
        %s188 = scalar_lea.vmem %s0, %s187
        %s189 = smul.u32 2, %s18
      $region28: #{_lambda_.10} parent=23 // pred_fallthru
        _
      // Predicated region
      $region29: #{_lambda_.10} parent=23 // pred_check
        %p190 = pneg %p76
      $region30: #{_lambda_.10} parent=23 // pred_check_branch
        %192 = sbr.rel (%p190) target = $region32
      $region31: #{_lambda_.10} parent=23 // pred_region
        %s193 = sadd.s32 %s18, 1
        %s194 = smul.u32 %s193, 2
        %p195 = scmp.lt.s32.totalorder %s17, 1
        %s196 = scalar_select %p195, %s17, 1
        %p197 = scmp.lt.s32.totalorder %s194, 265
        %s198 = scalar_select %p197, %s194, 265
        %s199 = smul.addr %s196, 266
        %s200 = sadd.s32 %s198, %s199
        %s201 = smul.addr %s200, 8
        %s202 = scalar_lea.vmem %s1, %s201
        %s203 = sadd.s32 %s18, 1
        %s204 = smul.u32 %s203, 2
      $region32: #{_lambda_.10} parent=23 // pred_fallthru
        _
    $region24: #{_lambda_.10} parent=5 // pred_fallthru
      _
    %p205 = scmp.le.s32.totalorder 1, %s10
    %p206 = scmp.lt.s32.totalorder %s10, 3
    %p207 = pnand %p205, %p206
    %p208 = pneg %p207
    // Predicated region
    $region33: #{_lambda_.10} parent=5 // pred_check
      _
    $region34: #{_lambda_.10} parent=5 // pred_check_branch
      %210 = sbr.rel (%p207) target = $region36
    $region35: #{_lambda_.10} parent=5 // pred_region
      %s211 = ssub.s32 %s10, 1
      %s212 = smul.u32 2, %s20
      %p213 = scmp.lt.s32.totalorder %s19, 1
      %s214 = scalar_select %p213, %s19, 1
      %p215 = scmp.lt.s32.totalorder %s212, 265
      %s216 = scalar_select %p215, %s212, 265
      %s217 = smul.addr %s214, 266
      %s218 = sadd.s32 %s216, %s217
      %s219 = smul.addr %s218, 8
      %s220 = scalar_lea.vmem %s0, %s219
      %p221 = pneg %p50
      %p222 = pneg %p47
      %s223 = sadd.s32 %s20, 1
      %s224 = smul.u32 %s223, 2
      %p225 = scmp.lt.s32.totalorder %s19, 1
      %s226 = scalar_select %p225, %s19, 1
      %p227 = scmp.lt.s32.totalorder %s224, 265
      %s228 = scalar_select %p227, %s224, 265
      %s229 = smul.addr %s226, 266
      %s230 = sadd.s32 %s228, %s229
      %s231 = smul.addr %s230, 8
      %s232 = scalar_lea.vmem %s1, %s231
      %p233 = pneg %p82
      %p234 = pneg %p79
      %p235 = pneg %p103
      %p236 = pneg %p100
      %p237 = pneg %p124
      %p238 = pneg %p121
      %p239 = pneg %p152
      %p240 = pneg %p149
      %s241 = smul.u32 2, %s20
      %p242 = scmp.lt.s32.totalorder %s19, 1
      %s243 = scalar_select %p242, %s19, 1
      %p244 = scmp.lt.s32.totalorder %s241, 265
      %s245 = scalar_select %p244, %s241, 265
      %s246 = smul.addr %s243, 266
      %s247 = sadd.s32 %s245, %s246
      %s248 = smul.addr %s247, 8
      %s249 = scalar_lea.vmem %s4, %s248
      %s250 = smul.u32 2, %s20
      %p251 = scmp.lt.s32.totalorder %s19, 1
      %s252 = scalar_select %p251, %s19, 1
      %p253 = scmp.lt.s32.totalorder %s250, 265
      %s254 = scalar_select %p253, %s250, 265
      %s255 = smul.addr %s252, 266
      %s256 = sadd.s32 %s254, %s255
      %s257 = smul.addr %s256, 8
      %s258 = scalar_lea.vmem %s0, %s257
      %s259 = smul.u32 2, %s20
      %s260 = sadd.s32 %s20, 1
      %s261 = smul.u32 %s260, 2
      %p262 = scmp.lt.s32.totalorder %s19, 1
      %s263 = scalar_select %p262, %s19, 1
      %p264 = scmp.lt.s32.totalorder %s261, 265
      %s265 = scalar_select %p264, %s261, 265
      %s266 = smul.addr %s263, 266
      %s267 = sadd.s32 %s265, %s266
      %s268 = smul.addr %s267, 8
      %s269 = scalar_lea.vmem %s1, %s268
      %s270 = sadd.s32 %s20, 1
      %s271 = smul.u32 %s270, 2
      %s272 = smul.u32 2, %s20
      %p273 = scmp.lt.s32.totalorder %s19, 1
      %s274 = scalar_select %p273, %s19, 1
      %p275 = scmp.lt.s32.totalorder %s272, 265
      %s276 = scalar_select %p275, %s272, 265
      %s277 = smul.addr %s274, 266
      %s278 = sadd.s32 %s276, %s277
      %s279 = smul.addr %s278, 8
      %s280 = scalar_lea.vmem %s4, %s279
      %s281 = smul.u32 2, %s20
      %v283 = vld [vmem:[%s258] sm:$0xff]
      %v284 = vld [vmem:[%s258 + $0x8] sm:$0xff]
      %v285 = vld [vmem:[%s269] sm:$0xff]
      %vm289 = vcmask 1046528
      %v290 = vrot.slane %v283, 1
      %v291 = vrot.slane %v284, 1
      %v292 = vsel %vm289, %v290, %v291
      %v293 = vrot.slane %v285, 1
      %v294 = vsel %vm289, %v291, %v293
      %295 = vrot.lane.b32.xlu0 %v292, 8
      %v296 = vpop.permute.xlu0 %295
      %297 = vrot.lane.b32.xlu0 %v294, 8
      %v298 = vpop.permute.xlu0 %297
      %299 = vrot.lane.b32.xlu0 %v293, 8
      %v300 = vpop.permute.xlu0 %299
      %vm304 = vcmask 1045504
      %v305 = vrot.slane %v283, 2
      %v306 = vrot.slane %v284, 2
      %v307 = vsel %vm304, %v305, %v306
      %v308 = vrot.slane %v285, 2
      %v309 = vsel %vm304, %v306, %v308
      %310 = vrot.lane.b32.xlu0 %v307, 16
      %v311 = vpop.permute.xlu0 %310
      %312 = vrot.lane.b32.xlu0 %v309, 16
      %v313 = vpop.permute.xlu0 %312
      %314 = vrot.lane.b32.xlu0 %v308, 16
      %v315 = vpop.permute.xlu0 %314
      %vm319 = vcmask 64512
      %v320 = vsel %vm319, %v283, %v296
      %v321 = vsel %vm319, %v284, %v298
      %v322 = vsel %vm319, %v285, %v300
      %vm323 = vcmask 130048
      %v324 = vsel %vm323, %v320, %v311
      %v325 = vsel %vm323, %v321, %v313
      %v326 = vsel %vm323, %v322, %v315
      %v327 = vpack.c.bf16 %v325, %v324
      %v328 = vpack.c.bf16 %v326, %v326
      %v329 = vld [vmem:[%s2] sm:$0xf]
      %v330 = vld [vmem:[%s2 + $0x4] sm:$0xf]
      %v331 = vld [vmem:[%s2 + $0x8] sm:$0xf]
      %v332 = vld [vmem:[%s3] sm:$0x1]
      %v334 = vlaneseq
      %v335 = vshrl.u32 %v334, 7
      %v336 = vsub.s32 0, %v335
      %v337 = vrot.slane %v332, %v336
      %v342 = vunpack.c.l.b16 %v329
      %v343 = vunpack.c.l.b16 %v330
      %v344 = vunpack.c.l.b16 %v331
      %v345 = vpack.c.b16 %v343, %v342
      %v346 = vpack.c.b16 %v344, %v344
      %vm348 = vcmask 195584
      %v350 = vsel %vm348, %v327, 0
      %v353 = vsel %vm348, %v328, 0
      %vm355 = vcmask 1043456
      %v357 = vsel %vm355, %v346, 0
      %359 = vmatprep.subr.bf16.mxu0 0
      %360 = vmatpush1.bf16.msra.mxu0 %v345
      %361 = vmatprep.subr.bf16.mxu0 0
      %362 = vmatpush1.bf16.msra.mxu0 %v357
      %363 = vmatprep.subr.bf16.mxu0 0
      %364 = vmatpush1.bf16.msra.mxu0 0
      %365 = vmatprep.subr.bf16.mxu0 0
      %366 = vmatpush1.bf16.msra.mxu0 0
      %367 = vmatprep.subr.bf16.mxu0 0
      %368 = vmatpush1.bf16.msra.mxu0 0
      %369 = vmatprep.subr.bf16.mxu0 0
      %370 = vmatpush1.bf16.msra.mxu0 0
      %371 = vmatprep.subr.bf16.mxu0 0
      %372 = vmatpush1.bf16.msra.mxu0 0
      %373 = vmatprep.subr.bf16.mxu0 0
      %374 = vmatpush1.bf16.msra.mxu0 0
      %375 = vmatprep.subr.bf16.mxu0 0
      %376 = vmatpush1.bf16.msra.mxu0 0
      %377 = vmatprep.subr.bf16.mxu0 0
      %378 = vmatpush1.bf16.msra.mxu0 0
      %379 = vmatprep.subr.bf16.mxu0 0
      %380 = vmatpush1.bf16.msra.mxu0 0
      %381 = vmatprep.subr.bf16.mxu0 0
      %382 = vmatpush1.bf16.msra.mxu0 0
      %383 = vmatprep.subr.bf16.mxu0 0
      %384 = vmatpush1.bf16.msra.mxu0 0
      %385 = vmatprep.subr.bf16.mxu0 0
      %386 = vmatpush1.bf16.msra.mxu0 0
      %387 = vmatprep.subr.bf16.mxu0 0
      %388 = vmatpush1.bf16.msra.mxu0 0
      %389 = vmatprep.subr.bf16.mxu0 0
      %390 = vmatpush1.bf16.msra.mxu0 0
      %391 = vmatprep.mubr.bf16.mxu0 0
      %392 = vmatmul.mubr.bf16.gmra.mrb[0].mxu0 %v350
      %v393 = vpop.f32.mrb[0].mxu0
      %v394 = vadd.f32 %v337, %v393
      %v395 = vpop.f32.mrb[0].mxu0
      %v396 = vpop.f32.mrb[0].mxu0
      %v397 = vadd.f32 %v337, %v396
      %v398 = vpop.f32.mrb[0].mxu0
      %399 = vmatprep.mubr.bf16.mxu0 0
      %400 = vmatmul.mubr.bf16.gmra.mrb[0].mxu0 %v353
      %v401 = vpop.f32.mrb[0].mxu0
      %v402 = vadd.f32 %v337, %v401
      %v403 = vpop.f32.mrb[0].mxu0
      %v404 = vpop.f32.mrb[0].mxu0
      %v405 = vpop.f32.mrb[0].mxu0
      %406 = vdwg.mxu0
      %v407 = vtanh.pop %v394
      %v408 = vtanh.pop %v397
      %v409 = vtanh.pop %v402
      %v410 = vxor.u32 %v394, 2147483648
      %v411 = vxor.u32 %v397, 2147483648
      %v412 = vxor.u32 %v402, 2147483648
      %v413 = vmul.f32 %v410, 1.442695
      %v414 = vpow.pop %v413
      %v415 = vmul.f32 %v411, 1.442695
      %v416 = vpow.pop %v415
      %v417 = vmul.f32 %v412, 1.442695
      %v418 = vpow.pop %v417
      %v419 = vadd.f32 %v414, 1.0
      %v420 = vadd.f32 %v416, 1.0
      %v421 = vadd.f32 %v418, 1.0
      %v422 = vrcp.pop %v419
      %v423 = vmul.f32 1.0, %v422
      %v424 = vrcp.pop %v420
      %v425 = vmul.f32 1.0, %v424
      %v426 = vrcp.pop %v421
      %v427 = vmul.f32 1.0, %v426
      %431 = vrot.lane.b32.xlu0 %v423, 120
      %v432 = vpop.permute.xlu0 %431
      %433 = vrot.lane.b32.xlu0 %v425, 120
      %v434 = vpop.permute.xlu0 %433
      %435 = vrot.lane.b32.xlu0 %v427, 120
      %v436 = vpop.permute.xlu0 %435
      %v440 = vmul.f32 %v407, %v432
      %v441 = vmul.f32 %v408, %v434
      %v442 = vmul.f32 %v409, %v436
      %vm446 = vcmask 1041408
      %v447 = vrot.slane %v440, 6
      %v448 = vrot.slane %v441, 6
      %v449 = vsel %vm446, %v447, %v448
      %v450 = vrot.slane %v442, 6
      %v451 = vsel %vm446, %v448, %v450
      %v455 = vadd.f32 %v283, %v447
      %v456 = vadd.f32 %v284, %v449
      %v457 = vadd.f32 %v285, %v451
      %vm458 = vcmask 64514
      %459 = vst.msk [vmem:[%s280 - $0x2] sm:$0xfc] %vm458, %v455
      %460 = vst.msk [vmem:[%s280 + $0x6] sm:$0xff] %vm319, %v456
      %vm461 = vcmask 58368
      %462 = vst.msk [vmem:[%s280 + $0xe] sm:$0x3] %vm461, %v457
      %s463 = smul.u32 2, %s20
      %p464 = scmp.lt.s32.totalorder %s19, 1
      %s465 = scalar_select %p464, %s19, 1
      %p466 = scmp.lt.s32.totalorder %s463, 265
      %s467 = scalar_select %p466, %s463, 265
      %s468 = smul.addr %s465, 266
      %s469 = sadd.s32 %s467, %s468
      %s470 = smul.addr %s469, 8
      %s471 = scalar_lea.vmem %s4, %s470
      // Predicated region
      $region37: #{_lambda_.10} parent=35 // pred_check
        %p472 = pneg %p149
      $region38: #{_lambda_.10} parent=35 // pred_check_branch
        %474 = sbr.rel (%p472) target = $region40
      $region39: #{_lambda_.10} parent=35 // pred_region
        %s475 = smul.u32 2, %s20
      $region40: #{_lambda_.10} parent=35 // pred_fallthru
        _
    $region36: #{_lambda_.10} parent=5 // pred_fallthru
      _
    %p476 = scmp.le.s32.totalorder 2, %s10
    // Predicated region
    $region41: #{_lambda_.10} parent=5 // pred_check
      %p477 = pneg %p476
    $region42: #{_lambda_.10} parent=5 // pred_check_branch
      %479 = sbr.rel (%p477) target = $region44
    $region43: #{_lambda_.10} parent=5 // pred_region
      %s480 = ssub.s32 %s10, 2
      // Predicated region
      $region45: #{_lambda_.10} parent=43 // pred_check
        %p481 = pneg %p155
      $region46: #{_lambda_.10} parent=43 // pred_check_branch
        %483 = sbr.rel (%p481) target = $region48
      $region47: #{_lambda_.10} parent=43 // pred_region
        %s484 = smul.u32 2, %s22
        %p485 = scmp.lt.s32.totalorder %s21, 1
        %s486 = scalar_select %p485, %s21, 1
        %p487 = scmp.lt.s32.totalorder %s484, 265
        %s488 = scalar_select %p487, %s484, 265
        %s489 = smul.addr %s486, 266
        %s490 = sadd.s32 %s488, %s489
        %s491 = smul.addr %s490, 8
        %s492 = scalar_lea.vmem %s4, %s491
      $region48: #{_lambda_.10} parent=43 // pred_fallthru
        _
    $region44: #{_lambda_.10} parent=5 // pred_fallthru
      _
  $region6: #{_lambda_.10} parent=0 // loop_footer
    %s14 = sadd.s32 1, %s10
  $region7: #{_lambda_.10} parent=0 // loop_footer_branch
    %9 = sbr.rel target = $region3
  $region8: #{_lambda_.10} parent=0 // loop_exit
    _

// kernel: _lambda_.11
$region0: #{_lambda_.11}
  #allocation0 [shape = 'u32[]', space=smem, size = 0x4, offset = 0x4, fixed_abs, tag = 'smem constant byte address 0x4 - core index']
  #allocation1 [shape = 'u32[144,128]{1,0:T(1,128)}', space=vmem, size = 0x12000, scoped, tag = 'internal scratch']
  %s0 = inlined_call_operand.vmem [shape: f32[2,2128,8], index: 0, kind: input, shape index: {}, may-alias: {0,1}]
  %s1 = inlined_call_operand.vmem [shape: f32[2,2128,8], index: 1, kind: input, shape index: {}, may-alias: {0,1}]
  %s2 = inlined_call_operand.vmem [shape: bf16[8,16], index: 2, kind: input, shape index: {}]
  %s3 = inlined_call_operand.vmem [shape: bf16[16,16], index: 3, kind: input, shape index: {}]
  %s4 = inlined_call_operand.vmem [shape: f32[1,16], index: 4, kind: input, shape index: {}]
  %s5 = inlined_call_operand.vmem [shape: f32[2,2128,16], index: 5, kind: output, shape index: {}]
  %s6 = sld [smem:[#allocation0]]
  $region53: #{_lambda_.11} parent=0
    _
  %s8 = ssub.s32 1, %s6
  %s9 = scalar_select 0, %s8, %s6
  loop: start=0, step=1, limit=4
  $region2: #{_lambda_.11} parent=0 // loop_pre_header
    _
  $region3: #{_lambda_.11} parent=0 // loop_header
    %s11 = sphi 0, %s15
    %p12 = scmp.ge.s32.totalorder %s11, 4
    %s18 = sphi 0, %s30
    %s19 = sphi 0, %s26
    %s20 = sphi 0, %s18
    %s21 = sphi 0, %s19
    %s22 = sphi 0, %s20
    %s23 = sphi 0, %s21
    %s35 = sphi 0, %s37
    %s38 = sphi 0, %s35
    %s39 = sphi 0, %s38
    %s55 = sphi 0, %s39
    %s67 = sphi 0, %s69
    %s70 = sphi 0, %s67
    %s71 = sphi 0, %s70
    %s87 = sphi 0, %s71
    %s91 = sphi 0, %s91
    %s93 = sphi 0, %s91
    %s94 = sphi 0, %s93
    %s108 = sphi 0, %s94
    %s112 = sphi 0, %s112
    %s114 = sphi 0, %s112
    %s115 = sphi 0, %s114
    %s129 = sphi 0, %s115
    %s133 = sphi 0, %s133
    %s135 = sphi 0, %s133
    %s136 = sphi 0, %s135
    %s150 = sphi 0, %s136
    %s158 = sphi 0, %s160
    %s161 = sphi 0, %s158
    %s162 = sphi 0, %s161
    %s178 = sphi 0, %s162
  $region4: #{_lambda_.11} parent=0 // loop_header_branch
    %14 = sbr.rel (%p12) target = $region8
  $region5: #{_lambda_.11} parent=0 // loop_body
    %s16 = ssub.s32 %s11, 1
    %s17 = ssub.s32 %s11, 2
    %s24 = sadd.s32 1, %s19
    %p25 = scmp.ge.s32.totalorder %s24, 1
    %s26 = scalar_select %p25, 0, %s24
    %s27 = sadd.s32 1, %s18
    %s28 = scalar_select %p25, %s27, %s18
    %p29 = scmp.ge.s32.totalorder %s28, 2
    %s30 = scalar_select %p29, 0, %s28
    %s31 = ssub.s32 %s18, %s30
    %s32 = ssub.s32 %s19, %s26
    %s33 = sor.u32 %s31, %s32
    %p34 = scmp.eq.s32.totalorder %s33, 0
    %s36 = sadd.s32 %s35, 1
    %s37 = scalar_select %p34, %s35, %s36
    %p40 = pneg %p34
    %p41 = scmp.eq.s32.totalorder %s11, 1
    %p42 = por %p40, %p41
    %p43 = scmp.ne.s32.totalorder %s35, %s38
    %p44 = scmp.eq.s32.totalorder %s11, 0
    %p45 = por %p43, %p44
    %p46 = scmp.ne.s32.totalorder %s35, %s38
    %p47 = scmp.eq.s32.totalorder %s16, 1
    %p48 = por %p46, %p47
    %p49 = scmp.ne.s32.totalorder %s38, %s39
    %p50 = scmp.eq.s32.totalorder %s16, 0
    %p51 = por %p49, %p50
    %p52 = scmp.ne.s32.totalorder %s38, %s39
    %p53 = scmp.eq.s32.totalorder %s17, 1
    %p54 = por %p52, %p53
    %p56 = scmp.ne.s32.totalorder %s39, %s55
    %p57 = scmp.eq.s32.totalorder %s17, 0
    %p58 = por %p56, %p57
    %s59 = sadd.s32 %s19, 1
    %s60 = smul.u32 %s59, 2
    %s61 = sadd.s32 %s26, 1
    %s62 = smul.u32 %s61, 2
    %s63 = ssub.s32 %s18, %s30
    %s64 = ssub.s32 %s60, %s62
    %s65 = sor.u32 %s63, %s64
    %p66 = scmp.eq.s32.totalorder %s65, 0
    %s68 = sadd.s32 %s67, 1
    %s69 = scalar_select %p66, %s67, %s68
    %p72 = pneg %p66
    %p73 = scmp.eq.s32.totalorder %s11, 1
    %p74 = por %p72, %p73
    %p75 = scmp.ne.s32.totalorder %s67, %s70
    %p76 = scmp.eq.s32.totalorder %s11, 0
    %p77 = por %p75, %p76
    %p78 = scmp.ne.s32.totalorder %s67, %s70
    %p79 = scmp.eq.s32.totalorder %s16, 1
    %p80 = por %p78, %p79
    %p81 = scmp.ne.s32.totalorder %s70, %s71
    %p82 = scmp.eq.s32.totalorder %s16, 0
    %p83 = por %p81, %p82
    %p84 = scmp.ne.s32.totalorder %s70, %s71
    %p85 = scmp.eq.s32.totalorder %s17, 1
    %p86 = por %p84, %p85
    %p88 = scmp.ne.s32.totalorder %s71, %s87
    %p89 = scmp.eq.s32.totalorder %s17, 0
    %p90 = por %p88, %p89
    %s92 = sadd.s32 %s91, 1
    %p95 = scmp.eq.s32.totalorder %s11, 1
    %p96 = scmp.ne.s32.totalorder %s91, %s93
    %p97 = scmp.eq.s32.totalorder %s11, 0
    %p98 = por %p96, %p97
    %p99 = scmp.ne.s32.totalorder %s91, %s93
    %p100 = scmp.eq.s32.totalorder %s16, 1
    %p101 = por %p99, %p100
    %p102 = scmp.ne.s32.totalorder %s93, %s94
    %p103 = scmp.eq.s32.totalorder %s16, 0
    %p104 = por %p102, %p103
    %p105 = scmp.ne.s32.totalorder %s93, %s94
    %p106 = scmp.eq.s32.totalorder %s17, 1
    %p107 = por %p105, %p106
    %p109 = scmp.ne.s32.totalorder %s94, %s108
    %p110 = scmp.eq.s32.totalorder %s17, 0
    %p111 = por %p109, %p110
    %s113 = sadd.s32 %s112, 1
    %p116 = scmp.eq.s32.totalorder %s11, 1
    %p117 = scmp.ne.s32.totalorder %s112, %s114
    %p118 = scmp.eq.s32.totalorder %s11, 0
    %p119 = por %p117, %p118
    %p120 = scmp.ne.s32.totalorder %s112, %s114
    %p121 = scmp.eq.s32.totalorder %s16, 1
    %p122 = por %p120, %p121
    %p123 = scmp.ne.s32.totalorder %s114, %s115
    %p124 = scmp.eq.s32.totalorder %s16, 0
    %p125 = por %p123, %p124
    %p126 = scmp.ne.s32.totalorder %s114, %s115
    %p127 = scmp.eq.s32.totalorder %s17, 1
    %p128 = por %p126, %p127
    %p130 = scmp.ne.s32.totalorder %s115, %s129
    %p131 = scmp.eq.s32.totalorder %s17, 0
    %p132 = por %p130, %p131
    %s134 = sadd.s32 %s133, 1
    %p137 = scmp.eq.s32.totalorder %s11, 1
    %p138 = scmp.ne.s32.totalorder %s133, %s135
    %p139 = scmp.eq.s32.totalorder %s11, 0
    %p140 = por %p138, %p139
    %p141 = scmp.ne.s32.totalorder %s133, %s135
    %p142 = scmp.eq.s32.totalorder %s16, 1
    %p143 = por %p141, %p142
    %p144 = scmp.ne.s32.totalorder %s135, %s136
    %p145 = scmp.eq.s32.totalorder %s16, 0
    %p146 = por %p144, %p145
    %p147 = scmp.ne.s32.totalorder %s135, %s136
    %p148 = scmp.eq.s32.totalorder %s17, 1
    %p149 = por %p147, %p148
    %p151 = scmp.ne.s32.totalorder %s136, %s150
    %p152 = scmp.eq.s32.totalorder %s17, 0
    %p153 = por %p151, %p152
    %s154 = ssub.s32 %s18, %s30
    %s155 = ssub.s32 %s19, %s26
    %s156 = sor.u32 %s154, %s155
    %p157 = scmp.eq.s32.totalorder %s156, 0
    %s159 = sadd.s32 %s158, 1
    %s160 = scalar_select %p157, %s158, %s159
    %p163 = pneg %p157
    %p164 = scmp.eq.s32.totalorder %s11, 1
    %p165 = por %p163, %p164
    %p166 = scmp.ne.s32.totalorder %s158, %s161
    %p167 = scmp.eq.s32.totalorder %s11, 0
    %p168 = por %p166, %p167
    %p169 = scmp.ne.s32.totalorder %s158, %s161
    %p170 = scmp.eq.s32.totalorder %s16, 1
    %p171 = por %p169, %p170
    %p172 = scmp.ne.s32.totalorder %s161, %s162
    %p173 = scmp.eq.s32.totalorder %s16, 0
    %p174 = por %p172, %p173
    %p175 = scmp.ne.s32.totalorder %s161, %s162
    %p176 = scmp.eq.s32.totalorder %s17, 1
    %p177 = por %p175, %p176
    %p179 = scmp.ne.s32.totalorder %s162, %s178
    %p180 = scmp.eq.s32.totalorder %s17, 0
    %p181 = por %p179, %p180
    %p182 = scmp.le.s32.totalorder 1, %s11
    %p183 = scmp.lt.s32.totalorder %s11, 3
    %p184 = pnand %p182, %p183
    %p185 = pneg %p184
    // Predicated region
    $region9: #{_lambda_.11} parent=5 // pred_check
      _
    $region10: #{_lambda_.11} parent=5 // pred_check_branch
      %187 = sbr.rel (%p184) target = $region12
    $region11: #{_lambda_.11} parent=5 // pred_region
      %s188 = ssub.s32 %s11, 1
      // Predicated region
      $region13: #{_lambda_.11} parent=11 // pred_check
        %p189 = pneg %p104
      $region14: #{_lambda_.11} parent=11 // pred_check_branch
        %191 = sbr.rel (%p189) target = $region16
      $region15: #{_lambda_.11} parent=11 // pred_region
        _
      $region16: #{_lambda_.11} parent=11 // pred_fallthru
        _
      // Predicated region
      $region17: #{_lambda_.11} parent=11 // pred_check
        %p192 = pneg %p125
      $region18: #{_lambda_.11} parent=11 // pred_check_branch
        %194 = sbr.rel (%p192) target = $region20
      $region19: #{_lambda_.11} parent=11 // pred_region
        _
      $region20: #{_lambda_.11} parent=11 // pred_fallthru
        _
      // Predicated region
      $region21: #{_lambda_.11} parent=11 // pred_check
        %p195 = pneg %p146
      $region22: #{_lambda_.11} parent=11 // pred_check_branch
        %197 = sbr.rel (%p195) target = $region24
      $region23: #{_lambda_.11} parent=11 // pred_region
        _
      $region24: #{_lambda_.11} parent=11 // pred_fallthru
        _
    $region12: #{_lambda_.11} parent=5 // pred_fallthru
      _
    %p198 = scmp.lt.s32.totalorder %s11, 2
    // Predicated region
    $region25: #{_lambda_.11} parent=5 // pred_check
      %p199 = pneg %p198
    $region26: #{_lambda_.11} parent=5 // pred_check_branch
      %201 = sbr.rel (%p199) target = $region28
    $region27: #{_lambda_.11} parent=5 // pred_region
      // Predicated region
      $region29: #{_lambda_.11} parent=27 // pred_check
        %p202 = pneg %p45
      $region30: #{_lambda_.11} parent=27 // pred_check_branch
        %204 = sbr.rel (%p202) target = $region32
      $region31: #{_lambda_.11} parent=27 // pred_region
        %s205 = smul.u32 2, %s19
        %p206 = scmp.lt.s32.totalorder %s18, 1
        %s207 = scalar_select %p206, %s18, 1
        %p208 = scmp.lt.s32.totalorder %s205, 265
        %s209 = scalar_select %p208, %s205, 265
        %s210 = smul.addr %s207, 266
        %s211 = sadd.s32 %s209, %s210
        %s212 = smul.addr %s211, 8
        %s213 = scalar_lea.vmem %s0, %s212
        %s214 = smul.u32 2, %s19
      $region32: #{_lambda_.11} parent=27 // pred_fallthru
        _
      // Predicated region
      $region33: #{_lambda_.11} parent=27 // pred_check
        %p215 = pneg %p77
      $region34: #{_lambda_.11} parent=27 // pred_check_branch
        %217 = sbr.rel (%p215) target = $region36
      $region35: #{_lambda_.11} parent=27 // pred_region
        %s218 = sadd.s32 %s19, 1
        %s219 = smul.u32 %s218, 2
        %p220 = scmp.lt.s32.totalorder %s18, 1
        %s221 = scalar_select %p220, %s18, 1
        %p222 = scmp.lt.s32.totalorder %s219, 265
        %s223 = scalar_select %p222, %s219, 265
        %s224 = smul.addr %s221, 266
        %s225 = sadd.s32 %s223, %s224
        %s226 = smul.addr %s225, 8
        %s227 = scalar_lea.vmem %s1, %s226
        %s228 = sadd.s32 %s19, 1
        %s229 = smul.u32 %s228, 2
      $region36: #{_lambda_.11} parent=27 // pred_fallthru
        _
    $region28: #{_lambda_.11} parent=5 // pred_fallthru
      _
    %p230 = scmp.le.s32.totalorder 1, %s11
    %p231 = scmp.lt.s32.totalorder %s11, 3
    %p232 = pnand %p230, %p231
    %p233 = pneg %p232
    // Predicated region
    $region37: #{_lambda_.11} parent=5 // pred_check
      _
    $region38: #{_lambda_.11} parent=5 // pred_check_branch
      %235 = sbr.rel (%p232) target = $region40
    $region39: #{_lambda_.11} parent=5 // pred_region
      %s236 = ssub.s32 %s11, 1
      %s237 = smul.u32 2, %s21
      %p238 = scmp.lt.s32.totalorder %s20, 1
      %s239 = scalar_select %p238, %s20, 1
      %p240 = scmp.lt.s32.totalorder %s237, 265
      %s241 = scalar_select %p240, %s237, 265
      %s242 = smul.addr %s239, 266
      %s243 = sadd.s32 %s241, %s242
      %s244 = smul.addr %s243, 8
      %s245 = scalar_lea.vmem %s0, %s244
      %p246 = pneg %p51
      %p247 = pneg %p48
      %s248 = sadd.s32 %s21, 1
      %s249 = smul.u32 %s248, 2
      %p250 = scmp.lt.s32.totalorder %s20, 1
      %s251 = scalar_select %p250, %s20, 1
      %p252 = scmp.lt.s32.totalorder %s249, 265
      %s253 = scalar_select %p252, %s249, 265
      %s254 = smul.addr %s251, 266
      %s255 = sadd.s32 %s253, %s254
      %s256 = smul.addr %s255, 8
      %s257 = scalar_lea.vmem %s1, %s256
      %p258 = pneg %p83
      %p259 = pneg %p80
      %p260 = pneg %p104
      %p261 = pneg %p101
      %p262 = pneg %p125
      %p263 = pneg %p122
      %p264 = pneg %p146
      %p265 = pneg %p143
      %p266 = pneg %p174
      %p267 = pneg %p171
      %s268 = smul.u32 2, %s21
      %p269 = scmp.lt.s32.totalorder %s20, 1
      %s270 = scalar_select %p269, %s20, 1
      %p271 = scmp.lt.s32.totalorder %s268, 265
      %s272 = scalar_select %p271, %s268, 265
      %s273 = smul.addr %s270, 266
      %s274 = sadd.s32 %s272, %s273
      %s275 = smul.addr %s274, 8
      %s276 = scalar_lea.vmem %s5, %s275
      %s277 = smul.u32 2, %s21
      %p278 = scmp.lt.s32.totalorder %s20, 1
      %s279 = scalar_select %p278, %s20, 1
      %p280 = scmp.lt.s32.totalorder %s277, 265
      %s281 = scalar_select %p280, %s277, 265
      %s282 = smul.addr %s279, 266
      %s283 = sadd.s32 %s281, %s282
      %s284 = smul.addr %s283, 8
      %s285 = scalar_lea.vmem %s0, %s284
      %s286 = smul.u32 2, %s21
      %s287 = sadd.s32 %s21, 1
      %s288 = smul.u32 %s287, 2
      %p289 = scmp.lt.s32.totalorder %s20, 1
      %s290 = scalar_select %p289, %s20, 1
      %p291 = scmp.lt.s32.totalorder %s288, 265
      %s292 = scalar_select %p291, %s288, 265
      %s293 = smul.addr %s290, 266
      %s294 = sadd.s32 %s292, %s293
      %s295 = smul.addr %s294, 8
      %s296 = scalar_lea.vmem %s1, %s295
      %s297 = sadd.s32 %s21, 1
      %s298 = smul.u32 %s297, 2
      %s299 = smul.u32 2, %s21
      %p300 = scmp.lt.s32.totalorder %s20, 1
      %s301 = scalar_select %p300, %s20, 1
      %p302 = scmp.lt.s32.totalorder %s299, 265
      %s303 = scalar_select %p302, %s299, 265
      %s304 = smul.addr %s301, 266
      %s305 = sadd.s32 %s303, %s304
      %s306 = smul.addr %s305, 8
      %s307 = scalar_lea.vmem %s5, %s306
      %s308 = smul.u32 2, %s21
      %v310 = vld [vmem:[%s285] sm:$0xff]
      %v311 = vld [vmem:[%s285 + $0x8] sm:$0xff]
      %v312 = vld [vmem:[%s296] sm:$0xff]
      %v313 = vpack.c.bf16 %v311, %v310
      %v314 = vpack.c.bf16 %v312, %v312
      %v315 = vld [vmem:[%s2] sm:$0xf]
      %v316 = vld [vmem:[%s4] sm:$0x1]
      %v318 = vlaneseq
      %v319 = vshrl.u32 %v318, 7
      %v320 = vsub.s32 0, %v319
      %v321 = vrot.slane %v316, %v320
      %vm323 = vcmask 64512
      %v325 = vsel %vm323, %v313, 0
      %vm327 = vcmask 1043456
      %v329 = vsel %vm327, %v315, 0
      %331 = vmatprep.subr.bf16.mxu0 0
      %332 = vmatpush1.bf16.msra.mxu0 %v329
      %333 = vmatprep.subr.bf16.mxu0 0
      %334 = vmatpush1.bf16.msra.mxu0 0
      %335 = vmatprep.subr.bf16.mxu0 0
      %336 = vmatpush1.bf16.msra.mxu0 0
      %337 = vmatprep.subr.bf16.mxu0 0
      %338 = vmatpush1.bf16.msra.mxu0 0
      %339 = vmatprep.subr.bf16.mxu0 0
      %340 = vmatpush1.bf16.msra.mxu0 0
      %341 = vmatprep.subr.bf16.mxu0 0
      %342 = vmatpush1.bf16.msra.mxu0 0
      %343 = vmatprep.subr.bf16.mxu0 0
      %344 = vmatpush1.bf16.msra.mxu0 0
      %345 = vmatprep.subr.bf16.mxu0 0
      %346 = vmatpush1.bf16.msra.mxu0 0
      %347 = vmatprep.subr.bf16.mxu0 0
      %348 = vmatpush1.bf16.msra.mxu0 0
      %349 = vmatprep.subr.bf16.mxu0 0
      %350 = vmatpush1.bf16.msra.mxu0 0
      %351 = vmatprep.subr.bf16.mxu0 0
      %352 = vmatpush1.bf16.msra.mxu0 0
      %353 = vmatprep.subr.bf16.mxu0 0
      %354 = vmatpush1.bf16.msra.mxu0 0
      %355 = vmatprep.subr.bf16.mxu0 0
      %356 = vmatpush1.bf16.msra.mxu0 0
      %357 = vmatprep.subr.bf16.mxu0 0
      %358 = vmatpush1.bf16.msra.mxu0 0
      %359 = vmatprep.subr.bf16.mxu0 0
      %360 = vmatpush1.bf16.msra.mxu0 0
      %361 = vmatprep.subr.bf16.mxu0 0
      %362 = vmatpush1.bf16.msra.mxu0 0
      %363 = vmatprep.mubr.bf16.mxu0 0
      %364 = vmatmul.mubr.bf16.gmra.mrb[0].mxu0 %v325
      %v365 = vpop.f32.mrb[0].mxu0
      %v366 = vadd.f32 %v321, %v365
      %v367 = vpop.f32.mrb[0].mxu0
      %v368 = vpop.f32.mrb[0].mxu0
      %v369 = vadd.f32 %v321, %v368
      %v370 = vpop.f32.mrb[0].mxu0
      %371 = vdwg.mxu0
      %v372 = vtanh.pop %v366
      %v373 = vtanh.pop %v369
      %v374 = vxor.u32 %v366, 2147483648
      %v375 = vxor.u32 %v369, 2147483648
      %v376 = vmul.f32 %v374, 1.442695
      %v377 = vpow.pop %v376
      %v378 = vmul.f32 %v375, 1.442695
      %v379 = vpow.pop %v378
      %v380 = vadd.f32 %v377, 1.0
      %v381 = vadd.f32 %v379, 1.0
      %v382 = vrcp.pop %v380
      %v383 = vmul.f32 1.0, %v382
      %v384 = vrcp.pop %v381
      %v385 = vmul.f32 1.0, %v384
      %388 = vrot.lane.b32.xlu0 %v383, 120
      %v389 = vpop.permute.xlu0 %388
      %390 = vrot.lane.b32.xlu0 %v385, 120
      %v391 = vpop.permute.xlu0 %390
      %v394 = vmul.f32 %v372, %v389
      %v395 = vmul.f32 %v373, %v391
      %vm398 = vcmask 1040384
      %v399 = vrot.slane %v394, 7
      %v400 = vrot.slane %v395, 7
      %v401 = vsel %vm398, %v399, %v400
      %v405 = vadd.f32 %v310, %v399
      %v406 = vadd.f32 %v311, %v401
      %v407 = vadd.f32 %v312, %v400
      %vm408 = vsmask.f32 7424
      %v409 = vshrl.u32 %v313, 16
      %v411 = vshll.u32 %v313, 16
      %v413 = vrot.slane %v411, 1
      %v414 = vor.u32 %v409, %v413
      %v416 = vshll.u32 %v314, 16
      %v418 = vrot.slane %v416, 1
      %v419 = vsel %vm408, %v414, %v418
      %420 = vrot.lane.b32.xlu0 %v419, 8
      %v421 = vpop.permute.xlu0 %420
      %v423 = vsel %vm323, %v313, %v421
      %v424 = vld [vmem:[%s3] sm:$0xf]
      %v425 = vld [vmem:[%s3 + $0x4] sm:$0xf]
      %v428 = vunpack.c.l.b16 %v424
      %v429 = vunpack.c.l.b16 %v425
      %v430 = vpack.c.b16 %v429, %v428
      %vm432 = vcmask 130048
      %v433 = vsel %vm432, %v423, 0
      %435 = vmatprep.subr.bf16.mxu0 0
      %436 = vmatpush1.bf16.msra.mxu0 %v430
      %437 = vmatprep.subr.bf16.mxu0 0
      %438 = vmatpush1.bf16.msra.mxu0 0
      %439 = vmatprep.subr.bf16.mxu0 0
      %440 = vmatpush1.bf16.msra.mxu0 0
      %441 = vmatprep.subr.bf16.mxu0 0
      %442 = vmatpush1.bf16.msra.mxu0 0
      %443 = vmatprep.subr.bf16.mxu0 0
      %444 = vmatpush1.bf16.msra.mxu0 0
      %445 = vmatprep.subr.bf16.mxu0 0
      %446 = vmatpush1.bf16.msra.mxu0 0
      %447 = vmatprep.subr.bf16.mxu0 0
      %448 = vmatpush1.bf16.msra.mxu0 0
      %449 = vmatprep.subr.bf16.mxu0 0
      %450 = vmatpush1.bf16.msra.mxu0 0
      %451 = vmatprep.subr.bf16.mxu0 0
      %452 = vmatpush1.bf16.msra.mxu0 0
      %453 = vmatprep.subr.bf16.mxu0 0
      %454 = vmatpush1.bf16.msra.mxu0 0
      %455 = vmatprep.subr.bf16.mxu0 0
      %456 = vmatpush1.bf16.msra.mxu0 0
      %457 = vmatprep.subr.bf16.mxu0 0
      %458 = vmatpush1.bf16.msra.mxu0 0
      %459 = vmatprep.subr.bf16.mxu0 0
      %460 = vmatpush1.bf16.msra.mxu0 0
      %461 = vmatprep.subr.bf16.mxu0 0
      %462 = vmatpush1.bf16.msra.mxu0 0
      %463 = vmatprep.subr.bf16.mxu0 0
      %464 = vmatpush1.bf16.msra.mxu0 0
      %465 = vmatprep.subr.bf16.mxu0 0
      %466 = vmatpush1.bf16.msra.mxu0 0
      %467 = vmatprep.mubr.bf16.mxu0 0
      %468 = vmatmul.mubr.bf16.gmra.mrb[0].mxu0 %v433
      %v469 = vpop.f32.mrb[0].mxu0
      %v470 = vadd.f32 %v321, %v469
      %v471 = vpop.f32.mrb[0].mxu0
      %v472 = vpop.f32.mrb[0].mxu0
      %v473 = vadd.f32 %v321, %v472
      %v474 = vpop.f32.mrb[0].mxu0
      %475 = vdwg.mxu0
      %v476 = vtanh.pop %v470
      %v477 = vtanh.pop %v473
      %v478 = vxor.u32 %v470, 2147483648
      %v479 = vxor.u32 %v473, 2147483648
      %v480 = vmul.f32 %v478, 1.442695
      %v481 = vpow.pop %v480
      %v482 = vmul.f32 %v479, 1.442695
      %v483 = vpow.pop %v482
      %v484 = vadd.f32 %v481, 1.0
      %v485 = vadd.f32 %v483, 1.0
      %v486 = vrcp.pop %v484
      %v487 = vmul.f32 1.0, %v486
      %v488 = vrcp.pop %v485
      %v489 = vmul.f32 1.0, %v488
      %492 = vrot.lane.b32.xlu0 %v487, 120
      %v493 = vpop.permute.xlu0 %492
      %494 = vrot.lane.b32.xlu0 %v489, 120
      %v495 = vpop.permute.xlu0 %494
      %v498 = vmul.f32 %v476, %v493
      %v499 = vmul.f32 %v477, %v495
      %v502 = vrot.slane %v498, 7
      %v503 = vrot.slane %v499, 7
      %v504 = vsel %vm398, %v502, %v503
      %v508 = vadd.f32 %v310, %v502
      %v509 = vadd.f32 %v311, %v504
      %v510 = vadd.f32 %v312, %v503
      %514 = vrot.lane.b32.xlu0 %v508, 8
      %v515 = vpop.permute.xlu0 %514
      %516 = vrot.lane.b32.xlu0 %v509, 8
      %v517 = vpop.permute.xlu0 %516
      %518 = vrot.lane.b32.xlu0 %v510, 8
      %v519 = vpop.permute.xlu0 %518
      %v523 = vsel %vm323, %v405, %v515
      %v524 = vsel %vm323, %v406, %v517
      %v525 = vsel %vm323, %v407, %v519
      %vm526 = vcmask 130049
      %527 = vst.msk [vmem:[%s307 - $0x1] sm:$0xfe] %vm526, %v523
      %528 = vst.msk [vmem:[%s307 + $0x7] sm:$0xff] %vm432, %v524
      %vm529 = vcmask 122880
      %530 = vst.msk [vmem:[%s307 + $0xf] sm:$0x1] %vm529, %v525
      %s531 = smul.u32 2, %s21
      %p532 = scmp.lt.s32.totalorder %s20, 1
      %s533 = scalar_select %p532, %s20, 1
      %p534 = scmp.lt.s32.totalorder %s531, 265
      %s535 = scalar_select %p534, %s531, 265
      %s536 = smul.addr %s533, 266
      %s537 = sadd.s32 %s535, %s536
      %s538 = smul.addr %s537, 8
      %s539 = scalar_lea.vmem %s5, %s538
      // Predicated region
      $region41: #{_lambda_.11} parent=39 // pred_check
        %p540 = pneg %p171
      $region42: #{_lambda_.11} parent=39 // pred_check_branch
        %542 = sbr.rel (%p540) target = $region44
      $region43: #{_lambda_.11} parent=39 // pred_region
        %s543 = smul.u32 2, %s21
      $region44: #{_lambda_.11} parent=39 // pred_fallthru
        _
    $region40: #{_lambda_.11} parent=5 // pred_fallthru
      _
    %p544 = scmp.le.s32.totalorder 2, %s11
    // Predicated region
    $region45: #{_lambda_.11} parent=5 // pred_check
      %p545 = pneg %p544
    $region46: #{_lambda_.11} parent=5 // pred_check_branch
      %547 = sbr.rel (%p545) target = $region48
    $region47: #{_lambda_.11} parent=5 // pred_region
      %s548 = ssub.s32 %s11, 2
      // Predicated region
      $region49: #{_lambda_.11} parent=47 // pred_check
        %p549 = pneg %p177
      $region50: #{_lambda_.11} parent=47 // pred_check_branch
        %551 = sbr.rel (%p549) target = $region52
      $region51: #{_lambda_.11} parent=47 // pred_region
        %s552 = smul.u32 2, %s23
        %p553 = scmp.lt.s32.totalorder %s22, 1
        %s554 = scalar_select %p553, %s22, 1
        %p555 = scmp.lt.s32.totalorder %s552, 265
        %s556 = scalar_select %p555, %s552, 265
        %s557 = smul.addr %s554, 266
        %s558 = sadd.s32 %s556, %s557
        %s559 = smul.addr %s558, 8
        %s560 = scalar_lea.vmem %s5, %s559
      $region52: #{_lambda_.11} parent=47 // pred_fallthru
        _
    $region48: #{_lambda_.11} parent=5 // pred_fallthru
      _
  $region6: #{_lambda_.11} parent=0 // loop_footer
    %s15 = sadd.s32 1, %s11
  $region7: #{_lambda_.11} parent=0 // loop_footer_branch
    %10 = sbr.rel target = $region3
  $region8: #{_lambda_.11} parent=0 // loop_exit
    _

// kernel: _lambda_.13
$region0: #{_lambda_.13}
  #allocation0 [shape = 'u32[]', space=smem, size = 0x4, offset = 0x4, fixed_abs, tag = 'smem constant byte address 0x4 - core index']
  #allocation1 [shape = 'u32[144,128]{1,0:T(1,128)}', space=vmem, size = 0x12000, scoped, tag = 'internal scratch']
  %s0 = inlined_call_operand.vmem [shape: f32[2,2128,8], index: 0, kind: input, shape index: {}]
  %s1 = inlined_call_operand.vmem [shape: bf16[8,4], index: 1, kind: input, shape index: {}]
  %s2 = inlined_call_operand.vmem [shape: f32[1,4], index: 2, kind: input, shape index: {}]
  %s3 = inlined_call_operand.vmem [shape: f32[2,2128,4], index: 3, kind: output, shape index: {}]
  %s4 = sld [smem:[#allocation0]]
  $region45: #{_lambda_.13} parent=0
    _
  %s6 = ssub.s32 1, %s4
  %s7 = scalar_select 0, %s6, %s4
  loop: start=0, step=1, limit=4
  $region2: #{_lambda_.13} parent=0 // loop_pre_header
    _
  $region3: #{_lambda_.13} parent=0 // loop_header
    %s9 = sphi 0, %s13
    %p10 = scmp.ge.s32.totalorder %s9, 4
    %s16 = sphi 0, %s28
    %s17 = sphi 0, %s24
    %s18 = sphi 0, %s16
    %s19 = sphi 0, %s17
    %s20 = sphi 0, %s18
    %s21 = sphi 0, %s19
    %s33 = sphi 0, %s35
    %s36 = sphi 0, %s33
    %s37 = sphi 0, %s36
    %s53 = sphi 0, %s37
    %s57 = sphi 0, %s57
    %s59 = sphi 0, %s57
    %s60 = sphi 0, %s59
    %s74 = sphi 0, %s60
    %s78 = sphi 0, %s78
    %s80 = sphi 0, %s78
    %s81 = sphi 0, %s80
    %s95 = sphi 0, %s81
    %s103 = sphi 0, %s105
    %s106 = sphi 0, %s103
    %s107 = sphi 0, %s106
    %s123 = sphi 0, %s107
  $region4: #{_lambda_.13} parent=0 // loop_header_branch
    %12 = sbr.rel (%p10) target = $region8
  $region5: #{_lambda_.13} parent=0 // loop_body
    %s14 = ssub.s32 %s9, 1
    %s15 = ssub.s32 %s9, 2
    %s22 = sadd.s32 1, %s17
    %p23 = scmp.ge.s32.totalorder %s22, 1
    %s24 = scalar_select %p23, 0, %s22
    %s25 = sadd.s32 1, %s16
    %s26 = scalar_select %p23, %s25, %s16
    %p27 = scmp.ge.s32.totalorder %s26, 2
    %s28 = scalar_select %p27, 0, %s26
    %s29 = ssub.s32 %s16, %s28
    %s30 = ssub.s32 %s17, %s24
    %s31 = sor.u32 %s29, %s30
    %p32 = scmp.eq.s32.totalorder %s31, 0
    %s34 = sadd.s32 %s33, 1
    %s35 = scalar_select %p32, %s33, %s34
    %p38 = pneg %p32
    %p39 = scmp.eq.s32.totalorder %s9, 1
    %p40 = por %p38, %p39
    %p41 = scmp.ne.s32.totalorder %s33, %s36
    %p42 = scmp.eq.s32.totalorder %s9, 0
    %p43 = por %p41, %p42
    %p44 = scmp.ne.s32.totalorder %s33, %s36
    %p45 = scmp.eq.s32.totalorder %s14, 1
    %p46 = por %p44, %p45
    %p47 = scmp.ne.s32.totalorder %s36, %s37
    %p48 = scmp.eq.s32.totalorder %s14, 0
    %p49 = por %p47, %p48
    %p50 = scmp.ne.s32.totalorder %s36, %s37
    %p51 = scmp.eq.s32.totalorder %s15, 1
    %p52 = por %p50, %p51
    %p54 = scmp.ne.s32.totalorder %s37, %s53
    %p55 = scmp.eq.s32.totalorder %s15, 0
    %p56 = por %p54, %p55
    %s58 = sadd.s32 %s57, 1
    %p61 = scmp.eq.s32.totalorder %s9, 1
    %p62 = scmp.ne.s32.totalorder %s57, %s59
    %p63 = scmp.eq.s32.totalorder %s9, 0
    %p64 = por %p62, %p63
    %p65 = scmp.ne.s32.totalorder %s57, %s59
    %p66 = scmp.eq.s32.totalorder %s14, 1
    %p67 = por %p65, %p66
    %p68 = scmp.ne.s32.totalorder %s59, %s60
    %p69 = scmp.eq.s32.totalorder %s14, 0
    %p70 = por %p68, %p69
    %p71 = scmp.ne.s32.totalorder %s59, %s60
    %p72 = scmp.eq.s32.totalorder %s15, 1
    %p73 = por %p71, %p72
    %p75 = scmp.ne.s32.totalorder %s60, %s74
    %p76 = scmp.eq.s32.totalorder %s15, 0
    %p77 = por %p75, %p76
    %s79 = sadd.s32 %s78, 1
    %p82 = scmp.eq.s32.totalorder %s9, 1
    %p83 = scmp.ne.s32.totalorder %s78, %s80
    %p84 = scmp.eq.s32.totalorder %s9, 0
    %p85 = por %p83, %p84
    %p86 = scmp.ne.s32.totalorder %s78, %s80
    %p87 = scmp.eq.s32.totalorder %s14, 1
    %p88 = por %p86, %p87
    %p89 = scmp.ne.s32.totalorder %s80, %s81
    %p90 = scmp.eq.s32.totalorder %s14, 0
    %p91 = por %p89, %p90
    %p92 = scmp.ne.s32.totalorder %s80, %s81
    %p93 = scmp.eq.s32.totalorder %s15, 1
    %p94 = por %p92, %p93
    %p96 = scmp.ne.s32.totalorder %s81, %s95
    %p97 = scmp.eq.s32.totalorder %s15, 0
    %p98 = por %p96, %p97
    %s99 = ssub.s32 %s16, %s28
    %s100 = ssub.s32 %s17, %s24
    %s101 = sor.u32 %s99, %s100
    %p102 = scmp.eq.s32.totalorder %s101, 0
    %s104 = sadd.s32 %s103, 1
    %s105 = scalar_select %p102, %s103, %s104
    %p108 = pneg %p102
    %p109 = scmp.eq.s32.totalorder %s9, 1
    %p110 = por %p108, %p109
    %p111 = scmp.ne.s32.totalorder %s103, %s106
    %p112 = scmp.eq.s32.totalorder %s9, 0
    %p113 = por %p111, %p112
    %p114 = scmp.ne.s32.totalorder %s103, %s106
    %p115 = scmp.eq.s32.totalorder %s14, 1
    %p116 = por %p114, %p115
    %p117 = scmp.ne.s32.totalorder %s106, %s107
    %p118 = scmp.eq.s32.totalorder %s14, 0
    %p119 = por %p117, %p118
    %p120 = scmp.ne.s32.totalorder %s106, %s107
    %p121 = scmp.eq.s32.totalorder %s15, 1
    %p122 = por %p120, %p121
    %p124 = scmp.ne.s32.totalorder %s107, %s123
    %p125 = scmp.eq.s32.totalorder %s15, 0
    %p126 = por %p124, %p125
    %p127 = scmp.le.s32.totalorder 1, %s9
    %p128 = scmp.lt.s32.totalorder %s9, 3
    %p129 = pnand %p127, %p128
    %p130 = pneg %p129
    // Predicated region
    $region9: #{_lambda_.13} parent=5 // pred_check
      _
    $region10: #{_lambda_.13} parent=5 // pred_check_branch
      %132 = sbr.rel (%p129) target = $region12
    $region11: #{_lambda_.13} parent=5 // pred_region
      %s133 = ssub.s32 %s9, 1
      // Predicated region
      $region13: #{_lambda_.13} parent=11 // pred_check
        %p134 = pneg %p70
      $region14: #{_lambda_.13} parent=11 // pred_check_branch
        %136 = sbr.rel (%p134) target = $region16
      $region15: #{_lambda_.13} parent=11 // pred_region
        _
      $region16: #{_lambda_.13} parent=11 // pred_fallthru
        _
      // Predicated region
      $region17: #{_lambda_.13} parent=11 // pred_check
        %p137 = pneg %p91
      $region18: #{_lambda_.13} parent=11 // pred_check_branch
        %139 = sbr.rel (%p137) target = $region20
      $region19: #{_lambda_.13} parent=11 // pred_region
        _
      $region20: #{_lambda_.13} parent=11 // pred_fallthru
        _
    $region12: #{_lambda_.13} parent=5 // pred_fallthru
      _
    %p140 = scmp.lt.s32.totalorder %s9, 2
    // Predicated region
    $region21: #{_lambda_.13} parent=5 // pred_check
      %p141 = pneg %p140
    $region22: #{_lambda_.13} parent=5 // pred_check_branch
      %143 = sbr.rel (%p141) target = $region24
    $region23: #{_lambda_.13} parent=5 // pred_region
      // Predicated region
      $region25: #{_lambda_.13} parent=23 // pred_check
        %p144 = pneg %p43
      $region26: #{_lambda_.13} parent=23 // pred_check_branch
        %146 = sbr.rel (%p144) target = $region28
      $region27: #{_lambda_.13} parent=23 // pred_region
        %s147 = smul.u32 2, %s17
        %p148 = scmp.lt.s32.totalorder %s16, 1
        %s149 = scalar_select %p148, %s16, 1
        %p150 = scmp.lt.s32.totalorder %s147, 265
        %s151 = scalar_select %p150, %s147, 265
        %s152 = smul.addr %s149, 266
        %s153 = sadd.s32 %s151, %s152
        %s154 = smul.addr %s153, 8
        %s155 = scalar_lea.vmem %s0, %s154
        %s156 = smul.u32 2, %s17
      $region28: #{_lambda_.13} parent=23 // pred_fallthru
        _
    $region24: #{_lambda_.13} parent=5 // pred_fallthru
      _
    %p157 = scmp.le.s32.totalorder 1, %s9
    %p158 = scmp.lt.s32.totalorder %s9, 3
    %p159 = pnand %p157, %p158
    %p160 = pneg %p159
    // Predicated region
    $region29: #{_lambda_.13} parent=5 // pred_check
      _
    $region30: #{_lambda_.13} parent=5 // pred_check_branch
      %162 = sbr.rel (%p159) target = $region32
    $region31: #{_lambda_.13} parent=5 // pred_region
      %s163 = ssub.s32 %s9, 1
      %s164 = smul.u32 2, %s19
      %p165 = scmp.lt.s32.totalorder %s18, 1
      %s166 = scalar_select %p165, %s18, 1
      %p167 = scmp.lt.s32.totalorder %s164, 265
      %s168 = scalar_select %p167, %s164, 265
      %s169 = smul.addr %s166, 266
      %s170 = sadd.s32 %s168, %s169
      %s171 = smul.addr %s170, 8
      %s172 = scalar_lea.vmem %s0, %s171
      %p173 = pneg %p49
      %p174 = pneg %p46
      %p175 = pneg %p70
      %p176 = pneg %p67
      %p177 = pneg %p91
      %p178 = pneg %p88
      %p179 = pneg %p119
      %p180 = pneg %p116
      %s181 = smul.u32 2, %s19
      %p182 = scmp.lt.s32.totalorder %s18, 1
      %s183 = scalar_select %p182, %s18, 1
      %p184 = scmp.lt.s32.totalorder %s181, 265
      %s185 = scalar_select %p184, %s181, 265
      %s186 = smul.addr %s183, 266
      %s187 = sadd.s32 %s185, %s186
      %s188 = smul.addr %s187, 8
      %s189 = scalar_lea.vmem %s3, %s188
      %s190 = smul.u32 2, %s19
      %p191 = scmp.lt.s32.totalorder %s18, 1
      %s192 = scalar_select %p191, %s18, 1
      %p193 = scmp.lt.s32.totalorder %s190, 265
      %s194 = scalar_select %p193, %s190, 265
      %s195 = smul.addr %s192, 266
      %s196 = sadd.s32 %s194, %s195
      %s197 = smul.addr %s196, 8
      %s198 = scalar_lea.vmem %s0, %s197
      %s199 = smul.u32 2, %s19
      %s200 = smul.u32 2, %s19
      %p201 = scmp.lt.s32.totalorder %s18, 1
      %s202 = scalar_select %p201, %s18, 1
      %p203 = scmp.lt.s32.totalorder %s200, 265
      %s204 = scalar_select %p203, %s200, 265
      %s205 = smul.addr %s202, 266
      %s206 = sadd.s32 %s204, %s205
      %s207 = smul.addr %s206, 8
      %s208 = scalar_lea.vmem %s3, %s207
      %s209 = smul.u32 2, %s19
      %v211 = vld [vmem:[%s198] sm:$0xff]
      %v212 = vld [vmem:[%s198 + $0x8] sm:$0xff]
      %v213 = vmax.f32 %v211, 0.0
      %v214 = vmax.f32 %v212, 0.0
      %v215 = vpack.c.bf16 %v214, %v213
      %v216 = vld [vmem:[%s1] sm:$0xf]
      %v217 = vld [vmem:[%s2] sm:$0x1]
      %v219 = vlaneseq
      %v220 = vshrl.u32 %v219, 7
      %v221 = vsub.s32 0, %v220
      %v222 = vrot.slane %v217, %v221
      %vm224 = vcmask 64512
      %v226 = vsel %vm224, %v215, 0
      %vm228 = vcmask 1043456
      %v230 = vsel %vm228, %v216, 0
      %232 = vmatprep.subr.bf16.mxu0 0
      %233 = vmatpush1.bf16.msra.mxu0 %v230
      %234 = vmatprep.subr.bf16.mxu0 0
      %235 = vmatpush1.bf16.msra.mxu0 0
      %236 = vmatprep.subr.bf16.mxu0 0
      %237 = vmatpush1.bf16.msra.mxu0 0
      %238 = vmatprep.subr.bf16.mxu0 0
      %239 = vmatpush1.bf16.msra.mxu0 0
      %240 = vmatprep.subr.bf16.mxu0 0
      %241 = vmatpush1.bf16.msra.mxu0 0
      %242 = vmatprep.subr.bf16.mxu0 0
      %243 = vmatpush1.bf16.msra.mxu0 0
      %244 = vmatprep.subr.bf16.mxu0 0
      %245 = vmatpush1.bf16.msra.mxu0 0
      %246 = vmatprep.subr.bf16.mxu0 0
      %247 = vmatpush1.bf16.msra.mxu0 0
      %248 = vmatprep.subr.bf16.mxu0 0
      %249 = vmatpush1.bf16.msra.mxu0 0
      %250 = vmatprep.subr.bf16.mxu0 0
      %251 = vmatpush1.bf16.msra.mxu0 0
      %252 = vmatprep.subr.bf16.mxu0 0
      %253 = vmatpush1.bf16.msra.mxu0 0
      %254 = vmatprep.subr.bf16.mxu0 0
      %255 = vmatpush1.bf16.msra.mxu0 0
      %256 = vmatprep.subr.bf16.mxu0 0
      %257 = vmatpush1.bf16.msra.mxu0 0
      %258 = vmatprep.subr.bf16.mxu0 0
      %259 = vmatpush1.bf16.msra.mxu0 0
      %260 = vmatprep.subr.bf16.mxu0 0
      %261 = vmatpush1.bf16.msra.mxu0 0
      %262 = vmatprep.subr.bf16.mxu0 0
      %263 = vmatpush1.bf16.msra.mxu0 0
      %264 = vmatprep.mubr.bf16.mxu0 0
      %265 = vmatmul.mubr.bf16.gmra.mrb[0].mxu0 %v226
      %v266 = vpop.f32.mrb[0].mxu0
      %v267 = vadd.f32 %v222, %v266
      %v268 = vpop.f32.mrb[0].mxu0
      %v269 = vpop.f32.mrb[0].mxu0
      %v270 = vadd.f32 %v222, %v269
      %v271 = vpop.f32.mrb[0].mxu0
      %272 = vdwg.mxu0
      %vm273 = vcmask 31744
      %274 = vst.msk [vmem:[%s208] sm:$0xff] %vm273, %v267
      %275 = vst.msk [vmem:[%s208 + $0x8] sm:$0xff] %vm273, %v270
      %s276 = smul.u32 2, %s19
      %p277 = scmp.lt.s32.totalorder %s18, 1
      %s278 = scalar_select %p277, %s18, 1
      %p279 = scmp.lt.s32.totalorder %s276, 265
      %s280 = scalar_select %p279, %s276, 265
      %s281 = smul.addr %s278, 266
      %s282 = sadd.s32 %s280, %s281
      %s283 = smul.addr %s282, 8
      %s284 = scalar_lea.vmem %s3, %s283
      // Predicated region
      $region33: #{_lambda_.13} parent=31 // pred_check
        %p285 = pneg %p116
      $region34: #{_lambda_.13} parent=31 // pred_check_branch
        %287 = sbr.rel (%p285) target = $region36
      $region35: #{_lambda_.13} parent=31 // pred_region
        %s288 = smul.u32 2, %s19
      $region36: #{_lambda_.13} parent=31 // pred_fallthru
        _
    $region32: #{_lambda_.13} parent=5 // pred_fallthru
      _
    %p289 = scmp.le.s32.totalorder 2, %s9
    // Predicated region
    $region37: #{_lambda_.13} parent=5 // pred_check
      %p290 = pneg %p289
    $region38: #{_lambda_.13} parent=5 // pred_check_branch
      %292 = sbr.rel (%p290) target = $region40
    $region39: #{_lambda_.13} parent=5 // pred_region
      %s293 = ssub.s32 %s9, 2
      // Predicated region
      $region41: #{_lambda_.13} parent=39 // pred_check
        %p294 = pneg %p122
      $region42: #{_lambda_.13} parent=39 // pred_check_branch
        %296 = sbr.rel (%p294) target = $region44
      $region43: #{_lambda_.13} parent=39 // pred_region
        %s297 = smul.u32 2, %s21
        %p298 = scmp.lt.s32.totalorder %s20, 1
        %s299 = scalar_select %p298, %s20, 1
        %p300 = scmp.lt.s32.totalorder %s297, 265
        %s301 = scalar_select %p300, %s297, 265
        %s302 = smul.addr %s299, 266
        %s303 = sadd.s32 %s301, %s302
        %s304 = smul.addr %s303, 8
        %s305 = scalar_lea.vmem %s3, %s304
      $region44: #{_lambda_.13} parent=39 // pred_fallthru
        _
    $region40: #{_lambda_.13} parent=5 // pred_fallthru
      _
  $region6: #{_lambda_.13} parent=0 // loop_footer
    %s13 = sadd.s32 1, %s9
  $region7: #{_lambda_.13} parent=0 // loop_footer_branch
    %8 = sbr.rel target = $region3
  $region8: #{_lambda_.13} parent=0 // loop_exit
    _

// kernel: _lambda_.12
$region0: #{_lambda_.12}
  #allocation0 [shape = 'u32[]', space=smem, size = 0x4, offset = 0x4, fixed_abs, tag = 'smem constant byte address 0x4 - core index']
  #allocation1 [shape = 'u32[144,128]{1,0:T(1,128)}', space=vmem, size = 0x12000, scoped, tag = 'internal scratch']
  %s0 = inlined_call_operand.vmem [shape: f32[2,2137,8], index: 0, kind: input, shape index: {}, may-alias: {0,1}]
  %s1 = inlined_call_operand.vmem [shape: f32[2,2137,8], index: 1, kind: input, shape index: {}, may-alias: {0,1}]
  %s2 = inlined_call_operand.vmem [shape: f32[2,4256,8], index: 2, kind: input, shape index: {}, may-alias: {2,3}]
  %s3 = inlined_call_operand.vmem [shape: f32[2,4256,8], index: 3, kind: input, shape index: {}, may-alias: {2,3}]
  %s4 = inlined_call_operand.vmem [shape: bf16[48,16], index: 4, kind: input, shape index: {}]
  %s5 = inlined_call_operand.vmem [shape: f32[1,16], index: 5, kind: input, shape index: {}]
  %s6 = inlined_call_operand.vmem [shape: f32[2,2128,8], index: 6, kind: output, shape index: {}]
  %s7 = sld [smem:[#allocation0]]
  $region57: #{_lambda_.12} parent=0
    _
  %s9 = ssub.s32 1, %s7
  %s10 = scalar_select 0, %s9, %s7
  loop: start=0, step=1, limit=4
  $region2: #{_lambda_.12} parent=0 // loop_pre_header
    _
  $region3: #{_lambda_.12} parent=0 // loop_header
    %s12 = sphi 0, %s16
    %p13 = scmp.ge.s32.totalorder %s12, 4
    %s19 = sphi 0, %s31
    %s20 = sphi 0, %s27
    %s21 = sphi 0, %s19
    %s22 = sphi 0, %s20
    %s23 = sphi 0, %s21
    %s24 = sphi 0, %s22
    %s36 = sphi 0, %s38
    %s39 = sphi 0, %s36
    %s40 = sphi 0, %s39
    %s56 = sphi 0, %s40
    %s68 = sphi 0, %s70
    %s71 = sphi 0, %s68
    %s72 = sphi 0, %s71
    %s88 = sphi 0, %s72
    %s96 = sphi 0, %s98
    %s99 = sphi 0, %s96
    %s100 = sphi 0, %s99
    %s116 = sphi 0, %s100
    %s128 = sphi 0, %s130
    %s131 = sphi 0, %s128
    %s132 = sphi 0, %s131
    %s148 = sphi 0, %s132
    %s152 = sphi 0, %s152
    %s154 = sphi 0, %s152
    %s155 = sphi 0, %s154
    %s169 = sphi 0, %s155
    %s173 = sphi 0, %s173
    %s175 = sphi 0, %s173
    %s176 = sphi 0, %s175
    %s190 = sphi 0, %s176
    %s198 = sphi 0, %s200
    %s201 = sphi 0, %s198
    %s202 = sphi 0, %s201
    %s218 = sphi 0, %s202
  $region4: #{_lambda_.12} parent=0 // loop_header_branch
    %15 = sbr.rel (%p13) target = $region8
  $region5: #{_lambda_.12} parent=0 // loop_body
    %s17 = ssub.s32 %s12, 1
    %s18 = ssub.s32 %s12, 2
    %s25 = sadd.s32 1, %s20
    %p26 = scmp.ge.s32.totalorder %s25, 1
    %s27 = scalar_select %p26, 0, %s25
    %s28 = sadd.s32 1, %s19
    %s29 = scalar_select %p26, %s28, %s19
    %p30 = scmp.ge.s32.totalorder %s29, 2
    %s31 = scalar_select %p30, 0, %s29
    %s32 = ssub.s32 %s19, %s31
    %s33 = ssub.s32 %s20, %s27
    %s34 = sor.u32 %s32, %s33
    %p35 = scmp.eq.s32.totalorder %s34, 0
    %s37 = sadd.s32 %s36, 1
    %s38 = scalar_select %p35, %s36, %s37
    %p41 = pneg %p35
    %p42 = scmp.eq.s32.totalorder %s12, 1
    %p43 = por %p41, %p42
    %p44 = scmp.ne.s32.totalorder %s36, %s39
    %p45 = scmp.eq.s32.totalorder %s12, 0
    %p46 = por %p44, %p45
    %p47 = scmp.ne.s32.totalorder %s36, %s39
    %p48 = scmp.eq.s32.totalorder %s17, 1
    %p49 = por %p47, %p48
    %p50 = scmp.ne.s32.totalorder %s39, %s40
    %p51 = scmp.eq.s32.totalorder %s17, 0
    %p52 = por %p50, %p51
    %p53 = scmp.ne.s32.totalorder %s39, %s40
    %p54 = scmp.eq.s32.totalorder %s18, 1
    %p55 = por %p53, %p54
    %p57 = scmp.ne.s32.totalorder %s40, %s56
    %p58 = scmp.eq.s32.totalorder %s18, 0
    %p59 = por %p57, %p58
    %s60 = sadd.s32 %s20, 1
    %s61 = smul.u32 %s60, 2
    %s62 = sadd.s32 %s27, 1
    %s63 = smul.u32 %s62, 2
    %s64 = ssub.s32 %s19, %s31
    %s65 = ssub.s32 %s61, %s63
    %s66 = sor.u32 %s64, %s65
    %p67 = scmp.eq.s32.totalorder %s66, 0
    %s69 = sadd.s32 %s68, 1
    %s70 = scalar_select %p67, %s68, %s69
    %p73 = pneg %p67
    %p74 = scmp.eq.s32.totalorder %s12, 1
    %p75 = por %p73, %p74
    %p76 = scmp.ne.s32.totalorder %s68, %s71
    %p77 = scmp.eq.s32.totalorder %s12, 0
    %p78 = por %p76, %p77
    %p79 = scmp.ne.s32.totalorder %s68, %s71
    %p80 = scmp.eq.s32.totalorder %s17, 1
    %p81 = por %p79, %p80
    %p82 = scmp.ne.s32.totalorder %s71, %s72
    %p83 = scmp.eq.s32.totalorder %s17, 0
    %p84 = por %p82, %p83
    %p85 = scmp.ne.s32.totalorder %s71, %s72
    %p86 = scmp.eq.s32.totalorder %s18, 1
    %p87 = por %p85, %p86
    %p89 = scmp.ne.s32.totalorder %s72, %s88
    %p90 = scmp.eq.s32.totalorder %s18, 0
    %p91 = por %p89, %p90
    %s92 = ssub.s32 %s19, %s31
    %s93 = ssub.s32 %s20, %s27
    %s94 = sor.u32 %s92, %s93
    %p95 = scmp.eq.s32.totalorder %s94, 0
    %s97 = sadd.s32 %s96, 1
    %s98 = scalar_select %p95, %s96, %s97
    %p101 = pneg %p95
    %p102 = scmp.eq.s32.totalorder %s12, 1
    %p103 = por %p101, %p102
    %p104 = scmp.ne.s32.totalorder %s96, %s99
    %p105 = scmp.eq.s32.totalorder %s12, 0
    %p106 = por %p104, %p105
    %p107 = scmp.ne.s32.totalorder %s96, %s99
    %p108 = scmp.eq.s32.totalorder %s17, 1
    %p109 = por %p107, %p108
    %p110 = scmp.ne.s32.totalorder %s99, %s100
    %p111 = scmp.eq.s32.totalorder %s17, 0
    %p112 = por %p110, %p111
    %p113 = scmp.ne.s32.totalorder %s99, %s100
    %p114 = scmp.eq.s32.totalorder %s18, 1
    %p115 = por %p113, %p114
    %p117 = scmp.ne.s32.totalorder %s100, %s116
    %p118 = scmp.eq.s32.totalorder %s18, 0
    %p119 = por %p117, %p118
    %s120 = sadd.s32 %s20, 1
    %s121 = smul.u32 %s120, 2
    %s122 = sadd.s32 %s27, 1
    %s123 = smul.u32 %s122, 2
    %s124 = ssub.s32 %s19, %s31
    %s125 = ssub.s32 %s121, %s123
    %s126 = sor.u32 %s124, %s125
    %p127 = scmp.eq.s32.totalorder %s126, 0
    %s129 = sadd.s32 %s128, 1
    %s130 = scalar_select %p127, %s128, %s129
    %p133 = pneg %p127
    %p134 = scmp.eq.s32.totalorder %s12, 1
    %p135 = por %p133, %p134
    %p136 = scmp.ne.s32.totalorder %s128, %s131
    %p137 = scmp.eq.s32.totalorder %s12, 0
    %p138 = por %p136, %p137
    %p139 = scmp.ne.s32.totalorder %s128, %s131
    %p140 = scmp.eq.s32.totalorder %s17, 1
    %p141 = por %p139, %p140
    %p142 = scmp.ne.s32.totalorder %s131, %s132
    %p143 = scmp.eq.s32.totalorder %s17, 0
    %p144 = por %p142, %p143
    %p145 = scmp.ne.s32.totalorder %s131, %s132
    %p146 = scmp.eq.s32.totalorder %s18, 1
    %p147 = por %p145, %p146
    %p149 = scmp.ne.s32.totalorder %s132, %s148
    %p150 = scmp.eq.s32.totalorder %s18, 0
    %p151 = por %p149, %p150
    %s153 = sadd.s32 %s152, 1
    %p156 = scmp.eq.s32.totalorder %s12, 1
    %p157 = scmp.ne.s32.totalorder %s152, %s154
    %p158 = scmp.eq.s32.totalorder %s12, 0
    %p159 = por %p157, %p158
    %p160 = scmp.ne.s32.totalorder %s152, %s154
    %p161 = scmp.eq.s32.totalorder %s17, 1
    %p162 = por %p160, %p161
    %p163 = scmp.ne.s32.totalorder %s154, %s155
    %p164 = scmp.eq.s32.totalorder %s17, 0
    %p165 = por %p163, %p164
    %p166 = scmp.ne.s32.totalorder %s154, %s155
    %p167 = scmp.eq.s32.totalorder %s18, 1
    %p168 = por %p166, %p167
    %p170 = scmp.ne.s32.totalorder %s155, %s169
    %p171 = scmp.eq.s32.totalorder %s18, 0
    %p172 = por %p170, %p171
    %s174 = sadd.s32 %s173, 1
    %p177 = scmp.eq.s32.totalorder %s12, 1
    %p178 = scmp.ne.s32.totalorder %s173, %s175
    %p179 = scmp.eq.s32.totalorder %s12, 0
    %p180 = por %p178, %p179
    %p181 = scmp.ne.s32.totalorder %s173, %s175
    %p182 = scmp.eq.s32.totalorder %s17, 1
    %p183 = por %p181, %p182
    %p184 = scmp.ne.s32.totalorder %s175, %s176
    %p185 = scmp.eq.s32.totalorder %s17, 0
    %p186 = por %p184, %p185
    %p187 = scmp.ne.s32.totalorder %s175, %s176
    %p188 = scmp.eq.s32.totalorder %s18, 1
    %p189 = por %p187, %p188
    %p191 = scmp.ne.s32.totalorder %s176, %s190
    %p192 = scmp.eq.s32.totalorder %s18, 0
    %p193 = por %p191, %p192
    %s194 = ssub.s32 %s19, %s31
    %s195 = ssub.s32 %s20, %s27
    %s196 = sor.u32 %s194, %s195
    %p197 = scmp.eq.s32.totalorder %s196, 0
    %s199 = sadd.s32 %s198, 1
    %s200 = scalar_select %p197, %s198, %s199
    %p203 = pneg %p197
    %p204 = scmp.eq.s32.totalorder %s12, 1
    %p205 = por %p203, %p204
    %p206 = scmp.ne.s32.totalorder %s198, %s201
    %p207 = scmp.eq.s32.totalorder %s12, 0
    %p208 = por %p206, %p207
    %p209 = scmp.ne.s32.totalorder %s198, %s201
    %p210 = scmp.eq.s32.totalorder %s17, 1
    %p211 = por %p209, %p210
    %p212 = scmp.ne.s32.totalorder %s201, %s202
    %p213 = scmp.eq.s32.totalorder %s17, 0
    %p214 = por %p212, %p213
    %p215 = scmp.ne.s32.totalorder %s201, %s202
    %p216 = scmp.eq.s32.totalorder %s18, 1
    %p217 = por %p215, %p216
    %p219 = scmp.ne.s32.totalorder %s202, %s218
    %p220 = scmp.eq.s32.totalorder %s18, 0
    %p221 = por %p219, %p220
    %p222 = scmp.le.s32.totalorder 1, %s12
    %p223 = scmp.lt.s32.totalorder %s12, 3
    %p224 = pnand %p222, %p223
    %p225 = pneg %p224
    // Predicated region
    $region9: #{_lambda_.12} parent=5 // pred_check
      _
    $region10: #{_lambda_.12} parent=5 // pred_check_branch
      %227 = sbr.rel (%p224) target = $region12
    $region11: #{_lambda_.12} parent=5 // pred_region
      %s228 = ssub.s32 %s12, 1
      // Predicated region
      $region13: #{_lambda_.12} parent=11 // pred_check
        %p229 = pneg %p165
      $region14: #{_lambda_.12} parent=11 // pred_check_branch
        %231 = sbr.rel (%p229) target = $region16
      $region15: #{_lambda_.12} parent=11 // pred_region
        _
      $region16: #{_lambda_.12} parent=11 // pred_fallthru
        _
      // Predicated region
      $region17: #{_lambda_.12} parent=11 // pred_check
        %p232 = pneg %p186
      $region18: #{_lambda_.12} parent=11 // pred_check_branch
        %234 = sbr.rel (%p232) target = $region20
      $region19: #{_lambda_.12} parent=11 // pred_region
        _
      $region20: #{_lambda_.12} parent=11 // pred_fallthru
        _
    $region12: #{_lambda_.12} parent=5 // pred_fallthru
      _
    %p235 = scmp.lt.s32.totalorder %s12, 2
    // Predicated region
    $region21: #{_lambda_.12} parent=5 // pred_check
      %p236 = pneg %p235
    $region22: #{_lambda_.12} parent=5 // pred_check_branch
      %238 = sbr.rel (%p236) target = $region24
    $region23: #{_lambda_.12} parent=5 // pred_region
      // Predicated region
      $region25: #{_lambda_.12} parent=23 // pred_check
        %p239 = pneg %p46
      $region26: #{_lambda_.12} parent=23 // pred_check_branch
        %241 = sbr.rel (%p239) target = $region28
      $region27: #{_lambda_.12} parent=23 // pred_region
        %s242 = smul.u32 2, %s20
        %p243 = scmp.lt.s32.totalorder %s19, 1
        %s244 = scalar_select %p243, %s19, 1
        %p245 = scmp.lt.s32.totalorder %s242, 267
        %s246 = scalar_select %p245, %s242, 267
        %s247 = smul.addr %s244, 268
        %s248 = sadd.s32 %s246, %s247
        %s249 = smul.addr %s248, 8
        %s250 = scalar_lea.vmem %s0, %s249
        %s251 = smul.u32 2, %s20
      $region28: #{_lambda_.12} parent=23 // pred_fallthru
        _
      // Predicated region
      $region29: #{_lambda_.12} parent=23 // pred_check
        %p252 = pneg %p78
      $region30: #{_lambda_.12} parent=23 // pred_check_branch
        %254 = sbr.rel (%p252) target = $region32
      $region31: #{_lambda_.12} parent=23 // pred_region
        %s255 = sadd.s32 %s20, 1
        %s256 = smul.u32 %s255, 2
        %p257 = scmp.lt.s32.totalorder %s19, 1
        %s258 = scalar_select %p257, %s19, 1
        %p259 = scmp.lt.s32.totalorder %s256, 267
        %s260 = scalar_select %p259, %s256, 267
        %s261 = smul.addr %s258, 268
        %s262 = sadd.s32 %s260, %s261
        %s263 = smul.addr %s262, 8
        %s264 = scalar_lea.vmem %s1, %s263
        %s265 = sadd.s32 %s20, 1
        %s266 = smul.u32 %s265, 2
      $region32: #{_lambda_.12} parent=23 // pred_fallthru
        _
      // Predicated region
      $region33: #{_lambda_.12} parent=23 // pred_check
        %p267 = pneg %p106
      $region34: #{_lambda_.12} parent=23 // pred_check_branch
        %269 = sbr.rel (%p267) target = $region36
      $region35: #{_lambda_.12} parent=23 // pred_region
        %s270 = smul.u32 2, %s20
        %p271 = scmp.lt.s32.totalorder %s19, 1
        %s272 = scalar_select %p271, %s19, 1
        %p273 = scmp.lt.s32.totalorder %s270, 531
        %s274 = scalar_select %p273, %s270, 531
        %s275 = smul.addr %s272, 532
        %s276 = sadd.s32 %s274, %s275
        %s277 = smul.addr %s276, 8
        %s278 = scalar_lea.vmem %s2, %s277
        %s279 = smul.u32 2, %s20
      $region36: #{_lambda_.12} parent=23 // pred_fallthru
        _
      // Predicated region
      $region37: #{_lambda_.12} parent=23 // pred_check
        %p280 = pneg %p138
      $region38: #{_lambda_.12} parent=23 // pred_check_branch
        %282 = sbr.rel (%p280) target = $region40
      $region39: #{_lambda_.12} parent=23 // pred_region
        %s283 = sadd.s32 %s20, 1
        %s284 = smul.u32 %s283, 2
        %p285 = scmp.lt.s32.totalorder %s19, 1
        %s286 = scalar_select %p285, %s19, 1
        %p287 = scmp.lt.s32.totalorder %s284, 531
        %s288 = scalar_select %p287, %s284, 531
        %s289 = smul.addr %s286, 532
        %s290 = sadd.s32 %s288, %s289
        %s291 = smul.addr %s290, 8
        %s292 = scalar_lea.vmem %s3, %s291
        %s293 = sadd.s32 %s20, 1
        %s294 = smul.u32 %s293, 2
      $region40: #{_lambda_.12} parent=23 // pred_fallthru
        _
    $region24: #{_lambda_.12} parent=5 // pred_fallthru
      _
    %p295 = scmp.le.s32.totalorder 1, %s12
    %p296 = scmp.lt.s32.totalorder %s12, 3
    %p297 = pnand %p295, %p296
    %p298 = pneg %p297
    // Predicated region
    $region41: #{_lambda_.12} parent=5 // pred_check
      _
    $region42: #{_lambda_.12} parent=5 // pred_check_branch
      %300 = sbr.rel (%p297) target = $region44
    $region43: #{_lambda_.12} parent=5 // pred_region
      %s301 = ssub.s32 %s12, 1
      %s302 = smul.u32 2, %s22
      %p303 = scmp.lt.s32.totalorder %s21, 1
      %s304 = scalar_select %p303, %s21, 1
      %p305 = scmp.lt.s32.totalorder %s302, 267
      %s306 = scalar_select %p305, %s302, 267
      %s307 = smul.addr %s304, 268
      %s308 = sadd.s32 %s306, %s307
      %s309 = smul.addr %s308, 8
      %s310 = scalar_lea.vmem %s0, %s309
      %p311 = pneg %p52
      %p312 = pneg %p49
      %s313 = sadd.s32 %s22, 1
      %s314 = smul.u32 %s313, 2
      %p315 = scmp.lt.s32.totalorder %s21, 1
      %s316 = scalar_select %p315, %s21, 1
      %p317 = scmp.lt.s32.totalorder %s314, 267
      %s318 = scalar_select %p317, %s314, 267
      %s319 = smul.addr %s316, 268
      %s320 = sadd.s32 %s318, %s319
      %s321 = smul.addr %s320, 8
      %s322 = scalar_lea.vmem %s1, %s321
      %p323 = pneg %p84
      %p324 = pneg %p81
      %s325 = smul.u32 2, %s22
      %p326 = scmp.lt.s32.totalorder %s21, 1
      %s327 = scalar_select %p326, %s21, 1
      %p328 = scmp.lt.s32.totalorder %s325, 531
      %s329 = scalar_select %p328, %s325, 531
      %s330 = smul.addr %s327, 532
      %s331 = sadd.s32 %s329, %s330
      %s332 = smul.addr %s331, 8
      %s333 = scalar_lea.vmem %s2, %s332
      %p334 = pneg %p112
      %p335 = pneg %p109
      %s336 = sadd.s32 %s22, 1
      %s337 = smul.u32 %s336, 2
      %p338 = scmp.lt.s32.totalorder %s21, 1
      %s339 = scalar_select %p338, %s21, 1
      %p340 = scmp.lt.s32.totalorder %s337, 531
      %s341 = scalar_select %p340, %s337, 531
      %s342 = smul.addr %s339, 532
      %s343 = sadd.s32 %s341, %s342
      %s344 = smul.addr %s343, 8
      %s345 = scalar_lea.vmem %s3, %s344
      %p346 = pneg %p144
      %p347 = pneg %p141
      %p348 = pneg %p165
      %p349 = pneg %p162
      %p350 = pneg %p186
      %p351 = pneg %p183
      %p352 = pneg %p214
      %p353 = pneg %p211
      %s354 = smul.u32 2, %s22
      %p355 = scmp.lt.s32.totalorder %s21, 1
      %s356 = scalar_select %p355, %s21, 1
      %p357 = scmp.lt.s32.totalorder %s354, 265
      %s358 = scalar_select %p357, %s354, 265
      %s359 = smul.addr %s356, 266
      %s360 = sadd.s32 %s358, %s359
      %s361 = smul.addr %s360, 8
      %s362 = scalar_lea.vmem %s6, %s361
      %s363 = smul.u32 2, %s22
      %p364 = scmp.lt.s32.totalorder %s21, 1
      %s365 = scalar_select %p364, %s21, 1
      %p366 = scmp.lt.s32.totalorder %s363, 267
      %s367 = scalar_select %p366, %s363, 267
      %s368 = smul.addr %s365, 268
      %s369 = sadd.s32 %s367, %s368
      %s370 = smul.addr %s369, 8
      %s371 = scalar_lea.vmem %s0, %s370
      %s372 = smul.u32 2, %s22
      %s373 = sadd.s32 %s22, 1
      %s374 = smul.u32 %s373, 2
      %p375 = scmp.lt.s32.totalorder %s21, 1
      %s376 = scalar_select %p375, %s21, 1
      %p377 = scmp.lt.s32.totalorder %s374, 267
      %s378 = scalar_select %p377, %s374, 267
      %s379 = smul.addr %s376, 268
      %s380 = sadd.s32 %s378, %s379
      %s381 = smul.addr %s380, 8
      %s382 = scalar_lea.vmem %s1, %s381
      %s383 = sadd.s32 %s22, 1
      %s384 = smul.u32 %s383, 2
      %s385 = smul.u32 2, %s22
      %p386 = scmp.lt.s32.totalorder %s21, 1
      %s387 = scalar_select %p386, %s21, 1
      %p388 = scmp.lt.s32.totalorder %s385, 531
      %s389 = scalar_select %p388, %s385, 531
      %s390 = smul.addr %s387, 532
      %s391 = sadd.s32 %s389, %s390
      %s392 = smul.addr %s391, 8
      %s393 = scalar_lea.vmem %s2, %s392
      %s394 = smul.u32 2, %s22
      %s395 = sadd.s32 %s22, 1
      %s396 = smul.u32 %s395, 2
      %p397 = scmp.lt.s32.totalorder %s21, 1
      %s398 = scalar_select %p397, %s21, 1
      %p399 = scmp.lt.s32.totalorder %s396, 531
      %s400 = scalar_select %p399, %s396, 531
      %s401 = smul.addr %s398, 532
      %s402 = sadd.s32 %s400, %s401
      %s403 = smul.addr %s402, 8
      %s404 = scalar_lea.vmem %s3, %s403
      %s405 = sadd.s32 %s22, 1
      %s406 = smul.u32 %s405, 2
      %s407 = smul.u32 2, %s22
      %p408 = scmp.lt.s32.totalorder %s21, 1
      %s409 = scalar_select %p408, %s21, 1
      %p410 = scmp.lt.s32.totalorder %s407, 265
      %s411 = scalar_select %p410, %s407, 265
      %s412 = smul.addr %s409, 266
      %s413 = sadd.s32 %s411, %s412
      %s414 = smul.addr %s413, 8
      %s415 = scalar_lea.vmem %s6, %s414
      %s416 = smul.u32 2, %s22
      %v418 = vld [vmem:[%s371] sm:$0xff]
      %v419 = vld [vmem:[%s371 + $0x8] sm:$0xff]
      %v420 = vld [vmem:[%s382] sm:$0xff]
      %v421 = vld [vmem:[%s393] sm:$0xff]
      %v422 = vld [vmem:[%s393 + $0x8] sm:$0xff]
      %v423 = vld [vmem:[%s404] sm:$0xff]
      %427 = vrot.lane.b32.xlu0 %v421, 8
      %v428 = vpop.permute.xlu0 %427
      %429 = vrot.lane.b32.xlu0 %v422, 8
      %v430 = vpop.permute.xlu0 %429
      %431 = vrot.lane.b32.xlu0 %v423, 8
      %v432 = vpop.permute.xlu0 %431
      %vm436 = vcmask 64512
      %v437 = vsel %vm436, %v418, %v428
      %v438 = vsel %vm436, %v419, %v430
      %v439 = vsel %vm436, %v420, %v432
      %vm443 = vcmask 1046528
      %v444 = vrot.slane %v437, 1
      %v445 = vrot.slane %v438, 1
      %v446 = vsel %vm443, %v444, %v445
      %v447 = vrot.slane %v439, 1
      %v448 = vsel %vm443, %v445, %v447
      %449 = vrot.lane.b32.xlu0 %v446, 16
      %v450 = vpop.permute.xlu0 %449
      %451 = vrot.lane.b32.xlu0 %v448, 16
      %v452 = vpop.permute.xlu0 %451
      %vm455 = vcmask 1045504
      %v456 = vrot.slane %v437, 2
      %v457 = vrot.slane %v438, 2
      %v458 = vsel %vm455, %v456, %v457
      %v459 = vrot.slane %v439, 2
      %v460 = vsel %vm455, %v457, %v459
      %461 = vrot.lane.b32.xlu0 %v458, 32
      %v462 = vpop.permute.xlu0 %461
      %463 = vrot.lane.b32.xlu0 %v460, 32
      %v464 = vpop.permute.xlu0 %463
      %vm467 = vcmask 130048
      %v468 = vsel %vm467, %v437, %v450
      %v469 = vsel %vm467, %v438, %v452
      %vm470 = vcmask 261120
      %v471 = vsel %vm470, %v468, %v462
      %v472 = vsel %vm470, %v469, %v464
      %v473 = vpack.c.bf16 %v472, %v471
      %v474 = vld [vmem:[%s4] sm:$0xf]
      %v475 = vld [vmem:[%s4 + $0x4] sm:$0xf]
      %v476 = vld [vmem:[%s4 + $0x8] sm:$0xf]
      %v477 = vld [vmem:[%s4 + $0xc] sm:$0xf]
      %v478 = vld [vmem:[%s4 + $0x10] sm:$0xf]
      %v479 = vld [vmem:[%s4 + $0x14] sm:$0xf]
      %v480 = vld [vmem:[%s5] sm:$0x1]
      %v482 = vlaneseq
      %v483 = vshrl.u32 %v482, 7
      %v484 = vsub.s32 0, %v483
      %v485 = vrot.slane %v480, %v484
      %v493 = vunpack.c.l.b16 %v474
      %v494 = vunpack.c.l.b16 %v475
      %v495 = vunpack.c.l.b16 %v476
      %v496 = vunpack.c.l.b16 %v477
      %v497 = vunpack.c.l.b16 %v478
      %v498 = vunpack.c.l.b16 %v479
      %v499 = vpack.c.b16 %v494, %v493
      %v500 = vpack.c.b16 %v496, %v495
      %v501 = vpack.c.b16 %v498, %v497
      %vm505 = vcmask 392192
      %v507 = vsel %vm505, %v473, 0
      %509 = vmatprep.subr.bf16.mxu0 0
      %510 = vmatpush1.bf16.msra.mxu0 %v499
      %511 = vmatprep.subr.bf16.mxu0 0
      %512 = vmatpush1.bf16.msra.mxu0 %v500
      %513 = vmatprep.subr.bf16.mxu0 0
      %514 = vmatpush1.bf16.msra.mxu0 %v501
      %515 = vmatprep.subr.bf16.mxu0 0
      %516 = vmatpush1.bf16.msra.mxu0 0
      %517 = vmatprep.subr.bf16.mxu0 0
      %518 = vmatpush1.bf16.msra.mxu0 0
      %519 = vmatprep.subr.bf16.mxu0 0
      %520 = vmatpush1.bf16.msra.mxu0 0
      %521 = vmatprep.subr.bf16.mxu0 0
      %522 = vmatpush1.bf16.msra.mxu0 0
      %523 = vmatprep.subr.bf16.mxu0 0
      %524 = vmatpush1.bf16.msra.mxu0 0
      %525 = vmatprep.subr.bf16.mxu0 0
      %526 = vmatpush1.bf16.msra.mxu0 0
      %527 = vmatprep.subr.bf16.mxu0 0
      %528 = vmatpush1.bf16.msra.mxu0 0
      %529 = vmatprep.subr.bf16.mxu0 0
      %530 = vmatpush1.bf16.msra.mxu0 0
      %531 = vmatprep.subr.bf16.mxu0 0
      %532 = vmatpush1.bf16.msra.mxu0 0
      %533 = vmatprep.subr.bf16.mxu0 0
      %534 = vmatpush1.bf16.msra.mxu0 0
      %535 = vmatprep.subr.bf16.mxu0 0
      %536 = vmatpush1.bf16.msra.mxu0 0
      %537 = vmatprep.subr.bf16.mxu0 0
      %538 = vmatpush1.bf16.msra.mxu0 0
      %539 = vmatprep.subr.bf16.mxu0 0
      %540 = vmatpush1.bf16.msra.mxu0 0
      %541 = vmatprep.mubr.bf16.mxu0 0
      %542 = vmatmul.mubr.bf16.gmra.mrb[0].mxu0 %v507
      %v543 = vpop.f32.mrb[0].mxu0
      %v544 = vadd.f32 %v485, %v543
      %v545 = vpop.f32.mrb[0].mxu0
      %v546 = vpop.f32.mrb[0].mxu0
      %v547 = vadd.f32 %v485, %v546
      %v548 = vpop.f32.mrb[0].mxu0
      %549 = vdwg.mxu0
      %v550 = vtanh.pop %v544
      %v551 = vtanh.pop %v547
      %v552 = vxor.u32 %v544, 2147483648
      %v553 = vxor.u32 %v547, 2147483648
      %v554 = vmul.f32 %v552, 1.442695
      %v555 = vpow.pop %v554
      %v556 = vmul.f32 %v553, 1.442695
      %v557 = vpow.pop %v556
      %v558 = vadd.f32 %v555, 1.0
      %v559 = vadd.f32 %v557, 1.0
      %v560 = vrcp.pop %v558
      %v561 = vmul.f32 1.0, %v560
      %v562 = vrcp.pop %v559
      %v563 = vmul.f32 1.0, %v562
      %566 = vrot.lane.b32.xlu0 %v561, 120
      %v567 = vpop.permute.xlu0 %566
      %568 = vrot.lane.b32.xlu0 %v563, 120
      %v569 = vpop.permute.xlu0 %568
      %v572 = vmul.f32 %v550, %v567
      %v573 = vmul.f32 %v551, %v569
      %vm576 = vcmask 1041408
      %v577 = vrot.slane %v572, 6
      %v578 = vrot.slane %v573, 6
      %v579 = vsel %vm576, %v577, %v578
      %v583 = vadd.f32 %v418, %v577
      %v584 = vadd.f32 %v419, %v579
      %v585 = vadd.f32 %v420, %v578
      %vm586 = vcmask 64514
      %587 = vst.msk [vmem:[%s415 - $0x2] sm:$0xfc] %vm586, %v583
      %588 = vst.msk [vmem:[%s415 + $0x6] sm:$0xff] %vm436, %v584
      %vm589 = vcmask 58368
      %590 = vst.msk [vmem:[%s415 + $0xe] sm:$0x3] %vm589, %v585
      %s591 = smul.u32 2, %s22
      %p592 = scmp.lt.s32.totalorder %s21, 1
      %s593 = scalar_select %p592, %s21, 1
      %p594 = scmp.lt.s32.totalorder %s591, 265
      %s595 = scalar_select %p594, %s591, 265
      %s596 = smul.addr %s593, 266
      %s597 = sadd.s32 %s595, %s596
      %s598 = smul.addr %s597, 8
      %s599 = scalar_lea.vmem %s6, %s598
      // Predicated region
      $region45: #{_lambda_.12} parent=43 // pred_check
        %p600 = pneg %p211
      $region46: #{_lambda_.12} parent=43 // pred_check_branch
        %602 = sbr.rel (%p600) target = $region48
      $region47: #{_lambda_.12} parent=43 // pred_region
        %s603 = smul.u32 2, %s22
      $region48: #{_lambda_.12} parent=43 // pred_fallthru
        _
    $region44: #{_lambda_.12} parent=5 // pred_fallthru
      _
    %p604 = scmp.le.s32.totalorder 2, %s12
    // Predicated region
    $region49: #{_lambda_.12} parent=5 // pred_check
      %p605 = pneg %p604
    $region50: #{_lambda_.12} parent=5 // pred_check_branch
      %607 = sbr.rel (%p605) target = $region52
    $region51: #{_lambda_.12} parent=5 // pred_region
      %s608 = ssub.s32 %s12, 2
      // Predicated region
      $region53: #{_lambda_.12} parent=51 // pred_check
        %p609 = pneg %p217
      $region54: #{_lambda_.12} parent=51 // pred_check_branch
        %611 = sbr.rel (%p609) target = $region56
      $region55: #{_lambda_.12} parent=51 // pred_region
        %s612 = smul.u32 2, %s24
        %p613 = scmp.lt.s32.totalorder %s23, 1
        %s614 = scalar_select %p613, %s23, 1
        %p615 = scmp.lt.s32.totalorder %s612, 265
        %s616 = scalar_select %p615, %s612, 265
        %s617 = smul.addr %s614, 266
        %s618 = sadd.s32 %s616, %s617
        %s619 = smul.addr %s618, 8
        %s620 = scalar_lea.vmem %s6, %s619
      $region56: #{_lambda_.12} parent=51 // pred_fallthru
        _
    $region52: #{_lambda_.12} parent=5 // pred_fallthru
      _
  $region6: #{_lambda_.12} parent=0 // loop_footer
    %s16 = sadd.s32 1, %s12
  $region7: #{_lambda_.12} parent=0 // loop_footer_branch
    %11 = sbr.rel target = $region3
  $region8: #{_lambda_.12} parent=0 // loop_exit
    _

</llo_original>
